<compile_context>
chip_gen: v6e
topology: v6e:2x2x1
jax: 0.10.0
libtpu: 0.0.40
codegen_flags: <defaults>
</compile_context>

<pallas_src>
import math
import functools

import jax
import jax.numpy as jnp
from jax import lax
from jax.experimental import pallas as pl
from jax.experimental.pallas import tpu as pltpu

TICK_CLASSES = 9
_FC_PAD = 128  # lane-dense padded width for the (B, 5*9 = 45) fc-head output


# ----------------------------------------------------------------------------
# Fused kernel
# ----------------------------------------------------------------------------
def _libra_fused_kernel(x_ref, w_in_ref, w_rec_ref, b_ref,
                        wq_ref, bq_ref, wk_ref, bk_ref, wv_ref, bv_ref,
                        wo_ref, bo_ref, decay_ref, seg_ref, segt_ref,
                        wf_ref, bf_ref,
                        out_ref,
                        seq_ref,
                        *, T, B, H, head_dim):
    f32 = jnp.float32
    H2 = 2 * H   # packed state width  [layer0 | layer1]

    # ---- layer-0 input projection for every timestep, hoisted out of the recurrence --------
    x = x_ref[...].astype(f32)                        # (T*B, Din), time-major rows t*B + b
    w_in = w_in_ref[...]                              # (Din, 8H), zeros in layer-1 columns
    if x.shape[1] == 1:
        gx = x * w_in                                 # outer product (Din == 1)
    else:
        gx = jnp.dot(x, w_in, preferred_element_type=f32)
    bias = b_ref[...]                                 # (1, 8H)
    gx = gx + bias                                    # (T*B, 8H)

    w_rec = w_rec_ref[...]                            # (2H, 8H) block matrix [[Whh0, Wih1],
                                                      #                        [  0 , Whh1]]

    # lane mask: 1 on layer-0 columns, 0 on layer-1 columns (used only at wavefront step 0)
    l0_mask = (lax.broadcasted_iota(jnp.int32, (1, H2), 1) < H).astype(f32)

    h_pk = jnp.zeros((B, H2), f32)                    # [h_l0 | h_l1]
    c_pk = jnp.zeros((B, H2), f32)

    # ---- wavefront-fused 2-layer LSTM: step s computes (layer0, t=s) and (layer1, t=s-1) ---
    for s in range(T + 1):                            # static, fully unrolled
        if s == 0:
            gates = gx[0:B, :]                        # state is zero -> recurrence matmul skipped
        else:
            rec = jnp.dot(h_pk, w_rec, preferred_element_type=f32)   # (B,2H)@(2H,8H), K=128
            gates = (gx[s * B:(s + 1) * B, :] if s < T else bias) + rec
        # gate layout [i | f | g | o], each block 2H = 128 lanes -> vreg-aligned slices
        i_pk = jax.nn.sigmoid(gates[:, 0:H2])
        f_pk = jax.nn.sigmoid(gates[:, H2:2 * H2])
        g_pk = jnp.tanh(gates[:, 2 * H2:3 * H2])
        o_pk = jax.nn.sigmoid(gates[:, 3 * H2:4 * H2])
        c_pk = f_pk * c_pk + i_pk * g_pk
        h_pk = o_pk * jnp.tanh(c_pk)
        if s == 0:                                    # layer-1 half at step 0 is not a real step
            c_pk = c_pk * l0_mask
            h_pk = h_pk * l0_mask
        if s >= 1:
            # batch-major store: row b*T + t holds the packed state whose layer-1 half is h1[t]
            t = s - 1
            for b in range(B):
                seq_ref[pl.ds(b * T + t, 1), :] = h_pk[b:b + 1, :]

    # ---- attention projections, computed ONCE over the whole (B*T, 2H) sequence ------------
    # wq/wk/wv are zero-padded on the layer-0 rows, so only the layer-1 half contributes.
    seq = seq_ref[...]                                # (B*T, 2H)
    k_all = jnp.dot(seq, wk_ref[...], preferred_element_type=f32) + bk_ref[...]   # (B*T, H)
    v_all = jnp.dot(seq, wv_ref[...], preferred_element_type=f32) + bv_ref[...]   # (B*T, H)
    q = jnp.dot(h_pk, wq_ref[...], preferred_element_type=f32) + bq_ref[...]      # (B, H)

    seg = seg_ref[...]                                # (H, heads) 0/1 head-segment matrix
    seg_t = segt_ref[...]                             # (heads, H)
    decay = decay_ref[...]                            # (T, heads) last-query-row decay weights
    scale = 1.0 / math.sqrt(head_dim)
    ones_1t = jnp.ones((1, T), f32)

    # only the last query position is consumed downstream (attn_out[:, -1, :])
    ctx_rows = []
    for b in range(B):                                # B is tiny & static
        k_b = k_all[b * T:(b + 1) * T, :]             # (T, H), contiguous batch-b rows
        v_b = v_all[b * T:(b + 1) * T, :]
        q_b = q[b:b + 1, :]                           # (1, H)
        s_bh = jnp.dot(k_b * q_b, seg, preferred_element_type=f32) * scale        # (T, heads)
        s_bh = s_bh * decay                           # multiplicative decay, then softmax
        m = jnp.max(s_bh, axis=0, keepdims=True)      # one softmax over all heads at once
        e = jnp.exp(s_bh - m)
        den = jnp.sum(e, axis=0, keepdims=True)
        p = e * pl.reciprocal(den, approx=True)       # (T, heads)
        p_full = jnp.dot(p, seg_t, preferred_element_type=f32)                    # (T, H)
        ctx_rows.append(jnp.dot(ones_1t, p_full * v_b, preferred_element_type=f32))   # (1, H)
    ctx = jnp.concatenate(ctx_rows, axis=0)           # (B, H)

    # ---- out_proj + fc head (dropout is identity at inference) -----------------------------
    attn_last = jnp.dot(ctx, wo_ref[...], preferred_element_type=f32) + bo_ref[...]
    logits = jnp.dot(attn_last, wf_ref[...], preferred_element_type=f32) + bf_ref[...]
    out_ref[...] = logits.astype(out_ref.dtype)       # (B, 128): lane-dense store


# ----------------------------------------------------------------------------
# Init-time parameter packing for the fused kernel layout
# ----------------------------------------------------------------------------
def _scatter_gate_cols(w4h, layer, H):
    """Map (rows, 4H) in PyTorch gate order [i,f,g,o] into the packed 8H column layout
    [i0 i1 | f0 f1 | g0 g1 | o0 o1] for the given layer (0 or 1)."""
    zeros = jnp.zeros((w4h.shape[0], H), w4h.dtype)
    blocks = []
    for g in range(4):
        gate = w4h[:, g * H:(g + 1) * H]
        blocks += ([gate, zeros] if layer == 0 else [zeros, gate])
    return jnp.concatenate(blocks, axis=-1)


def pack_params(params, seq_len, hidden_size=64, attn_heads=4):
    """One-time repacking of PyTorch-layout params into the fused-kernel layout."""
    H = hidden_size
    head_dim = H // attn_heads
    O = 5 * TICK_CLASSES
    assert len(params["lstm"]) == 2, "fused kernel implements the model default of 2 LSTM layers"
    l0, l1 = params["lstm"]

    packed = {}
    # layer-0 input projection -> packed gate columns (layer-1 columns stay zero)
    packed["w_in_big"] = _scatter_gate_cols(l0["wih_t"], 0, H)                   # (Din, 8H)
    # block recurrent matrix: rows 0:H multiply h_l0 (W_hh0 plus layer-1's W_ih1),
    #                         rows H:2H multiply h_l1 (W_hh1)
    top = _scatter_gate_cols(l0["whh_t"], 0, H) + _scatter_gate_cols(l1["wih_t"], 1, H)
    bot = _scatter_gate_cols(l1["whh_t"], 1, H)
    packed["w_rec_big"] = jnp.concatenate([top, bot], axis=0)                    # (2H, 8H)
    packed["bias_big"] = (_scatter_gate_cols(l0["bias"], 0, H)
                          + _scatter_gate_cols(l1["bias"], 1, H))                # (1, 8H)

    # q/k/v act only on the layer-1 half of the packed state -> zero-pad the layer-0 rows
    zpad = jnp.zeros((H, H), jnp.float32)
    packed["wq_big"] = jnp.concatenate([zpad, params["wq_t"]], axis=0)           # (2H, H)
    packed["wk_big"] = jnp.concatenate([zpad, params["wk_t"]], axis=0)
    packed["wv_big"] = jnp.concatenate([zpad, params["wv_t"]], axis=0)
    packed["bq"], packed["bk"], packed["bv"] = params["bq"], params["bk"], params["bv"]
    packed["wo_t"], packed["bo"] = params["wo_t"], params["bo"]

    # last-query-row decay weights (T, heads): exact clip(0.01,0.9999) + softmax(mix) ordering
    dp = jnp.clip(params["decay_params"], 0.01, 0.9999)                          # (heads, D)
    mix = jax.nn.softmax(params["mix_weights"], axis=-1)                         # (heads, D)
    tdiff = jnp.arange(seq_len - 1, -1, -1, dtype=jnp.float32)                   # |T-1 - k|
    packed["decay_last"] = jnp.sum(
        mix[None, :, :] * dp[None, :, :] ** tdiff[:, None, None], axis=-1)       # (T, heads)

    # constant 0/1 head-segment matrix (collapses the per-head loop into matmuls)
    seg = (jnp.arange(H)[:, None] // head_dim
           == jnp.arange(attn_heads)[None, :]).astype(jnp.float32)               # (H, heads)
    packed["seg"] = seg
    packed["seg_t"] = seg.T                                                      # (heads, H)

    # lane-dense padded fc head (sliced back to 45 columns in the wrapper)
    packed["wf_pad"] = jnp.pad(params["wf_t"], ((0, 0), (0, _FC_PAD - O)))       # (H, 128)
    packed["bf_pad"] = jnp.pad(params["bf"], ((0, 0), (0, _FC_PAD - O)))         # (1, 128)
    return packed


# ----------------------------------------------------------------------------
# Wrapper
# ----------------------------------------------------------------------------
def libra_forward(packed, x, hidden_size=64, attn_heads=4):
    """x: (B, T, input_size) float32 -> logits (B, 5, TICK_CLASSES)."""
    B, T, d_in = x.shape
    H = hidden_size
    head_dim = H // attn_heads
    O = 5 * TICK_CLASSES

    # tiny time-major flatten of the raw input (row = t*B + b)
    x_tm = jnp.transpose(x, (1, 0, 2)).reshape(T * B, d_in)

    def const2(shape):
        return pl.BlockSpec(shape, lambda i: (0, 0))

    names = ["w_in_big", "w_rec_big", "bias_big",
             "wq_big", "bq", "wk_big", "bk", "wv_big", "bv", "wo_t", "bo",
             "decay_last", "seg", "seg_t", "wf_pad", "bf_pad"]
    inputs = [x_tm] + [packed[n] for n in names]
    in_specs = [const2(a.shape) for a in inputs]

    kernel = functools.partial(
        _libra_fused_kernel, T=T, B=B, H=H, head_dim=head_dim)

    logits_pad = pl.pallas_call(
        kernel,
        out_shape=jax.ShapeDtypeStruct((B, _FC_PAD), jnp.float32),
        grid_spec=pltpu.PrefetchScalarGridSpec(
            num_scalar_prefetch=0,
            grid=(1,),
            in_specs=in_specs,
            out_specs=const2((B, _FC_PAD)),
            scratch_shapes=[pltpu.VMEM((B * T, 2 * H), jnp.float32)],  # batch-major h-sequence
        ),
        # TODO(synk): on v7x (2 TensorCores) split the batch over a leading "parallel" grid axis
        # so both cores get work; on single-TC v5e/v6e keep this single-program form (a batch
        # split there would double the sequential recurrence work).
        compiler_params=pltpu.CompilerParams(dimension_semantics=("arbitrary",)),
    )(*inputs)

    return logits_pad[:, :O].reshape(-1, 5, TICK_CLASSES)


# ----------------------------------------------------------------------------
# Parameter construction (mirrors PyTorch __init__ shapes)
# ----------------------------------------------------------------------------
def init_params(key, input_size=1, hidden_size=64, lstm_layers=2,
                attn_heads=4, num_attn_decays=2):
    params = {}

    def uniform(k, shape, bound):
        return jax.random.uniform(k, shape, jnp.float32, -bound, bound)

    keys = jax.random.split(key, 64)
    ki = iter(range(64))

    # LSTM layers (PyTorch shapes: W_ih (4H, D_in), W_hh (4H, H), b_ih/b_hh (4H,))
    lstm = []
    bound = 1.0 / math.sqrt(hidden_size)
    for layer in range(lstm_layers):
        d_in = input_size if layer == 0 else hidden_size
        w_ih = uniform(keys[next(ki)], (4 * hidden_size, d_in), bound)
        w_hh = uniform(keys[next(ki)], (4 * hidden_size, hidden_size), bound)
        b_ih = uniform(keys[next(ki)], (4 * hidden_size,), bound)
        b_hh = uniform(keys[next(ki)], (4 * hidden_size,), bound)
        lstm.append(dict(
            wih_t=w_ih.T,                                    # (D_in, 4H), gate order [i,f,g,o]
            whh_t=w_hh.T,                                    # (H, 4H)
            bias=(b_ih + b_hh).reshape(1, 4 * hidden_size),  # (1, 4H)
        ))
    params["lstm"] = lstm

    # Attention linear layers (PyTorch nn.Linear: W (out, in), b (out,)) — pre-transposed
    def linear(kw, kb, in_f, out_f):
        bnd = 1.0 / math.sqrt(in_f)
        w = uniform(kw, (out_f, in_f), bnd)
        b = uniform(kb, (out_f,), bnd)
        return w.T, b.reshape(1, out_f)

    H = hidden_size
    params["wq_t"], params["bq"] = linear(keys[next(ki)], keys[next(ki)], H, H)
    params["wk_t"], params["bk"] = linear(keys[next(ki)], keys[next(ki)], H, H)
    params["wv_t"], params["bv"] = linear(keys[next(ki)], keys[next(ki)], H, H)
    params["wo_t"], params["bo"] = linear(keys[next(ki)], keys[next(ki)], H, H)

    # randomized (valid) decay/mix parameters so the correctness check exercises the mix math
    params["decay_params"] = jax.random.uniform(
        keys[next(ki)], (attn_heads, num_attn_decays), jnp.float32, 0.70, 0.99)
    params["mix_weights"] = 0.5 * jax.random.normal(
        keys[next(ki)], (attn_heads, num_attn_decays), jnp.float32)

    # fc_out: hidden -> 5 * TICK_CLASSES
    params["wf_t"], params["bf"] = linear(keys[next(ki)], keys[next(ki)], H, 5 * TICK_CLASSES)
    return params


def build_decay_mask(decay_params, mix_weights, seq_len):
    """Full (num_heads, T, T) multiplicative decay mask (reference only)."""
    idx = jnp.arange(seq_len)
    time_diffs = jnp.abs(idx[:, None] - idx[None, :]).astype(jnp.float32)
    dp = jnp.clip(decay_params, 0.01, 0.9999)
    exp_decay = dp[:, :, None, None] ** time_diffs[None, None, :, :]
    mix = jax.nn.softmax(mix_weights, axis=-1)
    return (exp_decay * mix[:, :, None, None]).sum(axis=1)


# ----------------------------------------------------------------------------
# Pure-JAX reference (full forward, for a correctness sanity check)
# ----------------------------------------------------------------------------
def libra_reference(params, x, hidden_size=64, attn_heads=4):
    B, T, _ = x.shape
    head_dim = hidden_size // attn_heads

    h_seq = x
    for lp in params["lstm"]:
        h = jnp.zeros((B, hidden_size), jnp.float32)
        c = jnp.zeros((B, hidden_size), jnp.float32)
        outs = []
        for t in range(T):
            gates = h_seq[:, t, :] @ lp["wih_t"] + h @ lp["whh_t"] + lp["bias"]
            i = jax.nn.sigmoid(gates[:, 0 * hidden_size:1 * hidden_size])
            f = jax.nn.sigmoid(gates[:, 1 * hidden_size:2 * hidden_size])
            g = jnp.tanh(gates[:, 2 * hidden_size:3 * hidden_size])
            o = jax.nn.sigmoid(gates[:, 3 * hidden_size:4 * hidden_size])
            c = f * c + i * g
            h = o * jnp.tanh(c)
            outs.append(h)
        h_seq = jnp.stack(outs, axis=1)

    q = (h_seq @ params["wq_t"] + params["bq"]).reshape(B, T, attn_heads, head_dim).transpose(0, 2, 1, 3)
    k = (h_seq @ params["wk_t"] + params["bk"]).reshape(B, T, attn_heads, head_dim).transpose(0, 2, 1, 3)
    v = (h_seq @ params["wv_t"] + params["bv"]).reshape(B, T, attn_heads, head_dim).transpose(0, 2, 1, 3)
    scores = jnp.einsum("bhqd,bhkd->bhqk", q, k) / math.sqrt(head_dim)
    dm = build_decay_mask(params["decay_params"], params["mix_weights"], T)
    scores = scores * dm[None]
    probs = jax.nn.softmax(scores, axis=-1)
    attn = jnp.einsum("bhqk,bhkd->bhqd", probs, v).transpose(0, 2, 1, 3).reshape(B, T, hidden_size)
    attn = attn @ params["wo_t"] + params["bo"]
    context = attn[:, -1, :]
    logits = context @ params["wf_t"] + params["bf"]
    return logits.reshape(-1, 5, TICK_CLASSES)


if __name__ == "__main__":
    B, T = 2, 8
    INPUT_SIZE, HIDDEN, LAYERS, HEADS, DECAYS = 1, 64, 2, 4, 2

    key = jax.random.PRNGKey(0)
    pkey, xkey = jax.random.split(key)
    params = init_params(pkey, INPUT_SIZE, HIDDEN, LAYERS, HEADS, DECAYS)
    x = jax.random.normal(xkey, (B, T, INPUT_SIZE), jnp.float32)

    packed = pack_params(params, T, HIDDEN, HEADS)   # one-time, init-style repacking

    fwd = jax.jit(functools.partial(libra_forward, hidden_size=HIDDEN, attn_heads=HEADS))
    logits = jax.block_until_ready(fwd(packed, x))

    ref = libra_reference(params, x, HIDDEN, HEADS)
    assert logits.shape == (B, 5, TICK_CLASSES)
    # 2e-3 tolerance accounts for the approx-reciprocal softmax normalization
    assert jnp.allclose(logits, ref, rtol=2e-3, atol=2e-3), "mismatch vs JAX reference"

    print("KERNEL_OK")
</pallas_src>

<mosaic_0001>
module attributes {stable_mosaic.version = 11 : i64} {
  func.func @_libra_fused_kernel(%arg0: i32, %arg1: memref<16x1xf32, #tpu.memory_space<vmem>>, %arg2: memref<1x512xf32, #tpu.memory_space<vmem>>, %arg3: memref<128x512xf32, #tpu.memory_space<vmem>>, %arg4: memref<1x512xf32, #tpu.memory_space<vmem>>, %arg5: memref<128x64xf32, #tpu.memory_space<vmem>>, %arg6: memref<1x64xf32, #tpu.memory_space<vmem>>, %arg7: memref<128x64xf32, #tpu.memory_space<vmem>>, %arg8: memref<1x64xf32, #tpu.memory_space<vmem>>, %arg9: memref<128x64xf32, #tpu.memory_space<vmem>>, %arg10: memref<1x64xf32, #tpu.memory_space<vmem>>, %arg11: memref<64x64xf32, #tpu.memory_space<vmem>>, %arg12: memref<1x64xf32, #tpu.memory_space<vmem>>, %arg13: memref<8x4xf32, #tpu.memory_space<vmem>>, %arg14: memref<64x4xf32, #tpu.memory_space<vmem>>, %arg15: memref<4x64xf32, #tpu.memory_space<vmem>>, %arg16: memref<64x128xf32, #tpu.memory_space<vmem>>, %arg17: memref<1x128xf32, #tpu.memory_space<vmem>>, %arg18: memref<2x128xf32, #tpu.memory_space<vmem>>, %arg19: memref<16x128xf32, #tpu.memory_space<vmem>>) attributes {dimension_semantics = [#tpu.dimension_semantics<arbitrary>], iteration_bounds = array<i64: 1>, scalar_prefetch = 0 : i64, scratch_operands = 1 : i64, tpu.core_type = #tpu.core_type<tc>, window_params = [{pipeline_mode = #tpu.pipeline_mode<synchronous>, transform_indices = @transform_0, window_bounds = array<i64: 16, 1>}, {pipeline_mode = #tpu.pipeline_mode<synchronous>, transform_indices = @transform_1, window_bounds = array<i64: 1, 512>}, {pipeline_mode = #tpu.pipeline_mode<synchronous>, transform_indices = @transform_2, window_bounds = array<i64: 128, 512>}, {pipeline_mode = #tpu.pipeline_mode<synchronous>, transform_indices = @transform_3, window_bounds = array<i64: 1, 512>}, {pipeline_mode = #tpu.pipeline_mode<synchronous>, transform_indices = @transform_4, window_bounds = array<i64: 128, 64>}, {pipeline_mode = #tpu.pipeline_mode<synchronous>, transform_indices = @transform_5, window_bounds = array<i64: 1, 64>}, {pipeline_mode = #tpu.pipeline_mode<synchronous>, transform_indices = @transform_6, window_bounds = array<i64: 128, 64>}, {pipeline_mode = #tpu.pipeline_mode<synchronous>, transform_indices = @transform_7, window_bounds = array<i64: 1, 64>}, {pipeline_mode = #tpu.pipeline_mode<synchronous>, transform_indices = @transform_8, window_bounds = array<i64: 128, 64>}, {pipeline_mode = #tpu.pipeline_mode<synchronous>, transform_indices = @transform_9, window_bounds = array<i64: 1, 64>}, {pipeline_mode = #tpu.pipeline_mode<synchronous>, transform_indices = @transform_10, window_bounds = array<i64: 64, 64>}, {pipeline_mode = #tpu.pipeline_mode<synchronous>, transform_indices = @transform_11, window_bounds = array<i64: 1, 64>}, {pipeline_mode = #tpu.pipeline_mode<synchronous>, transform_indices = @transform_12, window_bounds = array<i64: 8, 4>}, {pipeline_mode = #tpu.pipeline_mode<synchronous>, transform_indices = @transform_13, window_bounds = array<i64: 64, 4>}, {pipeline_mode = #tpu.pipeline_mode<synchronous>, transform_indices = @transform_14, window_bounds = array<i64: 4, 64>}, {pipeline_mode = #tpu.pipeline_mode<synchronous>, transform_indices = @transform_15, window_bounds = array<i64: 64, 128>}, {pipeline_mode = #tpu.pipeline_mode<synchronous>, transform_indices = @transform_16, window_bounds = array<i64: 1, 128>}, {pipeline_mode = #tpu.pipeline_mode<synchronous>, transform_indices = @transform_17, window_bounds = array<i64: 2, 128>}]} {
    %c0 = arith.constant 0 : index
    %c0_0 = arith.constant 0 : index
    %0 = vector.load %arg1[%c0, %c0_0] : memref<16x1xf32, #tpu.memory_space<vmem>>, vector<16x1xf32>
    %c0_1 = arith.constant 0 : index
    %c0_2 = arith.constant 0 : index
    %1 = vector.load %arg2[%c0_1, %c0_2] : memref<1x512xf32, #tpu.memory_space<vmem>>, vector<1x512xf32>
    %2 = vector.broadcast %0 : vector<16x1xf32> to vector<16x512xf32>
    %3 = vector.broadcast %1 : vector<1x512xf32> to vector<16x512xf32>
    %4 = arith.mulf %2, %3 : vector<16x512xf32>
    %c0_3 = arith.constant 0 : index
    %c0_4 = arith.constant 0 : index
    %5 = vector.load %arg4[%c0_3, %c0_4] : memref<1x512xf32, #tpu.memory_space<vmem>>, vector<1x512xf32>
    %6 = vector.broadcast %5 : vector<1x512xf32> to vector<16x512xf32>
    %7 = arith.addf %4, %6 : vector<16x512xf32>
    %c0_5 = arith.constant 0 : index
    %c0_6 = arith.constant 0 : index
    %8 = vector.load %arg3[%c0_5, %c0_6] : memref<128x512xf32, #tpu.memory_space<vmem>>, vector<128x512xf32>
    %9 = tpu.iota {dimensions = array<i32: 1>} : vector<1x128xi32>
    %c64_i32 = arith.constant 64 : i32
    %10 = vector.broadcast %c64_i32 : i32 to vector<1x128xi32>
    %11 = arith.cmpi slt, %9, %10 : vector<1x128xi32>
    %12 = arith.extui %11 : vector<1x128xi1> to vector<1x128xi32>
    %13 = arith.sitofp %12 : vector<1x128xi32> to vector<1x128xf32>
    %cst = arith.constant 0.000000e+00 : f32
    %14 = vector.broadcast %cst : f32 to vector<2x128xf32>
    %15 = vector.extract_strided_slice %7 {offsets = [0, 0], sizes = [2, 512], strides = [1, 1]} : vector<16x512xf32> to vector<2x512xf32>
    %16 = vector.extract_strided_slice %15 {offsets = [0, 0], sizes = [2, 128], strides = [1, 1]} : vector<2x512xf32> to vector<2x128xf32>
    %17 = arith.negf %16 : vector<2x128xf32>
    %18 = math.exp %17 : vector<2x128xf32>
    %cst_7 = arith.constant 1.000000e+00 : f32
    %19 = vector.broadcast %cst_7 : f32 to vector<2x128xf32>
    %20 = arith.addf %19, %18 : vector<2x128xf32>
    %21 = arith.divf %19, %20 : vector<2x128xf32>
    %22 = vector.extract_strided_slice %15 {offsets = [0, 128], sizes = [2, 128], strides = [1, 1]} : vector<2x512xf32> to vector<2x128xf32>
    %23 = arith.negf %22 : vector<2x128xf32>
    %24 = math.exp %23 : vector<2x128xf32>
    %cst_8 = arith.constant 1.000000e+00 : f32
    %25 = vector.broadcast %cst_8 : f32 to vector<2x128xf32>
    %26 = arith.addf %25, %24 : vector<2x128xf32>
    %27 = arith.divf %25, %26 : vector<2x128xf32>
    %28 = vector.extract_strided_slice %15 {offsets = [0, 256], sizes = [2, 128], strides = [1, 1]} : vector<2x512xf32> to vector<2x128xf32>
    %29 = math.tanh %28 : vector<2x128xf32>
    %30 = vector.extract_strided_slice %15 {offsets = [0, 384], sizes = [2, 128], strides = [1, 1]} : vector<2x512xf32> to vector<2x128xf32>
    %31 = arith.negf %30 : vector<2x128xf32>
    %32 = math.exp %31 : vector<2x128xf32>
    %cst_9 = arith.constant 1.000000e+00 : f32
    %33 = vector.broadcast %cst_9 : f32 to vector<2x128xf32>
    %34 = arith.addf %33, %32 : vector<2x128xf32>
    %35 = arith.divf %33, %34 : vector<2x128xf32>
    %36 = arith.mulf %27, %14 : vector<2x128xf32>
    %37 = arith.mulf %21, %29 : vector<2x128xf32>
    %38 = arith.addf %36, %37 : vector<2x128xf32>
    %39 = math.tanh %38 : vector<2x128xf32>
    %40 = arith.mulf %35, %39 : vector<2x128xf32>
    %41 = vector.broadcast %13 : vector<1x128xf32> to vector<2x128xf32>
    %42 = arith.mulf %38, %41 : vector<2x128xf32>
    %43 = vector.broadcast %13 : vector<1x128xf32> to vector<2x128xf32>
    %44 = arith.mulf %40, %43 : vector<2x128xf32>
    %cst_10 = arith.constant dense<0.000000e+00> : vector<2x512xf32>
    %45 = tpu.matmul %44, %8, %cst_10 {dimension_numbers = #tpu.dot_dimension_numbers<[1], [0], [0], [1], [0, 0, 1, 1], [], []>} : vector<2x128xf32>, vector<128x512xf32>, vector<2x512xf32> -> vector<2x512xf32>
    %46 = vector.extract_strided_slice %7 {offsets = [2, 0], sizes = [2, 512], strides = [1, 1]} : vector<16x512xf32> to vector<2x512xf32>
    %47 = arith.addf %46, %45 : vector<2x512xf32>
    %48 = vector.extract_strided_slice %47 {offsets = [0, 0], sizes = [2, 128], strides = [1, 1]} : vector<2x512xf32> to vector<2x128xf32>
    %49 = arith.negf %48 : vector<2x128xf32>
    %50 = math.exp %49 : vector<2x128xf32>
    %cst_11 = arith.constant 1.000000e+00 : f32
    %51 = vector.broadcast %cst_11 : f32 to vector<2x128xf32>
    %52 = arith.addf %51, %50 : vector<2x128xf32>
    %53 = arith.divf %51, %52 : vector<2x128xf32>
    %54 = vector.extract_strided_slice %47 {offsets = [0, 128], sizes = [2, 128], strides = [1, 1]} : vector<2x512xf32> to vector<2x128xf32>
    %55 = arith.negf %54 : vector<2x128xf32>
    %56 = math.exp %55 : vector<2x128xf32>
    %cst_12 = arith.constant 1.000000e+00 : f32
    %57 = vector.broadcast %cst_12 : f32 to vector<2x128xf32>
    %58 = arith.addf %57, %56 : vector<2x128xf32>
    %59 = arith.divf %57, %58 : vector<2x128xf32>
    %60 = vector.extract_strided_slice %47 {offsets = [0, 256], sizes = [2, 128], strides = [1, 1]} : vector<2x512xf32> to vector<2x128xf32>
    %61 = math.tanh %60 : vector<2x128xf32>
    %62 = vector.extract_strided_slice %47 {offsets = [0, 384], sizes = [2, 128], strides = [1, 1]} : vector<2x512xf32> to vector<2x128xf32>
    %63 = arith.negf %62 : vector<2x128xf32>
    %64 = math.exp %63 : vector<2x128xf32>
    %cst_13 = arith.constant 1.000000e+00 : f32
    %65 = vector.broadcast %cst_13 : f32 to vector<2x128xf32>
    %66 = arith.addf %65, %64 : vector<2x128xf32>
    %67 = arith.divf %65, %66 : vector<2x128xf32>
    %68 = arith.mulf %59, %42 : vector<2x128xf32>
    %69 = arith.mulf %53, %61 : vector<2x128xf32>
    %70 = arith.addf %68, %69 : vector<2x128xf32>
    %71 = math.tanh %70 : vector<2x128xf32>
    %72 = arith.mulf %67, %71 : vector<2x128xf32>
    %73 = vector.extract_strided_slice %72 {offsets = [0, 0], sizes = [1, 128], strides = [1, 1]} : vector<2x128xf32> to vector<1x128xf32>
    %c0_14 = arith.constant 0 : index
    %c0_15 = arith.constant 0 : index
    %74 = vector.load %arg19[%c0_14, %c0_15] : memref<16x128xf32, #tpu.memory_space<vmem>>, vector<1x128xf32>
    tpu.vector_store %arg19[%c0_14, %c0_15], %73 {strides = array<i32>} : memref<16x128xf32, #tpu.memory_space<vmem>>, vector<1x128xf32>,
    %75 = vector.extract_strided_slice %72 {offsets = [1, 0], sizes = [1, 128], strides = [1, 1]} : vector<2x128xf32> to vector<1x128xf32>
    %c8 = arith.constant 8 : index
    %c0_16 = arith.constant 0 : index
    %76 = vector.load %arg19[%c8, %c0_16] : memref<16x128xf32, #tpu.memory_space<vmem>>, vector<1x128xf32>
    tpu.vector_store %arg19[%c8, %c0_16], %75 {strides = array<i32>} : memref<16x128xf32, #tpu.memory_space<vmem>>, vector<1x128xf32>,
    %cst_17 = arith.constant dense<0.000000e+00> : vector<2x512xf32>
    %77 = tpu.matmul %72, %8, %cst_17 {dimension_numbers = #tpu.dot_dimension_numbers<[1], [0], [0], [1], [0, 0, 1, 1], [], []>} : vector<2x128xf32>, vector<128x512xf32>, vector<2x512xf32> -> vector<2x512xf32>
    %78 = vector.extract_strided_slice %7 {offsets = [4, 0], sizes = [2, 512], strides = [1, 1]} : vector<16x512xf32> to vector<2x512xf32>
    %79 = arith.addf %78, %77 : vector<2x512xf32>
    %80 = vector.extract_strided_slice %79 {offsets = [0, 0], sizes = [2, 128], strides = [1, 1]} : vector<2x512xf32> to vector<2x128xf32>
    %81 = arith.negf %80 : vector<2x128xf32>
    %82 = math.exp %81 : vector<2x128xf32>
    %cst_18 = arith.constant 1.000000e+00 : f32
    %83 = vector.broadcast %cst_18 : f32 to vector<2x128xf32>
    %84 = arith.addf %83, %82 : vector<2x128xf32>
    %85 = arith.divf %83, %84 : vector<2x128xf32>
    %86 = vector.extract_strided_slice %79 {offsets = [0, 128], sizes = [2, 128], strides = [1, 1]} : vector<2x512xf32> to vector<2x128xf32>
    %87 = arith.negf %86 : vector<2x128xf32>
    %88 = math.exp %87 : vector<2x128xf32>
    %cst_19 = arith.constant 1.000000e+00 : f32
    %89 = vector.broadcast %cst_19 : f32 to vector<2x128xf32>
    %90 = arith.addf %89, %88 : vector<2x128xf32>
    %91 = arith.divf %89, %90 : vector<2x128xf32>
    %92 = vector.extract_strided_slice %79 {offsets = [0, 256], sizes = [2, 128], strides = [1, 1]} : vector<2x512xf32> to vector<2x128xf32>
    %93 = math.tanh %92 : vector<2x128xf32>
    %94 = vector.extract_strided_slice %79 {offsets = [0, 384], sizes = [2, 128], strides = [1, 1]} : vector<2x512xf32> to vector<2x128xf32>
    %95 = arith.negf %94 : vector<2x128xf32>
    %96 = math.exp %95 : vector<2x128xf32>
    %cst_20 = arith.constant 1.000000e+00 : f32
    %97 = vector.broadcast %cst_20 : f32 to vector<2x128xf32>
    %98 = arith.addf %97, %96 : vector<2x128xf32>
    %99 = arith.divf %97, %98 : vector<2x128xf32>
    %100 = arith.mulf %91, %70 : vector<2x128xf32>
    %101 = arith.mulf %85, %93 : vector<2x128xf32>
    %102 = arith.addf %100, %101 : vector<2x128xf32>
    %103 = math.tanh %102 : vector<2x128xf32>
    %104 = arith.mulf %99, %103 : vector<2x128xf32>
    %105 = vector.extract_strided_slice %104 {offsets = [0, 0], sizes = [1, 128], strides = [1, 1]} : vector<2x128xf32> to vector<1x128xf32>
    %c1 = arith.constant 1 : index
    %c0_21 = arith.constant 0 : index
    %106 = vector.load %arg19[%c1, %c0_21] : memref<16x128xf32, #tpu.memory_space<vmem>>, vector<1x128xf32>
    tpu.vector_store %arg19[%c1, %c0_21], %105 {strides = array<i32>} : memref<16x128xf32, #tpu.memory_space<vmem>>, vector<1x128xf32>,
    %107 = vector.extract_strided_slice %104 {offsets = [1, 0], sizes = [1, 128], strides = [1, 1]} : vector<2x128xf32> to vector<1x128xf32>
    %c9 = arith.constant 9 : index
    %c0_22 = arith.constant 0 : index
    %108 = vector.load %arg19[%c9, %c0_22] : memref<16x128xf32, #tpu.memory_space<vmem>>, vector<1x128xf32>
    tpu.vector_store %arg19[%c9, %c0_22], %107 {strides = array<i32>} : memref<16x128xf32, #tpu.memory_space<vmem>>, vector<1x128xf32>,
    %cst_23 = arith.constant dense<0.000000e+00> : vector<2x512xf32>
    %109 = tpu.matmul %104, %8, %cst_23 {dimension_numbers = #tpu.dot_dimension_numbers<[1], [0], [0], [1], [0, 0, 1, 1], [], []>} : vector<2x128xf32>, vector<128x512xf32>, vector<2x512xf32> -> vector<2x512xf32>
    %110 = vector.extract_strided_slice %7 {offsets = [6, 0], sizes = [2, 512], strides = [1, 1]} : vector<16x512xf32> to vector<2x512xf32>
    %111 = arith.addf %110, %109 : vector<2x512xf32>
    %112 = vector.extract_strided_slice %111 {offsets = [0, 0], sizes = [2, 128], strides = [1, 1]} : vector<2x512xf32> to vector<2x128xf32>
    %113 = arith.negf %112 : vector<2x128xf32>
    %114 = math.exp %113 : vector<2x128xf32>
    %cst_24 = arith.constant 1.000000e+00 : f32
    %115 = vector.broadcast %cst_24 : f32 to vector<2x128xf32>
    %116 = arith.addf %115, %114 : vector<2x128xf32>
    %117 = arith.divf %115, %116 : vector<2x128xf32>
    %118 = vector.extract_strided_slice %111 {offsets = [0, 128], sizes = [2, 128], strides = [1, 1]} : vector<2x512xf32> to vector<2x128xf32>
    %119 = arith.negf %118 : vector<2x128xf32>
    %120 = math.exp %119 : vector<2x128xf32>
    %cst_25 = arith.constant 1.000000e+00 : f32
    %121 = vector.broadcast %cst_25 : f32 to vector<2x128xf32>
    %122 = arith.addf %121, %120 : vector<2x128xf32>
    %123 = arith.divf %121, %122 : vector<2x128xf32>
    %124 = vector.extract_strided_slice %111 {offsets = [0, 256], sizes = [2, 128], strides = [1, 1]} : vector<2x512xf32> to vector<2x128xf32>
    %125 = math.tanh %124 : vector<2x128xf32>
    %126 = vector.extract_strided_slice %111 {offsets = [0, 384], sizes = [2, 128], strides = [1, 1]} : vector<2x512xf32> to vector<2x128xf32>
    %127 = arith.negf %126 : vector<2x128xf32>
    %128 = math.exp %127 : vector<2x128xf32>
    %cst_26 = arith.constant 1.000000e+00 : f32
    %129 = vector.broadcast %cst_26 : f32 to vector<2x128xf32>
    %130 = arith.addf %129, %128 : vector<2x128xf32>
    %131 = arith.divf %129, %130 : vector<2x128xf32>
    %132 = arith.mulf %123, %102 : vector<2x128xf32>
    %133 = arith.mulf %117, %125 : vector<2x128xf32>
    %134 = arith.addf %132, %133 : vector<2x128xf32>
    %135 = math.tanh %134 : vector<2x128xf32>
    %136 = arith.mulf %131, %135 : vector<2x128xf32>
    %137 = vector.extract_strided_slice %136 {offsets = [0, 0], sizes = [1, 128], strides = [1, 1]} : vector<2x128xf32> to vector<1x128xf32>
    %c2 = arith.constant 2 : index
    %c0_27 = arith.constant 0 : index
    %138 = vector.load %arg19[%c2, %c0_27] : memref<16x128xf32, #tpu.memory_space<vmem>>, vector<1x128xf32>
    tpu.vector_store %arg19[%c2, %c0_27], %137 {strides = array<i32>} : memref<16x128xf32, #tpu.memory_space<vmem>>, vector<1x128xf32>,
    %139 = vector.extract_strided_slice %136 {offsets = [1, 0], sizes = [1, 128], strides = [1, 1]} : vector<2x128xf32> to vector<1x128xf32>
    %c10 = arith.constant 10 : index
    %c0_28 = arith.constant 0 : index
    %140 = vector.load %arg19[%c10, %c0_28] : memref<16x128xf32, #tpu.memory_space<vmem>>, vector<1x128xf32>
    tpu.vector_store %arg19[%c10, %c0_28], %139 {strides = array<i32>} : memref<16x128xf32, #tpu.memory_space<vmem>>, vector<1x128xf32>,
    %cst_29 = arith.constant dense<0.000000e+00> : vector<2x512xf32>
    %141 = tpu.matmul %136, %8, %cst_29 {dimension_numbers = #tpu.dot_dimension_numbers<[1], [0], [0], [1], [0, 0, 1, 1], [], []>} : vector<2x128xf32>, vector<128x512xf32>, vector<2x512xf32> -> vector<2x512xf32>
    %142 = vector.extract_strided_slice %7 {offsets = [8, 0], sizes = [2, 512], strides = [1, 1]} : vector<16x512xf32> to vector<2x512xf32>
    %143 = arith.addf %142, %141 : vector<2x512xf32>
    %144 = vector.extract_strided_slice %143 {offsets = [0, 0], sizes = [2, 128], strides = [1, 1]} : vector<2x512xf32> to vector<2x128xf32>
    %145 = arith.negf %144 : vector<2x128xf32>
    %146 = math.exp %145 : vector<2x128xf32>
    %cst_30 = arith.constant 1.000000e+00 : f32
    %147 = vector.broadcast %cst_30 : f32 to vector<2x128xf32>
    %148 = arith.addf %147, %146 : vector<2x128xf32>
    %149 = arith.divf %147, %148 : vector<2x128xf32>
    %150 = vector.extract_strided_slice %143 {offsets = [0, 128], sizes = [2, 128], strides = [1, 1]} : vector<2x512xf32> to vector<2x128xf32>
    %151 = arith.negf %150 : vector<2x128xf32>
    %152 = math.exp %151 : vector<2x128xf32>
    %cst_31 = arith.constant 1.000000e+00 : f32
    %153 = vector.broadcast %cst_31 : f32 to vector<2x128xf32>
    %154 = arith.addf %153, %152 : vector<2x128xf32>
    %155 = arith.divf %153, %154 : vector<2x128xf32>
    %156 = vector.extract_strided_slice %143 {offsets = [0, 256], sizes = [2, 128], strides = [1, 1]} : vector<2x512xf32> to vector<2x128xf32>
    %157 = math.tanh %156 : vector<2x128xf32>
    %158 = vector.extract_strided_slice %143 {offsets = [0, 384], sizes = [2, 128], strides = [1, 1]} : vector<2x512xf32> to vector<2x128xf32>
    %159 = arith.negf %158 : vector<2x128xf32>
    %160 = math.exp %159 : vector<2x128xf32>
    %cst_32 = arith.constant 1.000000e+00 : f32
    %161 = vector.broadcast %cst_32 : f32 to vector<2x128xf32>
    %162 = arith.addf %161, %160 : vector<2x128xf32>
    %163 = arith.divf %161, %162 : vector<2x128xf32>
    %164 = arith.mulf %155, %134 : vector<2x128xf32>
    %165 = arith.mulf %149, %157 : vector<2x128xf32>
    %166 = arith.addf %164, %165 : vector<2x128xf32>
    %167 = math.tanh %166 : vector<2x128xf32>
    %168 = arith.mulf %163, %167 : vector<2x128xf32>
    %169 = vector.extract_strided_slice %168 {offsets = [0, 0], sizes = [1, 128], strides = [1, 1]} : vector<2x128xf32> to vector<1x128xf32>
    %c3 = arith.constant 3 : index
    %c0_33 = arith.constant 0 : index
    %170 = vector.load %arg19[%c3, %c0_33] : memref<16x128xf32, #tpu.memory_space<vmem>>, vector<1x128xf32>
    tpu.vector_store %arg19[%c3, %c0_33], %169 {strides = array<i32>} : memref<16x128xf32, #tpu.memory_space<vmem>>, vector<1x128xf32>,
    %171 = vector.extract_strided_slice %168 {offsets = [1, 0], sizes = [1, 128], strides = [1, 1]} : vector<2x128xf32> to vector<1x128xf32>
    %c11 = arith.constant 11 : index
    %c0_34 = arith.constant 0 : index
    %172 = vector.load %arg19[%c11, %c0_34] : memref<16x128xf32, #tpu.memory_space<vmem>>, vector<1x128xf32>
    tpu.vector_store %arg19[%c11, %c0_34], %171 {strides = array<i32>} : memref<16x128xf32, #tpu.memory_space<vmem>>, vector<1x128xf32>,
    %cst_35 = arith.constant dense<0.000000e+00> : vector<2x512xf32>
    %173 = tpu.matmul %168, %8, %cst_35 {dimension_numbers = #tpu.dot_dimension_numbers<[1], [0], [0], [1], [0, 0, 1, 1], [], []>} : vector<2x128xf32>, vector<128x512xf32>, vector<2x512xf32> -> vector<2x512xf32>
    %174 = vector.extract_strided_slice %7 {offsets = [10, 0], sizes = [2, 512], strides = [1, 1]} : vector<16x512xf32> to vector<2x512xf32>
    %175 = arith.addf %174, %173 : vector<2x512xf32>
    %176 = vector.extract_strided_slice %175 {offsets = [0, 0], sizes = [2, 128], strides = [1, 1]} : vector<2x512xf32> to vector<2x128xf32>
    %177 = arith.negf %176 : vector<2x128xf32>
    %178 = math.exp %177 : vector<2x128xf32>
    %cst_36 = arith.constant 1.000000e+00 : f32
    %179 = vector.broadcast %cst_36 : f32 to vector<2x128xf32>
    %180 = arith.addf %179, %178 : vector<2x128xf32>
    %181 = arith.divf %179, %180 : vector<2x128xf32>
    %182 = vector.extract_strided_slice %175 {offsets = [0, 128], sizes = [2, 128], strides = [1, 1]} : vector<2x512xf32> to vector<2x128xf32>
    %183 = arith.negf %182 : vector<2x128xf32>
    %184 = math.exp %183 : vector<2x128xf32>
    %cst_37 = arith.constant 1.000000e+00 : f32
    %185 = vector.broadcast %cst_37 : f32 to vector<2x128xf32>
    %186 = arith.addf %185, %184 : vector<2x128xf32>
    %187 = arith.divf %185, %186 : vector<2x128xf32>
    %188 = vector.extract_strided_slice %175 {offsets = [0, 256], sizes = [2, 128], strides = [1, 1]} : vector<2x512xf32> to vector<2x128xf32>
    %189 = math.tanh %188 : vector<2x128xf32>
    %190 = vector.extract_strided_slice %175 {offsets = [0, 384], sizes = [2, 128], strides = [1, 1]} : vector<2x512xf32> to vector<2x128xf32>
    %191 = arith.negf %190 : vector<2x128xf32>
    %192 = math.exp %191 : vector<2x128xf32>
    %cst_38 = arith.constant 1.000000e+00 : f32
    %193 = vector.broadcast %cst_38 : f32 to vector<2x128xf32>
    %194 = arith.addf %193, %192 : vector<2x128xf32>
    %195 = arith.divf %193, %194 : vector<2x128xf32>
    %196 = arith.mulf %187, %166 : vector<2x128xf32>
    %197 = arith.mulf %181, %189 : vector<2x128xf32>
    %198 = arith.addf %196, %197 : vector<2x128xf32>
    %199 = math.tanh %198 : vector<2x128xf32>
    %200 = arith.mulf %195, %199 : vector<2x128xf32>
    %201 = vector.extract_strided_slice %200 {offsets = [0, 0], sizes = [1, 128], strides = [1, 1]} : vector<2x128xf32> to vector<1x128xf32>
    %c4 = arith.constant 4 : index
    %c0_39 = arith.constant 0 : index
    %202 = vector.load %arg19[%c4, %c0_39] : memref<16x128xf32, #tpu.memory_space<vmem>>, vector<1x128xf32>
    tpu.vector_store %arg19[%c4, %c0_39], %201 {strides = array<i32>} : memref<16x128xf32, #tpu.memory_space<vmem>>, vector<1x128xf32>,
    %203 = vector.extract_strided_slice %200 {offsets = [1, 0], sizes = [1, 128], strides = [1, 1]} : vector<2x128xf32> to vector<1x128xf32>
    %c12 = arith.constant 12 : index
    %c0_40 = arith.constant 0 : index
    %204 = vector.load %arg19[%c12, %c0_40] : memref<16x128xf32, #tpu.memory_space<vmem>>, vector<1x128xf32>
    tpu.vector_store %arg19[%c12, %c0_40], %203 {strides = array<i32>} : memref<16x128xf32, #tpu.memory_space<vmem>>, vector<1x128xf32>,
    %cst_41 = arith.constant dense<0.000000e+00> : vector<2x512xf32>
    %205 = tpu.matmul %200, %8, %cst_41 {dimension_numbers = #tpu.dot_dimension_numbers<[1], [0], [0], [1], [0, 0, 1, 1], [], []>} : vector<2x128xf32>, vector<128x512xf32>, vector<2x512xf32> -> vector<2x512xf32>
    %206 = vector.extract_strided_slice %7 {offsets = [12, 0], sizes = [2, 512], strides = [1, 1]} : vector<16x512xf32> to vector<2x512xf32>
    %207 = arith.addf %206, %205 : vector<2x512xf32>
    %208 = vector.extract_strided_slice %207 {offsets = [0, 0], sizes = [2, 128], strides = [1, 1]} : vector<2x512xf32> to vector<2x128xf32>
    %209 = arith.negf %208 : vector<2x128xf32>
    %210 = math.exp %209 : vector<2x128xf32>
    %cst_42 = arith.constant 1.000000e+00 : f32
    %211 = vector.broadcast %cst_42 : f32 to vector<2x128xf32>
    %212 = arith.addf %211, %210 : vector<2x128xf32>
    %213 = arith.divf %211, %212 : vector<2x128xf32>
    %214 = vector.extract_strided_slice %207 {offsets = [0, 128], sizes = [2, 128], strides = [1, 1]} : vector<2x512xf32> to vector<2x128xf32>
    %215 = arith.negf %214 : vector<2x128xf32>
    %216 = math.exp %215 : vector<2x128xf32>
    %cst_43 = arith.constant 1.000000e+00 : f32
    %217 = vector.broadcast %cst_43 : f32 to vector<2x128xf32>
    %218 = arith.addf %217, %216 : vector<2x128xf32>
    %219 = arith.divf %217, %218 : vector<2x128xf32>
    %220 = vector.extract_strided_slice %207 {offsets = [0, 256], sizes = [2, 128], strides = [1, 1]} : vector<2x512xf32> to vector<2x128xf32>
    %221 = math.tanh %220 : vector<2x128xf32>
    %222 = vector.extract_strided_slice %207 {offsets = [0, 384], sizes = [2, 128], strides = [1, 1]} : vector<2x512xf32> to vector<2x128xf32>
    %223 = arith.negf %222 : vector<2x128xf32>
    %224 = math.exp %223 : vector<2x128xf32>
    %cst_44 = arith.constant 1.000000e+00 : f32
    %225 = vector.broadcast %cst_44 : f32 to vector<2x128xf32>
    %226 = arith.addf %225, %224 : vector<2x128xf32>
    %227 = arith.divf %225, %226 : vector<2x128xf32>
    %228 = arith.mulf %219, %198 : vector<2x128xf32>
    %229 = arith.mulf %213, %221 : vector<2x128xf32>
    %230 = arith.addf %228, %229 : vector<2x128xf32>
    %231 = math.tanh %230 : vector<2x128xf32>
    %232 = arith.mulf %227, %231 : vector<2x128xf32>
    %233 = vector.extract_strided_slice %232 {offsets = [0, 0], sizes = [1, 128], strides = [1, 1]} : vector<2x128xf32> to vector<1x128xf32>
    %c5 = arith.constant 5 : index
    %c0_45 = arith.constant 0 : index
    %234 = vector.load %arg19[%c5, %c0_45] : memref<16x128xf32, #tpu.memory_space<vmem>>, vector<1x128xf32>
    tpu.vector_store %arg19[%c5, %c0_45], %233 {strides = array<i32>} : memref<16x128xf32, #tpu.memory_space<vmem>>, vector<1x128xf32>,
    %235 = vector.extract_strided_slice %232 {offsets = [1, 0], sizes = [1, 128], strides = [1, 1]} : vector<2x128xf32> to vector<1x128xf32>
    %c13 = arith.constant 13 : index
    %c0_46 = arith.constant 0 : index
    %236 = vector.load %arg19[%c13, %c0_46] : memref<16x128xf32, #tpu.memory_space<vmem>>, vector<1x128xf32>
    tpu.vector_store %arg19[%c13, %c0_46], %235 {strides = array<i32>} : memref<16x128xf32, #tpu.memory_space<vmem>>, vector<1x128xf32>,
    %cst_47 = arith.constant dense<0.000000e+00> : vector<2x512xf32>
    %237 = tpu.matmul %232, %8, %cst_47 {dimension_numbers = #tpu.dot_dimension_numbers<[1], [0], [0], [1], [0, 0, 1, 1], [], []>} : vector<2x128xf32>, vector<128x512xf32>, vector<2x512xf32> -> vector<2x512xf32>
    %238 = vector.extract_strided_slice %7 {offsets = [14, 0], sizes = [2, 512], strides = [1, 1]} : vector<16x512xf32> to vector<2x512xf32>
    %239 = arith.addf %238, %237 : vector<2x512xf32>
    %240 = vector.extract_strided_slice %239 {offsets = [0, 0], sizes = [2, 128], strides = [1, 1]} : vector<2x512xf32> to vector<2x128xf32>
    %241 = arith.negf %240 : vector<2x128xf32>
    %242 = math.exp %241 : vector<2x128xf32>
    %cst_48 = arith.constant 1.000000e+00 : f32
    %243 = vector.broadcast %cst_48 : f32 to vector<2x128xf32>
    %244 = arith.addf %243, %242 : vector<2x128xf32>
    %245 = arith.divf %243, %244 : vector<2x128xf32>
    %246 = vector.extract_strided_slice %239 {offsets = [0, 128], sizes = [2, 128], strides = [1, 1]} : vector<2x512xf32> to vector<2x128xf32>
    %247 = arith.negf %246 : vector<2x128xf32>
    %248 = math.exp %247 : vector<2x128xf32>
    %cst_49 = arith.constant 1.000000e+00 : f32
    %249 = vector.broadcast %cst_49 : f32 to vector<2x128xf32>
    %250 = arith.addf %249, %248 : vector<2x128xf32>
    %251 = arith.divf %249, %250 : vector<2x128xf32>
    %252 = vector.extract_strided_slice %239 {offsets = [0, 256], sizes = [2, 128], strides = [1, 1]} : vector<2x512xf32> to vector<2x128xf32>
    %253 = math.tanh %252 : vector<2x128xf32>
    %254 = vector.extract_strided_slice %239 {offsets = [0, 384], sizes = [2, 128], strides = [1, 1]} : vector<2x512xf32> to vector<2x128xf32>
    %255 = arith.negf %254 : vector<2x128xf32>
    %256 = math.exp %255 : vector<2x128xf32>
    %cst_50 = arith.constant 1.000000e+00 : f32
    %257 = vector.broadcast %cst_50 : f32 to vector<2x128xf32>
    %258 = arith.addf %257, %256 : vector<2x128xf32>
    %259 = arith.divf %257, %258 : vector<2x128xf32>
    %260 = arith.mulf %251, %230 : vector<2x128xf32>
    %261 = arith.mulf %245, %253 : vector<2x128xf32>
    %262 = arith.addf %260, %261 : vector<2x128xf32>
    %263 = math.tanh %262 : vector<2x128xf32>
    %264 = arith.mulf %259, %263 : vector<2x128xf32>
    %265 = vector.extract_strided_slice %264 {offsets = [0, 0], sizes = [1, 128], strides = [1, 1]} : vector<2x128xf32> to vector<1x128xf32>
    %c6 = arith.constant 6 : index
    %c0_51 = arith.constant 0 : index
    %266 = vector.load %arg19[%c6, %c0_51] : memref<16x128xf32, #tpu.memory_space<vmem>>, vector<1x128xf32>
    tpu.vector_store %arg19[%c6, %c0_51], %265 {strides = array<i32>} : memref<16x128xf32, #tpu.memory_space<vmem>>, vector<1x128xf32>,
    %267 = vector.extract_strided_slice %264 {offsets = [1, 0], sizes = [1, 128], strides = [1, 1]} : vector<2x128xf32> to vector<1x128xf32>
    %c14 = arith.constant 14 : index
    %c0_52 = arith.constant 0 : index
    %268 = vector.load %arg19[%c14, %c0_52] : memref<16x128xf32, #tpu.memory_space<vmem>>, vector<1x128xf32>
    tpu.vector_store %arg19[%c14, %c0_52], %267 {strides = array<i32>} : memref<16x128xf32, #tpu.memory_space<vmem>>, vector<1x128xf32>,
    %cst_53 = arith.constant dense<0.000000e+00> : vector<2x512xf32>
    %269 = tpu.matmul %264, %8, %cst_53 {dimension_numbers = #tpu.dot_dimension_numbers<[1], [0], [0], [1], [0, 0, 1, 1], [], []>} : vector<2x128xf32>, vector<128x512xf32>, vector<2x512xf32> -> vector<2x512xf32>
    %270 = vector.broadcast %5 : vector<1x512xf32> to vector<2x512xf32>
    %271 = arith.addf %270, %269 : vector<2x512xf32>
    %272 = vector.extract_strided_slice %271 {offsets = [0, 0], sizes = [2, 128], strides = [1, 1]} : vector<2x512xf32> to vector<2x128xf32>
    %273 = arith.negf %272 : vector<2x128xf32>
    %274 = math.exp %273 : vector<2x128xf32>
    %cst_54 = arith.constant 1.000000e+00 : f32
    %275 = vector.broadcast %cst_54 : f32 to vector<2x128xf32>
    %276 = arith.addf %275, %274 : vector<2x128xf32>
    %277 = arith.divf %275, %276 : vector<2x128xf32>
    %278 = vector.extract_strided_slice %271 {offsets = [0, 128], sizes = [2, 128], strides = [1, 1]} : vector<2x512xf32> to vector<2x128xf32>
    %279 = arith.negf %278 : vector<2x128xf32>
    %280 = math.exp %279 : vector<2x128xf32>
    %cst_55 = arith.constant 1.000000e+00 : f32
    %281 = vector.broadcast %cst_55 : f32 to vector<2x128xf32>
    %282 = arith.addf %281, %280 : vector<2x128xf32>
    %283 = arith.divf %281, %282 : vector<2x128xf32>
    %284 = vector.extract_strided_slice %271 {offsets = [0, 256], sizes = [2, 128], strides = [1, 1]} : vector<2x512xf32> to vector<2x128xf32>
    %285 = math.tanh %284 : vector<2x128xf32>
    %286 = vector.extract_strided_slice %271 {offsets = [0, 384], sizes = [2, 128], strides = [1, 1]} : vector<2x512xf32> to vector<2x128xf32>
    %287 = arith.negf %286 : vector<2x128xf32>
    %288 = math.exp %287 : vector<2x128xf32>
    %cst_56 = arith.constant 1.000000e+00 : f32
    %289 = vector.broadcast %cst_56 : f32 to vector<2x128xf32>
    %290 = arith.addf %289, %288 : vector<2x128xf32>
    %291 = arith.divf %289, %290 : vector<2x128xf32>
    %292 = arith.mulf %283, %262 : vector<2x128xf32>
    %293 = arith.mulf %277, %285 : vector<2x128xf32>
    %294 = arith.addf %292, %293 : vector<2x128xf32>
    %295 = math.tanh %294 : vector<2x128xf32>
    %296 = arith.mulf %291, %295 : vector<2x128xf32>
    %297 = vector.extract_strided_slice %296 {offsets = [0, 0], sizes = [1, 128], strides = [1, 1]} : vector<2x128xf32> to vector<1x128xf32>
    %c7 = arith.constant 7 : index
    %c0_57 = arith.constant 0 : index
    %298 = vector.load %arg19[%c7, %c0_57] : memref<16x128xf32, #tpu.memory_space<vmem>>, vector<1x128xf32>
    tpu.vector_store %arg19[%c7, %c0_57], %297 {strides = array<i32>} : memref<16x128xf32, #tpu.memory_space<vmem>>, vector<1x128xf32>,
    %299 = vector.extract_strided_slice %296 {offsets = [1, 0], sizes = [1, 128], strides = [1, 1]} : vector<2x128xf32> to vector<1x128xf32>
    %c15 = arith.constant 15 : index
    %c0_58 = arith.constant 0 : index
    %300 = vector.load %arg19[%c15, %c0_58] : memref<16x128xf32, #tpu.memory_space<vmem>>, vector<1x128xf32>
    tpu.vector_store %arg19[%c15, %c0_58], %299 {strides = array<i32>} : memref<16x128xf32, #tpu.memory_space<vmem>>, vector<1x128xf32>,
    %c0_59 = arith.constant 0 : index
    %c0_60 = arith.constant 0 : index
    %301 = vector.load %arg19[%c0_59, %c0_60] : memref<16x128xf32, #tpu.memory_space<vmem>>, vector<16x128xf32>
    %c0_61 = arith.constant 0 : index
    %c0_62 = arith.constant 0 : index
    %302 = vector.load %arg7[%c0_61, %c0_62] : memref<128x64xf32, #tpu.memory_space<vmem>>, vector<128x64xf32>
    %cst_63 = arith.constant dense<0.000000e+00> : vector<16x64xf32>
    %303 = tpu.matmul %301, %302, %cst_63 {dimension_numbers = #tpu.dot_dimension_numbers<[1], [0], [0], [1], [0, 0, 1, 1], [], []>} : vector<16x128xf32>, vector<128x64xf32>, vector<16x64xf32> -> vector<16x64xf32>
    %c0_64 = arith.constant 0 : index
    %c0_65 = arith.constant 0 : index
    %304 = vector.load %arg8[%c0_64, %c0_65] : memref<1x64xf32, #tpu.memory_space<vmem>>, vector<1x64xf32>
    %305 = vector.broadcast %304 : vector<1x64xf32> to vector<16x64xf32>
    %306 = arith.addf %303, %305 : vector<16x64xf32>
    %c0_66 = arith.constant 0 : index
    %c0_67 = arith.constant 0 : index
    %307 = vector.load %arg9[%c0_66, %c0_67] : memref<128x64xf32, #tpu.memory_space<vmem>>, vector<128x64xf32>
    %cst_68 = arith.constant dense<0.000000e+00> : vector<16x64xf32>
    %308 = tpu.matmul %301, %307, %cst_68 {dimension_numbers = #tpu.dot_dimension_numbers<[1], [0], [0], [1], [0, 0, 1, 1], [], []>} : vector<16x128xf32>, vector<128x64xf32>, vector<16x64xf32> -> vector<16x64xf32>
    %c0_69 = arith.constant 0 : index
    %c0_70 = arith.constant 0 : index
    %309 = vector.load %arg10[%c0_69, %c0_70] : memref<1x64xf32, #tpu.memory_space<vmem>>, vector<1x64xf32>
    %310 = vector.broadcast %309 : vector<1x64xf32> to vector<16x64xf32>
    %311 = arith.addf %308, %310 : vector<16x64xf32>
    %c0_71 = arith.constant 0 : index
    %c0_72 = arith.constant 0 : index
    %312 = vector.load %arg5[%c0_71, %c0_72] : memref<128x64xf32, #tpu.memory_space<vmem>>, vector<128x64xf32>
    %cst_73 = arith.constant dense<0.000000e+00> : vector<2x64xf32>
    %313 = tpu.matmul %296, %312, %cst_73 {dimension_numbers = #tpu.dot_dimension_numbers<[1], [0], [0], [1], [0, 0, 1, 1], [], []>} : vector<2x128xf32>, vector<128x64xf32>, vector<2x64xf32> -> vector<2x64xf32>
    %c0_74 = arith.constant 0 : index
    %c0_75 = arith.constant 0 : index
    %314 = vector.load %arg6[%c0_74, %c0_75] : memref<1x64xf32, #tpu.memory_space<vmem>>, vector<1x64xf32>
    %315 = vector.broadcast %314 : vector<1x64xf32> to vector<2x64xf32>
    %316 = arith.addf %313, %315 : vector<2x64xf32>
    %c0_76 = arith.constant 0 : index
    %c0_77 = arith.constant 0 : index
    %317 = vector.load %arg14[%c0_76, %c0_77] : memref<64x4xf32, #tpu.memory_space<vmem>>, vector<64x4xf32>
    %c0_78 = arith.constant 0 : index
    %c0_79 = arith.constant 0 : index
    %318 = vector.load %arg15[%c0_78, %c0_79] : memref<4x64xf32, #tpu.memory_space<vmem>>, vector<4x64xf32>
    %c0_80 = arith.constant 0 : index
    %c0_81 = arith.constant 0 : index
    %319 = vector.load %arg13[%c0_80, %c0_81] : memref<8x4xf32, #tpu.memory_space<vmem>>, vector<8x4xf32>
    %cst_82 = arith.constant 1.000000e+00 : f32
    %320 = vector.broadcast %cst_82 : f32 to vector<1x8xf32>
    %321 = vector.extract_strided_slice %306 {offsets = [0, 0], sizes = [8, 64], strides = [1, 1]} : vector<16x64xf32> to vector<8x64xf32>
    %322 = vector.extract_strided_slice %311 {offsets = [0, 0], sizes = [8, 64], strides = [1, 1]} : vector<16x64xf32> to vector<8x64xf32>
    %323 = vector.extract_strided_slice %316 {offsets = [0, 0], sizes = [1, 64], strides = [1, 1]} : vector<2x64xf32> to vector<1x64xf32>
    %324 = vector.broadcast %323 : vector<1x64xf32> to vector<8x64xf32>
    %325 = arith.mulf %321, %324 : vector<8x64xf32>
    %cst_83 = arith.constant dense<0.000000e+00> : vector<8x4xf32>
    %326 = tpu.matmul %325, %317, %cst_83 {dimension_numbers = #tpu.dot_dimension_numbers<[1], [0], [0], [1], [0, 0, 1, 1], [], []>} : vector<8x64xf32>, vector<64x4xf32>, vector<8x4xf32> -> vector<8x4xf32>
    %cst_84 = arith.constant 2.500000e-01 : f32
    %327 = vector.broadcast %cst_84 : f32 to vector<8x4xf32>
    %328 = arith.mulf %326, %327 : vector<8x4xf32>
    %329 = arith.mulf %328, %319 : vector<8x4xf32>
    %cst_85 = arith.constant dense<0xFF800000> : vector<4xf32>
    %330 = vector.multi_reduction <maximumf>, %329, %cst_85 [0] : vector<8x4xf32> to vector<4xf32>
    %331 = vector.shape_cast %330 : vector<4xf32> to vector<1x4xf32>
    %332 = vector.broadcast %331 : vector<1x4xf32> to vector<8x4xf32>
    %333 = arith.subf %329, %332 : vector<8x4xf32>
    %334 = math.exp %333 : vector<8x4xf32>
    %cst_86 = arith.constant dense<0.000000e+00> : vector<4xf32>
    %335 = vector.multi_reduction <add>, %334, %cst_86 [0] : vector<8x4xf32> to vector<4xf32>
    %336 = vector.shape_cast %335 : vector<4xf32> to vector<1x4xf32>
    %337 = tpu.reciprocal %336 {approx = true} : vector<1x4xf32> -> vector<1x4xf32>
    %338 = vector.broadcast %337 : vector<1x4xf32> to vector<8x4xf32>
    %339 = arith.mulf %334, %338 : vector<8x4xf32>
    %cst_87 = arith.constant dense<0.000000e+00> : vector<8x64xf32>
    %340 = tpu.matmul %339, %318, %cst_87 {dimension_numbers = #tpu.dot_dimension_numbers<[1], [0], [0], [1], [0, 0, 1, 1], [], []>} : vector<8x4xf32>, vector<4x64xf32>, vector<8x64xf32> -> vector<8x64xf32>
    %341 = arith.mulf %340, %322 : vector<8x64xf32>
    %cst_88 = arith.constant dense<0.000000e+00> : vector<1x64xf32>
    %342 = tpu.matmul %320, %341, %cst_88 {dimension_numbers = #tpu.dot_dimension_numbers<[1], [0], [0], [1], [0, 0, 1, 1], [], []>} : vector<1x8xf32>, vector<8x64xf32>, vector<1x64xf32> -> vector<1x64xf32>
    %343 = vector.extract_strided_slice %306 {offsets = [8, 0], sizes = [8, 64], strides = [1, 1]} : vector<16x64xf32> to vector<8x64xf32>
    %344 = vector.extract_strided_slice %311 {offsets = [8, 0], sizes = [8, 64], strides = [1, 1]} : vector<16x64xf32> to vector<8x64xf32>
    %345 = vector.extract_strided_slice %316 {offsets = [1, 0], sizes = [1, 64], strides = [1, 1]} : vector<2x64xf32> to vector<1x64xf32>
    %346 = vector.broadcast %345 : vector<1x64xf32> to vector<8x64xf32>
    %347 = arith.mulf %343, %346 : vector<8x64xf32>
    %cst_89 = arith.constant dense<0.000000e+00> : vector<8x4xf32>
    %348 = tpu.matmul %347, %317, %cst_89 {dimension_numbers = #tpu.dot_dimension_numbers<[1], [0], [0], [1], [0, 0, 1, 1], [], []>} : vector<8x64xf32>, vector<64x4xf32>, vector<8x4xf32> -> vector<8x4xf32>
    %cst_90 = arith.constant 2.500000e-01 : f32
    %349 = vector.broadcast %cst_90 : f32 to vector<8x4xf32>
    %350 = arith.mulf %348, %349 : vector<8x4xf32>
    %351 = arith.mulf %350, %319 : vector<8x4xf32>
    %cst_91 = arith.constant dense<0xFF800000> : vector<4xf32>
    %352 = vector.multi_reduction <maximumf>, %351, %cst_91 [0] : vector<8x4xf32> to vector<4xf32>
    %353 = vector.shape_cast %352 : vector<4xf32> to vector<1x4xf32>
    %354 = vector.broadcast %353 : vector<1x4xf32> to vector<8x4xf32>
    %355 = arith.subf %351, %354 : vector<8x4xf32>
    %356 = math.exp %355 : vector<8x4xf32>
    %cst_92 = arith.constant dense<0.000000e+00> : vector<4xf32>
    %357 = vector.multi_reduction <add>, %356, %cst_92 [0] : vector<8x4xf32> to vector<4xf32>
    %358 = vector.shape_cast %357 : vector<4xf32> to vector<1x4xf32>
    %359 = tpu.reciprocal %358 {approx = true} : vector<1x4xf32> -> vector<1x4xf32>
    %360 = vector.broadcast %359 : vector<1x4xf32> to vector<8x4xf32>
    %361 = arith.mulf %356, %360 : vector<8x4xf32>
    %cst_93 = arith.constant dense<0.000000e+00> : vector<8x64xf32>
    %362 = tpu.matmul %361, %318, %cst_93 {dimension_numbers = #tpu.dot_dimension_numbers<[1], [0], [0], [1], [0, 0, 1, 1], [], []>} : vector<8x4xf32>, vector<4x64xf32>, vector<8x64xf32> -> vector<8x64xf32>
    %363 = arith.mulf %362, %344 : vector<8x64xf32>
    %cst_94 = arith.constant dense<0.000000e+00> : vector<1x64xf32>
    %364 = tpu.matmul %320, %363, %cst_94 {dimension_numbers = #tpu.dot_dimension_numbers<[1], [0], [0], [1], [0, 0, 1, 1], [], []>} : vector<1x8xf32>, vector<8x64xf32>, vector<1x64xf32> -> vector<1x64xf32>
    %365 = tpu.concatenate %342, %364 in 0 : vector<1x64xf32>, vector<1x64xf32> -> vector<2x64xf32>
    %c0_95 = arith.constant 0 : index
    %c0_96 = arith.constant 0 : index
    %366 = vector.load %arg11[%c0_95, %c0_96] : memref<64x64xf32, #tpu.memory_space<vmem>>, vector<64x64xf32>
    %cst_97 = arith.constant dense<0.000000e+00> : vector<2x64xf32>
    %367 = tpu.matmul %365, %366, %cst_97 {dimension_numbers = #tpu.dot_dimension_numbers<[1], [0], [0], [1], [0, 0, 1, 1], [], []>} : vector<2x64xf32>, vector<64x64xf32>, vector<2x64xf32> -> vector<2x64xf32>
    %c0_98 = arith.constant 0 : index
    %c0_99 = arith.constant 0 : index
    %368 = vector.load %arg12[%c0_98, %c0_99] : memref<1x64xf32, #tpu.memory_space<vmem>>, vector<1x64xf32>
    %369 = vector.broadcast %368 : vector<1x64xf32> to vector<2x64xf32>
    %370 = arith.addf %367, %369 : vector<2x64xf32>
    %c0_100 = arith.constant 0 : index
    %c0_101 = arith.constant 0 : index
    %371 = vector.load %arg16[%c0_100, %c0_101] : memref<64x128xf32, #tpu.memory_space<vmem>>, vector<64x128xf32>
    %cst_102 = arith.constant dense<0.000000e+00> : vector<2x128xf32>
    %372 = tpu.matmul %370, %371, %cst_102 {dimension_numbers = #tpu.dot_dimension_numbers<[1], [0], [0], [1], [0, 0, 1, 1], [], []>} : vector<2x64xf32>, vector<64x128xf32>, vector<2x128xf32> -> vector<2x128xf32>
    %c0_103 = arith.constant 0 : index
    %c0_104 = arith.constant 0 : index
    %373 = vector.load %arg17[%c0_103, %c0_104] : memref<1x128xf32, #tpu.memory_space<vmem>>, vector<1x128xf32>
    %374 = vector.broadcast %373 : vector<1x128xf32> to vector<2x128xf32>
    %375 = arith.addf %372, %374 : vector<2x128xf32>
    %c0_105 = arith.constant 0 : index
    %c0_106 = arith.constant 0 : index
    %376 = vector.load %arg18[%c0_105, %c0_106] : memref<2x128xf32, #tpu.memory_space<vmem>>, vector<2x128xf32>
    tpu.vector_store %arg18[%c0_105, %c0_106], %375 {strides = array<i32>} : memref<2x128xf32, #tpu.memory_space<vmem>>, vector<2x128xf32>,
    return
  }
  func.func @transform_0(%arg0: i32) -> (i32, i32) {
    %c0_i32 = arith.constant 0 : i32
    %c0_i32_0 = arith.constant 0 : i32
    %c0_i32_1 = arith.constant 0 : i32
    return %c0_i32, %c0_i32_0 : i32, i32
  }
  func.func @transform_1(%arg0: i32) -> (i32, i32) {
    %c0_i32 = arith.constant 0 : i32
    %c0_i32_0 = arith.constant 0 : i32
    %c0_i32_1 = arith.constant 0 : i32
    return %c0_i32, %c0_i32_0 : i32, i32
  }
  func.func @transform_2(%arg0: i32) -> (i32, i32) {
    %c0_i32 = arith.constant 0 : i32
    %c0_i32_0 = arith.constant 0 : i32
    %c0_i32_1 = arith.constant 0 : i32
    return %c0_i32, %c0_i32_0 : i32, i32
  }
  func.func @transform_3(%arg0: i32) -> (i32, i32) {
    %c0_i32 = arith.constant 0 : i32
    %c0_i32_0 = arith.constant 0 : i32
    %c0_i32_1 = arith.constant 0 : i32
    return %c0_i32, %c0_i32_0 : i32, i32
  }
  func.func @transform_4(%arg0: i32) -> (i32, i32) {
    %c0_i32 = arith.constant 0 : i32
    %c0_i32_0 = arith.constant 0 : i32
    %c0_i32_1 = arith.constant 0 : i32
    return %c0_i32, %c0_i32_0 : i32, i32
  }
  func.func @transform_5(%arg0: i32) -> (i32, i32) {
    %c0_i32 = arith.constant 0 : i32
    %c0_i32_0 = arith.constant 0 : i32
    %c0_i32_1 = arith.constant 0 : i32
    return %c0_i32, %c0_i32_0 : i32, i32
  }
  func.func @transform_6(%arg0: i32) -> (i32, i32) {
    %c0_i32 = arith.constant 0 : i32
    %c0_i32_0 = arith.constant 0 : i32
    %c0_i32_1 = arith.constant 0 : i32
    return %c0_i32, %c0_i32_0 : i32, i32
  }
  func.func @transform_7(%arg0: i32) -> (i32, i32) {
    %c0_i32 = arith.constant 0 : i32
    %c0_i32_0 = arith.constant 0 : i32
    %c0_i32_1 = arith.constant 0 : i32
    return %c0_i32, %c0_i32_0 : i32, i32
  }
  func.func @transform_8(%arg0: i32) -> (i32, i32) {
    %c0_i32 = arith.constant 0 : i32
    %c0_i32_0 = arith.constant 0 : i32
    %c0_i32_1 = arith.constant 0 : i32
    return %c0_i32, %c0_i32_0 : i32, i32
  }
  func.func @transform_9(%arg0: i32) -> (i32, i32) {
    %c0_i32 = arith.constant 0 : i32
    %c0_i32_0 = arith.constant 0 : i32
    %c0_i32_1 = arith.constant 0 : i32
    return %c0_i32, %c0_i32_0 : i32, i32
  }
  func.func @transform_10(%arg0: i32) -> (i32, i32) {
    %c0_i32 = arith.constant 0 : i32
    %c0_i32_0 = arith.constant 0 : i32
    %c0_i32_1 = arith.constant 0 : i32
    return %c0_i32, %c0_i32_0 : i32, i32
  }
  func.func @transform_11(%arg0: i32) -> (i32, i32) {
    %c0_i32 = arith.constant 0 : i32
    %c0_i32_0 = arith.constant 0 : i32
    %c0_i32_1 = arith.constant 0 : i32
    return %c0_i32, %c0_i32_0 : i32, i32
  }
  func.func @transform_12(%arg0: i32) -> (i32, i32) {
    %c0_i32 = arith.constant 0 : i32
    %c0_i32_0 = arith.constant 0 : i32
    %c0_i32_1 = arith.constant 0 : i32
    return %c0_i32, %c0_i32_0 : i32, i32
  }
  func.func @transform_13(%arg0: i32) -> (i32, i32) {
    %c0_i32 = arith.constant 0 : i32
    %c0_i32_0 = arith.constant 0 : i32
    %c0_i32_1 = arith.constant 0 : i32
    return %c0_i32, %c0_i32_0 : i32, i32
  }
  func.func @transform_14(%arg0: i32) -> (i32, i32) {
    %c0_i32 = arith.constant 0 : i32
    %c0_i32_0 = arith.constant 0 : i32
    %c0_i32_1 = arith.constant 0 : i32
    return %c0_i32, %c0_i32_0 : i32, i32
  }
  func.func @transform_15(%arg0: i32) -> (i32, i32) {
    %c0_i32 = arith.constant 0 : i32
    %c0_i32_0 = arith.constant 0 : i32
    %c0_i32_1 = arith.constant 0 : i32
    return %c0_i32, %c0_i32_0 : i32, i32
  }
  func.func @transform_16(%arg0: i32) -> (i32, i32) {
    %c0_i32 = arith.constant 0 : i32
    %c0_i32_0 = arith.constant 0 : i32
    %c0_i32_1 = arith.constant 0 : i32
    return %c0_i32, %c0_i32_0 : i32, i32
  }
  func.func @transform_17(%arg0: i32) -> (i32, i32) {
    %c0_i32 = arith.constant 0 : i32
    %c0_i32_0 = arith.constant 0 : i32
    %c0_i32_1 = arith.constant 0 : i32
    return %c0_i32, %c0_i32_0 : i32, i32
  }
}

</mosaic_0001>

<llo_original>
// kernel: libra_forward.1
$region0: #{libra_forward.1}
  #allocation0 [shape = 'u32[]', space=smem, size = 0x4, offset = 0x4, fixed_abs, tag = 'smem constant byte address 0x4 - core index']
  #allocation1 [shape = 'u32[144,128]{1,0:T(1,128)}', space=vmem, size = 0x12000, scoped, tag = 'internal scratch']
  #allocation2 [shape = 'f32[16,128]{1,0:T(8,128)}', space=vmem, size = 0x2000, scoped, tag = 'scratch operand']
  %s0 = inlined_call_operand.vmem [shape: f32[16,1], index: 0, kind: input, shape index: {}]
  %s1 = inlined_call_operand.vmem [shape: f32[1,512], index: 1, kind: input, shape index: {}]
  %s2 = inlined_call_operand.vmem [shape: f32[128,512], index: 2, kind: input, shape index: {}]
  %s3 = inlined_call_operand.hbm [shape: f32[1,512], index: 3, kind: input, shape index: {}]
  %s4 = inlined_call_operand.vmem [shape: f32[128,64], index: 4, kind: input, shape index: {}]
  %s5 = inlined_call_operand.vmem [shape: f32[1,64], index: 5, kind: input, shape index: {}]
  %s6 = inlined_call_operand.vmem [shape: f32[128,64], index: 6, kind: input, shape index: {}]
  %s7 = inlined_call_operand.vmem [shape: f32[1,64], index: 7, kind: input, shape index: {}]
  %s8 = inlined_call_operand.vmem [shape: f32[128,64], index: 8, kind: input, shape index: {}]
  %s9 = inlined_call_operand.vmem [shape: f32[1,64], index: 9, kind: input, shape index: {}]
  %s10 = inlined_call_operand.hbm [shape: f32[64,64], index: 10, kind: input, shape index: {}]
  %s11 = inlined_call_operand.hbm [shape: f32[1,64], index: 11, kind: input, shape index: {}]
  %s12 = inlined_call_operand.vmem [shape: f32[8,4], index: 12, kind: input, shape index: {}]
  %s13 = inlined_call_operand.vmem [shape: f32[64,4], index: 13, kind: input, shape index: {}]
  %s14 = inlined_call_operand.hbm [shape: f32[4,64], index: 14, kind: input, shape index: {}]
  %s15 = inlined_call_operand.hbm [shape: f32[64,128], index: 15, kind: input, shape index: {}]
  %s16 = inlined_call_operand.hbm [shape: f32[1,128], index: 16, kind: input, shape index: {}]
  %s17 = inlined_call_operand.vmem [shape: f32[2,128], index: 17, kind: output, shape index: {}]
  %s18 = sld [smem:[#allocation0]]
  $region102: #{libra_forward.1} parent=0
    _
  %s20 = ssub.s32 1, %s18
  %s21 = scalar_select 0, %s20, %s18
  $region1: #{libra_forward.1} parent=0
    #allocation3 [shape = 'u8[2048]{0}', space=vmem, size = 0x800, scoped, tag = 'input window, operand 3, single buffered']
    #allocation4 [shape = 's32[1]{0}', space=sflag, size = 0x4, scoped, tag = 'scoped memory for libra_forward.1']
    #allocation5 [shape = 'u8[32768]{0}', space=vmem, size = 0x8000, scoped, tag = 'input window, operand 10, single buffered']
    #allocation6 [shape = 's32[1]{0}', space=sflag, size = 0x4, scoped, tag = 'scoped memory for libra_forward.1']
    #allocation7 [shape = 'u8[512]{0}', space=vmem, size = 0x400, scoped, tag = 'input window, operand 11, single buffered']
    #allocation8 [shape = 'u8[2048]{0}', space=vmem, size = 0x800, scoped, tag = 'input window, operand 14, single buffered']
    #allocation9 [shape = 's32[1]{0}', space=sflag, size = 0x4, scoped, tag = 'scoped memory for libra_forward.1']
    #allocation10 [shape = 'u8[32768]{0}', space=vmem, size = 0x8000, scoped, tag = 'input window, operand 15, single buffered']
    #allocation11 [shape = 'u8[512]{0}', space=vmem, size = 0x400, scoped, tag = 'input window, operand 16, single buffered']
    #allocation12 [shape = 's32[1]{0}', space=sflag, size = 0x4, scoped, tag = 'scoped memory for libra_forward.1']
    %22 = vsyncpa [#allocation4], 0
    %23 = vsyncpa [#allocation6], 0
    %24 = vsyncpa [#allocation9], 0
    %25 = vsyncpa [#allocation12], 0
    // Predicated region
    $region2: #{libra_forward.1} parent=1 // pred_check
      _
    $region3: #{libra_forward.1} parent=1 // pred_check_branch
      %27 = sbr.rel (0) target = $region5
    $region4: #{libra_forward.1} parent=1 // pred_region
      _
    $region5: #{libra_forward.1} parent=1 // pred_fallthru
      _
    // Predicated region
    $region6: #{libra_forward.1} parent=1 // pred_check
      _
    $region7: #{libra_forward.1} parent=1 // pred_check_branch
      %29 = sbr.rel (0) target = $region9
    $region8: #{libra_forward.1} parent=1 // pred_region
      _
    $region9: #{libra_forward.1} parent=1 // pred_fallthru
      _
    // Predicated region
    $region10: #{libra_forward.1} parent=1 // pred_check
      _
    $region11: #{libra_forward.1} parent=1 // pred_check_branch
      %31 = sbr.rel (0) target = $region13
    $region12: #{libra_forward.1} parent=1 // pred_region
      _
    $region13: #{libra_forward.1} parent=1 // pred_fallthru
      _
    // Predicated region
    $region14: #{libra_forward.1} parent=1 // pred_check
      _
    $region15: #{libra_forward.1} parent=1 // pred_check_branch
      %33 = sbr.rel (0) target = $region17
    $region16: #{libra_forward.1} parent=1 // pred_region
      %s35 = ssub.s32 64, 64
      %36 = vsyncadd [#allocation4], %s35
      %s38 = sshll.u32 [#allocation3], 4
      %s39 = int_to_ptr.vmem [resolvable:$true] %s38
      %41 = dma.hbm_to_vmem [thread:$0]  %s3, 64, %s39, [#allocation4]
    $region17: #{libra_forward.1} parent=1 // pred_fallthru
      _
    // Predicated region
    $region18: #{libra_forward.1} parent=1 // pred_check
      _
    $region19: #{libra_forward.1} parent=1 // pred_check_branch
      %43 = sbr.rel (0) target = $region21
    $region20: #{libra_forward.1} parent=1 // pred_region
      _
    $region21: #{libra_forward.1} parent=1 // pred_fallthru
      _
    // Predicated region
    $region22: #{libra_forward.1} parent=1 // pred_check
      _
    $region23: #{libra_forward.1} parent=1 // pred_check_branch
      %45 = sbr.rel (0) target = $region25
    $region24: #{libra_forward.1} parent=1 // pred_region
      _
    $region25: #{libra_forward.1} parent=1 // pred_fallthru
      _
    // Predicated region
    $region26: #{libra_forward.1} parent=1 // pred_check
      _
    $region27: #{libra_forward.1} parent=1 // pred_check_branch
      %47 = sbr.rel (0) target = $region29
    $region28: #{libra_forward.1} parent=1 // pred_region
      _
    $region29: #{libra_forward.1} parent=1 // pred_fallthru
      _
    // Predicated region
    $region30: #{libra_forward.1} parent=1 // pred_check
      _
    $region31: #{libra_forward.1} parent=1 // pred_check_branch
      %49 = sbr.rel (0) target = $region33
    $region32: #{libra_forward.1} parent=1 // pred_region
      _
    $region33: #{libra_forward.1} parent=1 // pred_fallthru
      _
    // Predicated region
    $region34: #{libra_forward.1} parent=1 // pred_check
      _
    $region35: #{libra_forward.1} parent=1 // pred_check_branch
      %51 = sbr.rel (0) target = $region37
    $region36: #{libra_forward.1} parent=1 // pred_region
      _
    $region37: #{libra_forward.1} parent=1 // pred_fallthru
      _
    // Predicated region
    $region38: #{libra_forward.1} parent=1 // pred_check
      _
    $region39: #{libra_forward.1} parent=1 // pred_check_branch
      %53 = sbr.rel (0) target = $region41
    $region40: #{libra_forward.1} parent=1 // pred_region
      _
    $region41: #{libra_forward.1} parent=1 // pred_fallthru
      _
    // Predicated region
    $region42: #{libra_forward.1} parent=1 // pred_check
      _
    $region43: #{libra_forward.1} parent=1 // pred_check_branch
      %55 = sbr.rel (0) target = $region45
    $region44: #{libra_forward.1} parent=1 // pred_region
      %s57 = ssub.s32 1024, 1024
      %58 = vsyncadd [#allocation6], %s57
      %s59 = sshll.u32 [#allocation5], 4
      %s60 = int_to_ptr.vmem [resolvable:$true] %s59
      %65 = dma.hbm_to_vmem [thread:$0]  %s10, 1024, %s60, [#allocation6], 128, 128, 8
    $region45: #{libra_forward.1} parent=1 // pred_fallthru
      _
    // Predicated region
    $region46: #{libra_forward.1} parent=1 // pred_check
      _
    $region47: #{libra_forward.1} parent=1 // pred_check_branch
      %67 = sbr.rel (0) target = $region49
    $region48: #{libra_forward.1} parent=1 // pred_region
      %s69 = ssub.s32 16, 16
      %70 = vsyncadd [#allocation6], %s69
      %s72 = sshll.u32 [#allocation7], 4
      %s73 = int_to_ptr.vmem [resolvable:$true] %s72
      %75 = dma.hbm_to_vmem [thread:$0]  %s11, 16, %s73, [#allocation6]
    $region49: #{libra_forward.1} parent=1 // pred_fallthru
      _
    // Predicated region
    $region50: #{libra_forward.1} parent=1 // pred_check
      _
    $region51: #{libra_forward.1} parent=1 // pred_check_branch
      %77 = sbr.rel (0) target = $region53
    $region52: #{libra_forward.1} parent=1 // pred_region
      _
    $region53: #{libra_forward.1} parent=1 // pred_fallthru
      _
    // Predicated region
    $region54: #{libra_forward.1} parent=1 // pred_check
      _
    $region55: #{libra_forward.1} parent=1 // pred_check_branch
      %79 = sbr.rel (0) target = $region57
    $region56: #{libra_forward.1} parent=1 // pred_region
      _
    $region57: #{libra_forward.1} parent=1 // pred_fallthru
      _
    // Predicated region
    $region58: #{libra_forward.1} parent=1 // pred_check
      _
    $region59: #{libra_forward.1} parent=1 // pred_check_branch
      %81 = sbr.rel (0) target = $region61
    $region60: #{libra_forward.1} parent=1 // pred_region
      %s83 = ssub.s32 64, 64
      %84 = vsyncadd [#allocation9], %s83
      %s86 = sshll.u32 [#allocation8], 4
      %s87 = int_to_ptr.vmem [resolvable:$true] %s86
      %89 = dma.hbm_to_vmem [thread:$0]  %s14, 64, %s87, [#allocation9]
    $region61: #{libra_forward.1} parent=1 // pred_fallthru
      _
    // Predicated region
    $region62: #{libra_forward.1} parent=1 // pred_check
      _
    $region63: #{libra_forward.1} parent=1 // pred_check_branch
      %91 = sbr.rel (0) target = $region65
    $region64: #{libra_forward.1} parent=1 // pred_region
      %s93 = ssub.s32 1024, 1024
      %94 = vsyncadd [#allocation9], %s93
      %s95 = sshll.u32 [#allocation10], 4
      %s96 = int_to_ptr.vmem [resolvable:$true] %s95
      %101 = dma.hbm_to_vmem [thread:$0]  %s15, 1024, %s96, [#allocation9], 128, 128, 8
    $region65: #{libra_forward.1} parent=1 // pred_fallthru
      _
    // Predicated region
    $region66: #{libra_forward.1} parent=1 // pred_check
      _
    $region67: #{libra_forward.1} parent=1 // pred_check_branch
      %103 = sbr.rel (0) target = $region69
    $region68: #{libra_forward.1} parent=1 // pred_region
      %s105 = ssub.s32 16, 16
      %106 = vsyncadd [#allocation12], %s105
      %s108 = sshll.u32 [#allocation11], 4
      %s109 = int_to_ptr.vmem [resolvable:$true] %s108
      %111 = dma.hbm_to_vmem [thread:$0]  %s16, 16, %s109, [#allocation12]
    $region69: #{libra_forward.1} parent=1 // pred_fallthru
      _
    // Predicated region
    $region70: #{libra_forward.1} parent=1 // pred_check
      _
    $region71: #{libra_forward.1} parent=1 // pred_check_branch
      %113 = sbr.rel (0) target = $region73
    $region72: #{libra_forward.1} parent=1 // pred_region
      %114 = dma.done [#allocation4], 64
    $region73: #{libra_forward.1} parent=1 // pred_fallthru
      _
    // Predicated region
    $region74: #{libra_forward.1} parent=1 // pred_check
      _
    $region75: #{libra_forward.1} parent=1 // pred_check_branch
      %116 = sbr.rel (0) target = $region77
    $region76: #{libra_forward.1} parent=1 // pred_region
      %117 = dma.done [#allocation6], 1024
    $region77: #{libra_forward.1} parent=1 // pred_fallthru
      _
    // Predicated region
    $region78: #{libra_forward.1} parent=1 // pred_check
      _
    $region79: #{libra_forward.1} parent=1 // pred_check_branch
      %119 = sbr.rel (0) target = $region81
    $region80: #{libra_forward.1} parent=1 // pred_region
      %120 = dma.done [#allocation6], 16
    $region81: #{libra_forward.1} parent=1 // pred_fallthru
      _
    // Predicated region
    $region82: #{libra_forward.1} parent=1 // pred_check
      _
    $region83: #{libra_forward.1} parent=1 // pred_check_branch
      %122 = sbr.rel (0) target = $region85
    $region84: #{libra_forward.1} parent=1 // pred_region
      %123 = dma.done [#allocation9], 64
    $region85: #{libra_forward.1} parent=1 // pred_fallthru
      _
    // Predicated region
    $region86: #{libra_forward.1} parent=1 // pred_check
      _
    $region87: #{libra_forward.1} parent=1 // pred_check_branch
      %125 = sbr.rel (0) target = $region89
    $region88: #{libra_forward.1} parent=1 // pred_region
      %126 = dma.done [#allocation9], 1024
    $region89: #{libra_forward.1} parent=1 // pred_fallthru
      _
    // Predicated region
    $region90: #{libra_forward.1} parent=1 // pred_check
      _
    $region91: #{libra_forward.1} parent=1 // pred_check_branch
      %128 = sbr.rel (0) target = $region93
    $region92: #{libra_forward.1} parent=1 // pred_region
      %129 = dma.done [#allocation12], 16
    $region93: #{libra_forward.1} parent=1 // pred_fallthru
      _
    %v130 = vld [vmem:[%s0] sm:$0xff]
    %v131 = vld [vmem:[%s0 + $0x8] sm:$0xff]
    %v132 = vld [vmem:[%s1] sm:$0xf]
    %134 = vset.pattern.permute.xlu0 0
    %135 = vperm.xlu0 %134, %v130
    %v136 = vpop.permute.xlu0 %135
    %139 = vset.pattern.permute.xlu0 0
    %140 = vperm.xlu0 %139, %v131
    %v141 = vpop.permute.xlu0 %140
    %v144 = vlaneseq
    %v145 = vshrl.u32 %v144, 7
    %v146 = vsub.s32 0, %v145
    %v147 = vrot.slane %v132, %v146
    %v148 = vlaneseq
    %v149 = vshrl.u32 %v148, 7
    %v150 = vsub.s32 1, %v149
    %v151 = vrot.slane %v132, %v150
    %v152 = vlaneseq
    %v153 = vshrl.u32 %v152, 7
    %v154 = vsub.s32 2, %v153
    %v155 = vrot.slane %v132, %v154
    %v156 = vlaneseq
    %v157 = vshrl.u32 %v156, 7
    %v158 = vsub.s32 3, %v157
    %v159 = vrot.slane %v132, %v158
    %v164 = vmul.f32 %v136, %v147
    %v165 = vmul.f32 %v136, %v151
    %v166 = vmul.f32 %v136, %v155
    %v167 = vmul.f32 %v136, %v159
    %v168 = vmul.f32 %v141, %v147
    %v169 = vmul.f32 %v141, %v151
    %v170 = vmul.f32 %v141, %v155
    %v171 = vmul.f32 %v141, %v159
    %v172 = vld [vmem:[#allocation3] sm:$0xf]
    %v174 = vlaneseq
    %v175 = vshrl.u32 %v174, 7
    %v176 = vsub.s32 0, %v175
    %v177 = vrot.slane %v172, %v176
    %v178 = vlaneseq
    %v179 = vshrl.u32 %v178, 7
    %v180 = vsub.s32 1, %v179
    %v181 = vrot.slane %v172, %v180
    %v182 = vlaneseq
    %v183 = vshrl.u32 %v182, 7
    %v184 = vsub.s32 2, %v183
    %v185 = vrot.slane %v172, %v184
    %v186 = vlaneseq
    %v187 = vshrl.u32 %v186, 7
    %v188 = vsub.s32 3, %v187
    %v189 = vrot.slane %v172, %v188
    %v194 = vadd.f32 %v164, %v177
    %v195 = vadd.f32 %v165, %v181
    %v196 = vadd.f32 %v166, %v185
    %v197 = vadd.f32 %v167, %v189
    %v198 = vadd.f32 %v168, %v177
    %v199 = vadd.f32 %v169, %v181
    %v200 = vadd.f32 %v170, %v185
    %v201 = vadd.f32 %v171, %v189
    %v202 = vld [vmem:[%s2] sm:$0xff]
    %v203 = vld [vmem:[%s2 + $0x8] sm:$0xff]
    %v204 = vld [vmem:[%s2 + $0x10] sm:$0xff]
    %v205 = vld [vmem:[%s2 + $0x18] sm:$0xff]
    %v206 = vld [vmem:[%s2 + $0x20] sm:$0xff]
    %v207 = vld [vmem:[%s2 + $0x28] sm:$0xff]
    %v208 = vld [vmem:[%s2 + $0x30] sm:$0xff]
    %v209 = vld [vmem:[%s2 + $0x38] sm:$0xff]
    %v210 = vld [vmem:[%s2 + $0x40] sm:$0xff]
    %v211 = vld [vmem:[%s2 + $0x48] sm:$0xff]
    %v212 = vld [vmem:[%s2 + $0x50] sm:$0xff]
    %v213 = vld [vmem:[%s2 + $0x58] sm:$0xff]
    %v214 = vld [vmem:[%s2 + $0x60] sm:$0xff]
    %v215 = vld [vmem:[%s2 + $0x68] sm:$0xff]
    %v216 = vld [vmem:[%s2 + $0x70] sm:$0xff]
    %v217 = vld [vmem:[%s2 + $0x78] sm:$0xff]
    %v218 = vld [vmem:[%s2 + $0x80] sm:$0xff]
    %v219 = vld [vmem:[%s2 + $0x88] sm:$0xff]
    %v220 = vld [vmem:[%s2 + $0x90] sm:$0xff]
    %v221 = vld [vmem:[%s2 + $0x98] sm:$0xff]
    %v222 = vld [vmem:[%s2 + $0xa0] sm:$0xff]
    %v223 = vld [vmem:[%s2 + $0xa8] sm:$0xff]
    %v224 = vld [vmem:[%s2 + $0xb0] sm:$0xff]
    %v225 = vld [vmem:[%s2 + $0xb8] sm:$0xff]
    %v226 = vld [vmem:[%s2 + $0xc0] sm:$0xff]
    %v227 = vld [vmem:[%s2 + $0xc8] sm:$0xff]
    %v228 = vld [vmem:[%s2 + $0xd0] sm:$0xff]
    %v229 = vld [vmem:[%s2 + $0xd8] sm:$0xff]
    %v230 = vld [vmem:[%s2 + $0xe0] sm:$0xff]
    %v231 = vld [vmem:[%s2 + $0xe8] sm:$0xff]
    %v232 = vld [vmem:[%s2 + $0xf0] sm:$0xff]
    %v233 = vld [vmem:[%s2 + $0xf8] sm:$0xff]
    %v234 = vld [vmem:[%s2 + $0x100] sm:$0xff]
    %v235 = vld [vmem:[%s2 + $0x108] sm:$0xff]
    %v236 = vld [vmem:[%s2 + $0x110] sm:$0xff]
    %v237 = vld [vmem:[%s2 + $0x118] sm:$0xff]
    %v238 = vld [vmem:[%s2 + $0x120] sm:$0xff]
    %v239 = vld [vmem:[%s2 + $0x128] sm:$0xff]
    %v240 = vld [vmem:[%s2 + $0x130] sm:$0xff]
    %v241 = vld [vmem:[%s2 + $0x138] sm:$0xff]
    %v242 = vld [vmem:[%s2 + $0x140] sm:$0xff]
    %v243 = vld [vmem:[%s2 + $0x148] sm:$0xff]
    %v244 = vld [vmem:[%s2 + $0x150] sm:$0xff]
    %v245 = vld [vmem:[%s2 + $0x158] sm:$0xff]
    %v246 = vld [vmem:[%s2 + $0x160] sm:$0xff]
    %v247 = vld [vmem:[%s2 + $0x168] sm:$0xff]
    %v248 = vld [vmem:[%s2 + $0x170] sm:$0xff]
    %v249 = vld [vmem:[%s2 + $0x178] sm:$0xff]
    %v250 = vld [vmem:[%s2 + $0x180] sm:$0xff]
    %v251 = vld [vmem:[%s2 + $0x188] sm:$0xff]
    %v252 = vld [vmem:[%s2 + $0x190] sm:$0xff]
    %v253 = vld [vmem:[%s2 + $0x198] sm:$0xff]
    %v254 = vld [vmem:[%s2 + $0x1a0] sm:$0xff]
    %v255 = vld [vmem:[%s2 + $0x1a8] sm:$0xff]
    %v256 = vld [vmem:[%s2 + $0x1b0] sm:$0xff]
    %v257 = vld [vmem:[%s2 + $0x1b8] sm:$0xff]
    %v258 = vld [vmem:[%s2 + $0x1c0] sm:$0xff]
    %v259 = vld [vmem:[%s2 + $0x1c8] sm:$0xff]
    %v260 = vld [vmem:[%s2 + $0x1d0] sm:$0xff]
    %v261 = vld [vmem:[%s2 + $0x1d8] sm:$0xff]
    %v262 = vld [vmem:[%s2 + $0x1e0] sm:$0xff]
    %v263 = vld [vmem:[%s2 + $0x1e8] sm:$0xff]
    %v264 = vld [vmem:[%s2 + $0x1f0] sm:$0xff]
    %v265 = vld [vmem:[%s2 + $0x1f8] sm:$0xff]
    %v266 = vlaneseq
    %v267 = vand.u32 %v266, 127
    %vm268 = vcmp.lt.s32.totalorder %v267, 64
    %v269 = vsel %vm268, 1, 0
    %v270 = vcvt.s32.f32 %v269
    %v271 = vxor.u32 %v194, 2147483648
    %v272 = vmul.f32 %v271, 1.442695
    %v273 = vpow.pop %v272
    %v274 = vadd.f32 %v273, 1.0
    %v275 = vrcp.pop %v274
    %v276 = vmul.f32 1.0, %v275
    %v277 = vxor.u32 %v195, 2147483648
    %v278 = vmul.f32 %v277, 1.442695
    %v279 = vpow.pop %v278
    %v280 = vadd.f32 %v279, 1.0
    %v281 = vrcp.pop %v280
    %v282 = vmul.f32 1.0, %v281
    %v283 = vtanh.pop %v196
    %v284 = vxor.u32 %v197, 2147483648
    %v285 = vmul.f32 %v284, 1.442695
    %v286 = vpow.pop %v285
    %v287 = vadd.f32 %v286, 1.0
    %v288 = vrcp.pop %v287
    %v289 = vmul.f32 1.0, %v288
    %v290 = vmul.f32 %v282, 0.0
    %v291 = vmul.f32 %v276, %v283
    %v292 = vadd.f32 %v290, %v291
    %v293 = vtanh.pop %v292
    %v294 = vmul.f32 %v289, %v293
    %v295 = vmul.f32 %v292, %v270
    %v296 = vmul.f32 %v294, %v270
    %297 = vmatprep.subr.mxu0 %v263
    %298 = vmatpush1.msra.mxu0 %v262
    %299 = vmatprep.subr.mxu0 %v259
    %300 = vmatpush1.msra.mxu0 %v258
    %301 = vmatprep.subr.mxu0 %v255
    %302 = vmatpush1.msra.mxu0 %v254
    %303 = vmatprep.subr.mxu0 %v251
    %304 = vmatpush1.msra.mxu0 %v250
    %305 = vmatprep.subr.mxu0 %v247
    %306 = vmatpush1.msra.mxu0 %v246
    %307 = vmatprep.subr.mxu0 %v243
    %308 = vmatpush1.msra.mxu0 %v242
    %309 = vmatprep.subr.mxu0 %v239
    %310 = vmatpush1.msra.mxu0 %v238
    %311 = vmatprep.subr.mxu0 %v235
    %312 = vmatpush1.msra.mxu0 %v234
    %313 = vmatprep.subr.mxu0 %v231
    %314 = vmatpush1.msra.mxu0 %v230
    %315 = vmatprep.subr.mxu0 %v227
    %316 = vmatpush1.msra.mxu0 %v226
    %317 = vmatprep.subr.mxu0 %v223
    %318 = vmatpush1.msra.mxu0 %v222
    %319 = vmatprep.subr.mxu0 %v219
    %320 = vmatpush1.msra.mxu0 %v218
    %321 = vmatprep.subr.mxu0 %v215
    %322 = vmatpush1.msra.mxu0 %v214
    %323 = vmatprep.subr.mxu0 %v211
    %324 = vmatpush1.msra.mxu0 %v210
    %325 = vmatprep.subr.mxu0 %v207
    %326 = vmatpush1.msra.mxu0 %v206
    %327 = vmatprep.subr.mxu0 %v203
    %328 = vmatpush1.msra.mxu0 %v202
    %329 = vmatprep.subr.mxu0 0.0
    %330 = vmatpush2.msra.mxu0 0.0
    %331 = vmatprep.subr.mxu0 0.0
    %332 = vmatpush2.msra.mxu0 0.0
    %333 = vmatprep.subr.mxu0 0.0
    %334 = vmatpush2.msra.mxu0 0.0
    %335 = vmatprep.subr.mxu0 0.0
    %336 = vmatpush2.msra.mxu0 0.0
    %337 = vmatprep.subr.mxu0 0.0
    %338 = vmatpush2.msra.mxu0 0.0
    %339 = vmatprep.subr.mxu0 0.0
    %340 = vmatpush2.msra.mxu0 0.0
    %341 = vmatprep.subr.mxu0 0.0
    %342 = vmatpush2.msra.mxu0 0.0
    %343 = vmatprep.subr.mxu0 0.0
    %344 = vmatpush2.msra.mxu0 0.0
    %345 = vmatprep.subr.mxu0 0.0
    %346 = vmatpush2.msra.mxu0 0.0
    %347 = vmatprep.subr.mxu0 0.0
    %348 = vmatpush2.msra.mxu0 0.0
    %349 = vmatprep.subr.mxu0 0.0
    %350 = vmatpush2.msra.mxu0 0.0
    %351 = vmatprep.subr.mxu0 0.0
    %352 = vmatpush2.msra.mxu0 0.0
    %353 = vmatprep.subr.mxu0 0.0
    %354 = vmatpush2.msra.mxu0 0.0
    %355 = vmatprep.subr.mxu0 0.0
    %356 = vmatpush2.msra.mxu0 0.0
    %357 = vmatprep.subr.mxu0 0.0
    %358 = vmatpush2.msra.mxu0 0.0
    %359 = vmatprep.subr.mxu0 0.0
    %360 = vmatpush2.msra.mxu0 0.0
    %361 = vmatprep.mubr.f32.mxu0 0.0
    %362 = vmatmul.mubr.f32.gmra.mxu0 %v296
    %v363 = vpop.f32.mrf.mxu0
    %v364 = vadd.f32 0.0, %v363
    %v365 = vpop.f32.mrf.mxu0
    %v366 = vadd.f32 0.0, %v365
    %367 = vdwg.mxu0
    %368 = vmatprep.subr.mxu0 %v265
    %369 = vmatpush1.msra.mxu0 %v264
    %370 = vmatprep.subr.mxu0 %v261
    %371 = vmatpush1.msra.mxu0 %v260
    %372 = vmatprep.subr.mxu0 %v257
    %373 = vmatpush1.msra.mxu0 %v256
    %374 = vmatprep.subr.mxu0 %v253
    %375 = vmatpush1.msra.mxu0 %v252
    %376 = vmatprep.subr.mxu0 %v249
    %377 = vmatpush1.msra.mxu0 %v248
    %378 = vmatprep.subr.mxu0 %v245
    %379 = vmatpush1.msra.mxu0 %v244
    %380 = vmatprep.subr.mxu0 %v241
    %381 = vmatpush1.msra.mxu0 %v240
    %382 = vmatprep.subr.mxu0 %v237
    %383 = vmatpush1.msra.mxu0 %v236
    %384 = vmatprep.subr.mxu0 %v233
    %385 = vmatpush1.msra.mxu0 %v232
    %386 = vmatprep.subr.mxu0 %v229
    %387 = vmatpush1.msra.mxu0 %v228
    %388 = vmatprep.subr.mxu0 %v225
    %389 = vmatpush1.msra.mxu0 %v224
    %390 = vmatprep.subr.mxu0 %v221
    %391 = vmatpush1.msra.mxu0 %v220
    %392 = vmatprep.subr.mxu0 %v217
    %393 = vmatpush1.msra.mxu0 %v216
    %394 = vmatprep.subr.mxu0 %v213
    %395 = vmatpush1.msra.mxu0 %v212
    %396 = vmatprep.subr.mxu0 %v209
    %397 = vmatpush1.msra.mxu0 %v208
    %398 = vmatprep.subr.mxu0 %v205
    %399 = vmatpush1.msra.mxu0 %v204
    %400 = vmatprep.subr.mxu0 0.0
    %401 = vmatpush2.msra.mxu0 0.0
    %402 = vmatprep.subr.mxu0 0.0
    %403 = vmatpush2.msra.mxu0 0.0
    %404 = vmatprep.subr.mxu0 0.0
    %405 = vmatpush2.msra.mxu0 0.0
    %406 = vmatprep.subr.mxu0 0.0
    %407 = vmatpush2.msra.mxu0 0.0
    %408 = vmatprep.subr.mxu0 0.0
    %409 = vmatpush2.msra.mxu0 0.0
    %410 = vmatprep.subr.mxu0 0.0
    %411 = vmatpush2.msra.mxu0 0.0
    %412 = vmatprep.subr.mxu0 0.0
    %413 = vmatpush2.msra.mxu0 0.0
    %414 = vmatprep.subr.mxu0 0.0
    %415 = vmatpush2.msra.mxu0 0.0
    %416 = vmatprep.subr.mxu0 0.0
    %417 = vmatpush2.msra.mxu0 0.0
    %418 = vmatprep.subr.mxu0 0.0
    %419 = vmatpush2.msra.mxu0 0.0
    %420 = vmatprep.subr.mxu0 0.0
    %421 = vmatpush2.msra.mxu0 0.0
    %422 = vmatprep.subr.mxu0 0.0
    %423 = vmatpush2.msra.mxu0 0.0
    %424 = vmatprep.subr.mxu0 0.0
    %425 = vmatpush2.msra.mxu0 0.0
    %426 = vmatprep.subr.mxu0 0.0
    %427 = vmatpush2.msra.mxu0 0.0
    %428 = vmatprep.subr.mxu0 0.0
    %429 = vmatpush2.msra.mxu0 0.0
    %430 = vmatprep.subr.mxu0 0.0
    %431 = vmatpush2.msra.mxu0 0.0
    %432 = vmatprep.mubr.f32.mxu0 0.0
    %433 = vmatmul.mubr.f32.gmra.mxu0 %v296
    %v434 = vpop.f32.mrf.mxu0
    %v435 = vadd.f32 0.0, %v434
    %v436 = vpop.f32.mrf.mxu0
    %v437 = vadd.f32 0.0, %v436
    %438 = vdwg.mxu0
    %v443 = vrot.slane %v364, 6
    %v444 = vrot.slane %v366, 6
    %v445 = vrot.slane %v435, 6
    %v446 = vrot.slane %v437, 6
    %v451 = vadd.f32 %v194, %v443
    %v452 = vadd.f32 %v195, %v444
    %v453 = vadd.f32 %v196, %v445
    %v454 = vadd.f32 %v197, %v446
    %v455 = vxor.u32 %v451, 2147483648
    %v456 = vmul.f32 %v455, 1.442695
    %v457 = vpow.pop %v456
    %v458 = vadd.f32 %v457, 1.0
    %v459 = vrcp.pop %v458
    %v460 = vmul.f32 1.0, %v459
    %v461 = vxor.u32 %v452, 2147483648
    %v462 = vmul.f32 %v461, 1.442695
    %v463 = vpow.pop %v462
    %v464 = vadd.f32 %v463, 1.0
    %v465 = vrcp.pop %v464
    %v466 = vmul.f32 1.0, %v465
    %v467 = vtanh.pop %v453
    %v468 = vxor.u32 %v454, 2147483648
    %v469 = vmul.f32 %v468, 1.442695
    %v470 = vpow.pop %v469
    %v471 = vadd.f32 %v470, 1.0
    %v472 = vrcp.pop %v471
    %v473 = vmul.f32 1.0, %v472
    %v475 = vrot.slane %v295, 6
    %v477 = vmul.f32 %v466, %v475
    %v478 = vmul.f32 %v460, %v467
    %v479 = vadd.f32 %v477, %v478
    %v480 = vtanh.pop %v479
    %v481 = vmul.f32 %v473, %v480
    %482 = vst [vmem:[#allocation2 - $0x2] sm:$0x4] %v481
    %483 = vst [vmem:[#allocation2 + $0x5] sm:$0x8] %v481
    %v485 = vrot.slane %v481, 2
    %487 = vmatprep.subr.mxu0 %v263
    %488 = vmatpush1.msra.mxu0 %v262
    %489 = vmatprep.subr.mxu0 %v259
    %490 = vmatpush1.msra.mxu0 %v258
    %491 = vmatprep.subr.mxu0 %v255
    %492 = vmatpush1.msra.mxu0 %v254
    %493 = vmatprep.subr.mxu0 %v251
    %494 = vmatpush1.msra.mxu0 %v250
    %495 = vmatprep.subr.mxu0 %v247
    %496 = vmatpush1.msra.mxu0 %v246
    %497 = vmatprep.subr.mxu0 %v243
    %498 = vmatpush1.msra.mxu0 %v242
    %499 = vmatprep.subr.mxu0 %v239
    %500 = vmatpush1.msra.mxu0 %v238
    %501 = vmatprep.subr.mxu0 %v235
    %502 = vmatpush1.msra.mxu0 %v234
    %503 = vmatprep.subr.mxu0 %v231
    %504 = vmatpush1.msra.mxu0 %v230
    %505 = vmatprep.subr.mxu0 %v227
    %506 = vmatpush1.msra.mxu0 %v226
    %507 = vmatprep.subr.mxu0 %v223
    %508 = vmatpush1.msra.mxu0 %v222
    %509 = vmatprep.subr.mxu0 %v219
    %510 = vmatpush1.msra.mxu0 %v218
    %511 = vmatprep.subr.mxu0 %v215
    %512 = vmatpush1.msra.mxu0 %v214
    %513 = vmatprep.subr.mxu0 %v211
    %514 = vmatpush1.msra.mxu0 %v210
    %515 = vmatprep.subr.mxu0 %v207
    %516 = vmatpush1.msra.mxu0 %v206
    %517 = vmatprep.subr.mxu0 %v203
    %518 = vmatpush1.msra.mxu0 %v202
    %519 = vmatprep.subr.mxu0 0.0
    %520 = vmatpush2.msra.mxu0 0.0
    %521 = vmatprep.subr.mxu0 0.0
    %522 = vmatpush2.msra.mxu0 0.0
    %523 = vmatprep.subr.mxu0 0.0
    %524 = vmatpush2.msra.mxu0 0.0
    %525 = vmatprep.subr.mxu0 0.0
    %526 = vmatpush2.msra.mxu0 0.0
    %527 = vmatprep.subr.mxu0 0.0
    %528 = vmatpush2.msra.mxu0 0.0
    %529 = vmatprep.subr.mxu0 0.0
    %530 = vmatpush2.msra.mxu0 0.0
    %531 = vmatprep.subr.mxu0 0.0
    %532 = vmatpush2.msra.mxu0 0.0
    %533 = vmatprep.subr.mxu0 0.0
    %534 = vmatpush2.msra.mxu0 0.0
    %535 = vmatprep.subr.mxu0 0.0
    %536 = vmatpush2.msra.mxu0 0.0
    %537 = vmatprep.subr.mxu0 0.0
    %538 = vmatpush2.msra.mxu0 0.0
    %539 = vmatprep.subr.mxu0 0.0
    %540 = vmatpush2.msra.mxu0 0.0
    %541 = vmatprep.subr.mxu0 0.0
    %542 = vmatpush2.msra.mxu0 0.0
    %543 = vmatprep.subr.mxu0 0.0
    %544 = vmatpush2.msra.mxu0 0.0
    %545 = vmatprep.subr.mxu0 0.0
    %546 = vmatpush2.msra.mxu0 0.0
    %547 = vmatprep.subr.mxu0 0.0
    %548 = vmatpush2.msra.mxu0 0.0
    %549 = vmatprep.subr.mxu0 0.0
    %550 = vmatpush2.msra.mxu0 0.0
    %551 = vmatprep.mubr.f32.mxu0 0.0
    %552 = vmatmul.mubr.f32.gmra.mxu0 %v485
    %v553 = vpop.f32.mrf.mxu0
    %v554 = vadd.f32 0.0, %v553
    %v555 = vpop.f32.mrf.mxu0
    %v556 = vadd.f32 0.0, %v555
    %557 = vdwg.mxu0
    %558 = vmatprep.subr.mxu0 %v265
    %559 = vmatpush1.msra.mxu0 %v264
    %560 = vmatprep.subr.mxu0 %v261
    %561 = vmatpush1.msra.mxu0 %v260
    %562 = vmatprep.subr.mxu0 %v257
    %563 = vmatpush1.msra.mxu0 %v256
    %564 = vmatprep.subr.mxu0 %v253
    %565 = vmatpush1.msra.mxu0 %v252
    %566 = vmatprep.subr.mxu0 %v249
    %567 = vmatpush1.msra.mxu0 %v248
    %568 = vmatprep.subr.mxu0 %v245
    %569 = vmatpush1.msra.mxu0 %v244
    %570 = vmatprep.subr.mxu0 %v241
    %571 = vmatpush1.msra.mxu0 %v240
    %572 = vmatprep.subr.mxu0 %v237
    %573 = vmatpush1.msra.mxu0 %v236
    %574 = vmatprep.subr.mxu0 %v233
    %575 = vmatpush1.msra.mxu0 %v232
    %576 = vmatprep.subr.mxu0 %v229
    %577 = vmatpush1.msra.mxu0 %v228
    %578 = vmatprep.subr.mxu0 %v225
    %579 = vmatpush1.msra.mxu0 %v224
    %580 = vmatprep.subr.mxu0 %v221
    %581 = vmatpush1.msra.mxu0 %v220
    %582 = vmatprep.subr.mxu0 %v217
    %583 = vmatpush1.msra.mxu0 %v216
    %584 = vmatprep.subr.mxu0 %v213
    %585 = vmatpush1.msra.mxu0 %v212
    %586 = vmatprep.subr.mxu0 %v209
    %587 = vmatpush1.msra.mxu0 %v208
    %588 = vmatprep.subr.mxu0 %v205
    %589 = vmatpush1.msra.mxu0 %v204
    %590 = vmatprep.subr.mxu0 0.0
    %591 = vmatpush2.msra.mxu0 0.0
    %592 = vmatprep.subr.mxu0 0.0
    %593 = vmatpush2.msra.mxu0 0.0
    %594 = vmatprep.subr.mxu0 0.0
    %595 = vmatpush2.msra.mxu0 0.0
    %596 = vmatprep.subr.mxu0 0.0
    %597 = vmatpush2.msra.mxu0 0.0
    %598 = vmatprep.subr.mxu0 0.0
    %599 = vmatpush2.msra.mxu0 0.0
    %600 = vmatprep.subr.mxu0 0.0
    %601 = vmatpush2.msra.mxu0 0.0
    %602 = vmatprep.subr.mxu0 0.0
    %603 = vmatpush2.msra.mxu0 0.0
    %604 = vmatprep.subr.mxu0 0.0
    %605 = vmatpush2.msra.mxu0 0.0
    %606 = vmatprep.subr.mxu0 0.0
    %607 = vmatpush2.msra.mxu0 0.0
    %608 = vmatprep.subr.mxu0 0.0
    %609 = vmatpush2.msra.mxu0 0.0
    %610 = vmatprep.subr.mxu0 0.0
    %611 = vmatpush2.msra.mxu0 0.0
    %612 = vmatprep.subr.mxu0 0.0
    %613 = vmatpush2.msra.mxu0 0.0
    %614 = vmatprep.subr.mxu0 0.0
    %615 = vmatpush2.msra.mxu0 0.0
    %616 = vmatprep.subr.mxu0 0.0
    %617 = vmatpush2.msra.mxu0 0.0
    %618 = vmatprep.subr.mxu0 0.0
    %619 = vmatpush2.msra.mxu0 0.0
    %620 = vmatprep.subr.mxu0 0.0
    %621 = vmatpush2.msra.mxu0 0.0
    %622 = vmatprep.mubr.f32.mxu0 0.0
    %623 = vmatmul.mubr.f32.gmra.mxu0 %v485
    %v624 = vpop.f32.mrf.mxu0
    %v625 = vadd.f32 0.0, %v624
    %v626 = vpop.f32.mrf.mxu0
    %v627 = vadd.f32 0.0, %v626
    %628 = vdwg.mxu0
    %v633 = vrot.slane %v554, 4
    %v634 = vrot.slane %v556, 4
    %v635 = vrot.slane %v625, 4
    %v636 = vrot.slane %v627, 4
    %v641 = vadd.f32 %v194, %v633
    %v642 = vadd.f32 %v195, %v634
    %v643 = vadd.f32 %v196, %v635
    %v644 = vadd.f32 %v197, %v636
    %v645 = vxor.u32 %v641, 2147483648
    %v646 = vmul.f32 %v645, 1.442695
    %v647 = vpow.pop %v646
    %v648 = vadd.f32 %v647, 1.0
    %v649 = vrcp.pop %v648
    %v650 = vmul.f32 1.0, %v649
    %v651 = vxor.u32 %v642, 2147483648
    %v652 = vmul.f32 %v651, 1.442695
    %v653 = vpow.pop %v652
    %v654 = vadd.f32 %v653, 1.0
    %v655 = vrcp.pop %v654
    %v656 = vmul.f32 1.0, %v655
    %v657 = vtanh.pop %v643
    %v658 = vxor.u32 %v644, 2147483648
    %v659 = vmul.f32 %v658, 1.442695
    %v660 = vpow.pop %v659
    %v661 = vadd.f32 %v660, 1.0
    %v662 = vrcp.pop %v661
    %v663 = vmul.f32 1.0, %v662
    %v665 = vrot.slane %v479, 6
    %v667 = vmul.f32 %v656, %v665
    %v668 = vmul.f32 %v650, %v657
    %v669 = vadd.f32 %v667, %v668
    %v670 = vtanh.pop %v669
    %v671 = vmul.f32 %v663, %v670
    %672 = vst [vmem:[#allocation2 - $0x3] sm:$0x10] %v671
    %673 = vst [vmem:[#allocation2 + $0x4] sm:$0x20] %v671
    %v675 = vrot.slane %v671, 4
    %677 = vmatprep.subr.mxu0 %v263
    %678 = vmatpush1.msra.mxu0 %v262
    %679 = vmatprep.subr.mxu0 %v259
    %680 = vmatpush1.msra.mxu0 %v258
    %681 = vmatprep.subr.mxu0 %v255
    %682 = vmatpush1.msra.mxu0 %v254
    %683 = vmatprep.subr.mxu0 %v251
    %684 = vmatpush1.msra.mxu0 %v250
    %685 = vmatprep.subr.mxu0 %v247
    %686 = vmatpush1.msra.mxu0 %v246
    %687 = vmatprep.subr.mxu0 %v243
    %688 = vmatpush1.msra.mxu0 %v242
    %689 = vmatprep.subr.mxu0 %v239
    %690 = vmatpush1.msra.mxu0 %v238
    %691 = vmatprep.subr.mxu0 %v235
    %692 = vmatpush1.msra.mxu0 %v234
    %693 = vmatprep.subr.mxu0 %v231
    %694 = vmatpush1.msra.mxu0 %v230
    %695 = vmatprep.subr.mxu0 %v227
    %696 = vmatpush1.msra.mxu0 %v226
    %697 = vmatprep.subr.mxu0 %v223
    %698 = vmatpush1.msra.mxu0 %v222
    %699 = vmatprep.subr.mxu0 %v219
    %700 = vmatpush1.msra.mxu0 %v218
    %701 = vmatprep.subr.mxu0 %v215
    %702 = vmatpush1.msra.mxu0 %v214
    %703 = vmatprep.subr.mxu0 %v211
    %704 = vmatpush1.msra.mxu0 %v210
    %705 = vmatprep.subr.mxu0 %v207
    %706 = vmatpush1.msra.mxu0 %v206
    %707 = vmatprep.subr.mxu0 %v203
    %708 = vmatpush1.msra.mxu0 %v202
    %709 = vmatprep.subr.mxu0 0.0
    %710 = vmatpush2.msra.mxu0 0.0
    %711 = vmatprep.subr.mxu0 0.0
    %712 = vmatpush2.msra.mxu0 0.0
    %713 = vmatprep.subr.mxu0 0.0
    %714 = vmatpush2.msra.mxu0 0.0
    %715 = vmatprep.subr.mxu0 0.0
    %716 = vmatpush2.msra.mxu0 0.0
    %717 = vmatprep.subr.mxu0 0.0
    %718 = vmatpush2.msra.mxu0 0.0
    %719 = vmatprep.subr.mxu0 0.0
    %720 = vmatpush2.msra.mxu0 0.0
    %721 = vmatprep.subr.mxu0 0.0
    %722 = vmatpush2.msra.mxu0 0.0
    %723 = vmatprep.subr.mxu0 0.0
    %724 = vmatpush2.msra.mxu0 0.0
    %725 = vmatprep.subr.mxu0 0.0
    %726 = vmatpush2.msra.mxu0 0.0
    %727 = vmatprep.subr.mxu0 0.0
    %728 = vmatpush2.msra.mxu0 0.0
    %729 = vmatprep.subr.mxu0 0.0
    %730 = vmatpush2.msra.mxu0 0.0
    %731 = vmatprep.subr.mxu0 0.0
    %732 = vmatpush2.msra.mxu0 0.0
    %733 = vmatprep.subr.mxu0 0.0
    %734 = vmatpush2.msra.mxu0 0.0
    %735 = vmatprep.subr.mxu0 0.0
    %736 = vmatpush2.msra.mxu0 0.0
    %737 = vmatprep.subr.mxu0 0.0
    %738 = vmatpush2.msra.mxu0 0.0
    %739 = vmatprep.subr.mxu0 0.0
    %740 = vmatpush2.msra.mxu0 0.0
    %741 = vmatprep.mubr.f32.mxu0 0.0
    %742 = vmatmul.mubr.f32.gmra.mxu0 %v675
    %v743 = vpop.f32.mrf.mxu0
    %v744 = vadd.f32 0.0, %v743
    %v745 = vpop.f32.mrf.mxu0
    %v746 = vadd.f32 0.0, %v745
    %747 = vdwg.mxu0
    %748 = vmatprep.subr.mxu0 %v265
    %749 = vmatpush1.msra.mxu0 %v264
    %750 = vmatprep.subr.mxu0 %v261
    %751 = vmatpush1.msra.mxu0 %v260
    %752 = vmatprep.subr.mxu0 %v257
    %753 = vmatpush1.msra.mxu0 %v256
    %754 = vmatprep.subr.mxu0 %v253
    %755 = vmatpush1.msra.mxu0 %v252
    %756 = vmatprep.subr.mxu0 %v249
    %757 = vmatpush1.msra.mxu0 %v248
    %758 = vmatprep.subr.mxu0 %v245
    %759 = vmatpush1.msra.mxu0 %v244
    %760 = vmatprep.subr.mxu0 %v241
    %761 = vmatpush1.msra.mxu0 %v240
    %762 = vmatprep.subr.mxu0 %v237
    %763 = vmatpush1.msra.mxu0 %v236
    %764 = vmatprep.subr.mxu0 %v233
    %765 = vmatpush1.msra.mxu0 %v232
    %766 = vmatprep.subr.mxu0 %v229
    %767 = vmatpush1.msra.mxu0 %v228
    %768 = vmatprep.subr.mxu0 %v225
    %769 = vmatpush1.msra.mxu0 %v224
    %770 = vmatprep.subr.mxu0 %v221
    %771 = vmatpush1.msra.mxu0 %v220
    %772 = vmatprep.subr.mxu0 %v217
    %773 = vmatpush1.msra.mxu0 %v216
    %774 = vmatprep.subr.mxu0 %v213
    %775 = vmatpush1.msra.mxu0 %v212
    %776 = vmatprep.subr.mxu0 %v209
    %777 = vmatpush1.msra.mxu0 %v208
    %778 = vmatprep.subr.mxu0 %v205
    %779 = vmatpush1.msra.mxu0 %v204
    %780 = vmatprep.subr.mxu0 0.0
    %781 = vmatpush2.msra.mxu0 0.0
    %782 = vmatprep.subr.mxu0 0.0
    %783 = vmatpush2.msra.mxu0 0.0
    %784 = vmatprep.subr.mxu0 0.0
    %785 = vmatpush2.msra.mxu0 0.0
    %786 = vmatprep.subr.mxu0 0.0
    %787 = vmatpush2.msra.mxu0 0.0
    %788 = vmatprep.subr.mxu0 0.0
    %789 = vmatpush2.msra.mxu0 0.0
    %790 = vmatprep.subr.mxu0 0.0
    %791 = vmatpush2.msra.mxu0 0.0
    %792 = vmatprep.subr.mxu0 0.0
    %793 = vmatpush2.msra.mxu0 0.0
    %794 = vmatprep.subr.mxu0 0.0
    %795 = vmatpush2.msra.mxu0 0.0
    %796 = vmatprep.subr.mxu0 0.0
    %797 = vmatpush2.msra.mxu0 0.0
    %798 = vmatprep.subr.mxu0 0.0
    %799 = vmatpush2.msra.mxu0 0.0
    %800 = vmatprep.subr.mxu0 0.0
    %801 = vmatpush2.msra.mxu0 0.0
    %802 = vmatprep.subr.mxu0 0.0
    %803 = vmatpush2.msra.mxu0 0.0
    %804 = vmatprep.subr.mxu0 0.0
    %805 = vmatpush2.msra.mxu0 0.0
    %806 = vmatprep.subr.mxu0 0.0
    %807 = vmatpush2.msra.mxu0 0.0
    %808 = vmatprep.subr.mxu0 0.0
    %809 = vmatpush2.msra.mxu0 0.0
    %810 = vmatprep.subr.mxu0 0.0
    %811 = vmatpush2.msra.mxu0 0.0
    %812 = vmatprep.mubr.f32.mxu0 0.0
    %813 = vmatmul.mubr.f32.gmra.mxu0 %v675
    %v814 = vpop.f32.mrf.mxu0
    %v815 = vadd.f32 0.0, %v814
    %v816 = vpop.f32.mrf.mxu0
    %v817 = vadd.f32 0.0, %v816
    %818 = vdwg.mxu0
    %v823 = vrot.slane %v744, 2
    %v824 = vrot.slane %v746, 2
    %v825 = vrot.slane %v815, 2
    %v826 = vrot.slane %v817, 2
    %v831 = vadd.f32 %v194, %v823
    %v832 = vadd.f32 %v195, %v824
    %v833 = vadd.f32 %v196, %v825
    %v834 = vadd.f32 %v197, %v826
    %v835 = vxor.u32 %v831, 2147483648
    %v836 = vmul.f32 %v835, 1.442695
    %v837 = vpow.pop %v836
    %v838 = vadd.f32 %v837, 1.0
    %v839 = vrcp.pop %v838
    %v840 = vmul.f32 1.0, %v839
    %v841 = vxor.u32 %v832, 2147483648
    %v842 = vmul.f32 %v841, 1.442695
    %v843 = vpow.pop %v842
    %v844 = vadd.f32 %v843, 1.0
    %v845 = vrcp.pop %v844
    %v846 = vmul.f32 1.0, %v845
    %v847 = vtanh.pop %v833
    %v848 = vxor.u32 %v834, 2147483648
    %v849 = vmul.f32 %v848, 1.442695
    %v850 = vpow.pop %v849
    %v851 = vadd.f32 %v850, 1.0
    %v852 = vrcp.pop %v851
    %v853 = vmul.f32 1.0, %v852
    %v855 = vrot.slane %v669, 6
    %v857 = vmul.f32 %v846, %v855
    %v858 = vmul.f32 %v840, %v847
    %v859 = vadd.f32 %v857, %v858
    %v860 = vtanh.pop %v859
    %v861 = vmul.f32 %v853, %v860
    %862 = vst [vmem:[#allocation2 - $0x4] sm:$0x40] %v861
    %863 = vst [vmem:[#allocation2 + $0x3] sm:$0x80] %v861
    %v865 = vrot.slane %v861, 6
    %867 = vmatprep.subr.mxu0 %v263
    %868 = vmatpush1.msra.mxu0 %v262
    %869 = vmatprep.subr.mxu0 %v259
    %870 = vmatpush1.msra.mxu0 %v258
    %871 = vmatprep.subr.mxu0 %v255
    %872 = vmatpush1.msra.mxu0 %v254
    %873 = vmatprep.subr.mxu0 %v251
    %874 = vmatpush1.msra.mxu0 %v250
    %875 = vmatprep.subr.mxu0 %v247
    %876 = vmatpush1.msra.mxu0 %v246
    %877 = vmatprep.subr.mxu0 %v243
    %878 = vmatpush1.msra.mxu0 %v242
    %879 = vmatprep.subr.mxu0 %v239
    %880 = vmatpush1.msra.mxu0 %v238
    %881 = vmatprep.subr.mxu0 %v235
    %882 = vmatpush1.msra.mxu0 %v234
    %883 = vmatprep.subr.mxu0 %v231
    %884 = vmatpush1.msra.mxu0 %v230
    %885 = vmatprep.subr.mxu0 %v227
    %886 = vmatpush1.msra.mxu0 %v226
    %887 = vmatprep.subr.mxu0 %v223
    %888 = vmatpush1.msra.mxu0 %v222
    %889 = vmatprep.subr.mxu0 %v219
    %890 = vmatpush1.msra.mxu0 %v218
    %891 = vmatprep.subr.mxu0 %v215
    %892 = vmatpush1.msra.mxu0 %v214
    %893 = vmatprep.subr.mxu0 %v211
    %894 = vmatpush1.msra.mxu0 %v210
    %895 = vmatprep.subr.mxu0 %v207
    %896 = vmatpush1.msra.mxu0 %v206
    %897 = vmatprep.subr.mxu0 %v203
    %898 = vmatpush1.msra.mxu0 %v202
    %899 = vmatprep.subr.mxu0 0.0
    %900 = vmatpush2.msra.mxu0 0.0
    %901 = vmatprep.subr.mxu0 0.0
    %902 = vmatpush2.msra.mxu0 0.0
    %903 = vmatprep.subr.mxu0 0.0
    %904 = vmatpush2.msra.mxu0 0.0
    %905 = vmatprep.subr.mxu0 0.0
    %906 = vmatpush2.msra.mxu0 0.0
    %907 = vmatprep.subr.mxu0 0.0
    %908 = vmatpush2.msra.mxu0 0.0
    %909 = vmatprep.subr.mxu0 0.0
    %910 = vmatpush2.msra.mxu0 0.0
    %911 = vmatprep.subr.mxu0 0.0
    %912 = vmatpush2.msra.mxu0 0.0
    %913 = vmatprep.subr.mxu0 0.0
    %914 = vmatpush2.msra.mxu0 0.0
    %915 = vmatprep.subr.mxu0 0.0
    %916 = vmatpush2.msra.mxu0 0.0
    %917 = vmatprep.subr.mxu0 0.0
    %918 = vmatpush2.msra.mxu0 0.0
    %919 = vmatprep.subr.mxu0 0.0
    %920 = vmatpush2.msra.mxu0 0.0
    %921 = vmatprep.subr.mxu0 0.0
    %922 = vmatpush2.msra.mxu0 0.0
    %923 = vmatprep.subr.mxu0 0.0
    %924 = vmatpush2.msra.mxu0 0.0
    %925 = vmatprep.subr.mxu0 0.0
    %926 = vmatpush2.msra.mxu0 0.0
    %927 = vmatprep.subr.mxu0 0.0
    %928 = vmatpush2.msra.mxu0 0.0
    %929 = vmatprep.subr.mxu0 0.0
    %930 = vmatpush2.msra.mxu0 0.0
    %931 = vmatprep.mubr.f32.mxu0 0.0
    %932 = vmatmul.mubr.f32.gmra.mxu0 %v865
    %v933 = vpop.f32.mrf.mxu0
    %v934 = vadd.f32 0.0, %v933
    %v935 = vpop.f32.mrf.mxu0
    %v936 = vadd.f32 0.0, %v935
    %937 = vdwg.mxu0
    %938 = vmatprep.subr.mxu0 %v265
    %939 = vmatpush1.msra.mxu0 %v264
    %940 = vmatprep.subr.mxu0 %v261
    %941 = vmatpush1.msra.mxu0 %v260
    %942 = vmatprep.subr.mxu0 %v257
    %943 = vmatpush1.msra.mxu0 %v256
    %944 = vmatprep.subr.mxu0 %v253
    %945 = vmatpush1.msra.mxu0 %v252
    %946 = vmatprep.subr.mxu0 %v249
    %947 = vmatpush1.msra.mxu0 %v248
    %948 = vmatprep.subr.mxu0 %v245
    %949 = vmatpush1.msra.mxu0 %v244
    %950 = vmatprep.subr.mxu0 %v241
    %951 = vmatpush1.msra.mxu0 %v240
    %952 = vmatprep.subr.mxu0 %v237
    %953 = vmatpush1.msra.mxu0 %v236
    %954 = vmatprep.subr.mxu0 %v233
    %955 = vmatpush1.msra.mxu0 %v232
    %956 = vmatprep.subr.mxu0 %v229
    %957 = vmatpush1.msra.mxu0 %v228
    %958 = vmatprep.subr.mxu0 %v225
    %959 = vmatpush1.msra.mxu0 %v224
    %960 = vmatprep.subr.mxu0 %v221
    %961 = vmatpush1.msra.mxu0 %v220
    %962 = vmatprep.subr.mxu0 %v217
    %963 = vmatpush1.msra.mxu0 %v216
    %964 = vmatprep.subr.mxu0 %v213
    %965 = vmatpush1.msra.mxu0 %v212
    %966 = vmatprep.subr.mxu0 %v209
    %967 = vmatpush1.msra.mxu0 %v208
    %968 = vmatprep.subr.mxu0 %v205
    %969 = vmatpush1.msra.mxu0 %v204
    %970 = vmatprep.subr.mxu0 0.0
    %971 = vmatpush2.msra.mxu0 0.0
    %972 = vmatprep.subr.mxu0 0.0
    %973 = vmatpush2.msra.mxu0 0.0
    %974 = vmatprep.subr.mxu0 0.0
    %975 = vmatpush2.msra.mxu0 0.0
    %976 = vmatprep.subr.mxu0 0.0
    %977 = vmatpush2.msra.mxu0 0.0
    %978 = vmatprep.subr.mxu0 0.0
    %979 = vmatpush2.msra.mxu0 0.0
    %980 = vmatprep.subr.mxu0 0.0
    %981 = vmatpush2.msra.mxu0 0.0
    %982 = vmatprep.subr.mxu0 0.0
    %983 = vmatpush2.msra.mxu0 0.0
    %984 = vmatprep.subr.mxu0 0.0
    %985 = vmatpush2.msra.mxu0 0.0
    %986 = vmatprep.subr.mxu0 0.0
    %987 = vmatpush2.msra.mxu0 0.0
    %988 = vmatprep.subr.mxu0 0.0
    %989 = vmatpush2.msra.mxu0 0.0
    %990 = vmatprep.subr.mxu0 0.0
    %991 = vmatpush2.msra.mxu0 0.0
    %992 = vmatprep.subr.mxu0 0.0
    %993 = vmatpush2.msra.mxu0 0.0
    %994 = vmatprep.subr.mxu0 0.0
    %995 = vmatpush2.msra.mxu0 0.0
    %996 = vmatprep.subr.mxu0 0.0
    %997 = vmatpush2.msra.mxu0 0.0
    %998 = vmatprep.subr.mxu0 0.0
    %999 = vmatpush2.msra.mxu0 0.0
    %1000 = vmatprep.subr.mxu0 0.0
    %1001 = vmatpush2.msra.mxu0 0.0
    %1002 = vmatprep.mubr.f32.mxu0 0.0
    %1003 = vmatmul.mubr.f32.gmra.mxu0 %v865
    %v1004 = vpop.f32.mrf.mxu0
    %v1005 = vadd.f32 0.0, %v1004
    %v1006 = vpop.f32.mrf.mxu0
    %v1007 = vadd.f32 0.0, %v1006
    %1008 = vdwg.mxu0
    %v1009 = vadd.f32 %v198, %v934
    %v1010 = vadd.f32 %v199, %v936
    %v1011 = vadd.f32 %v200, %v1005
    %v1012 = vadd.f32 %v201, %v1007
    %v1013 = vxor.u32 %v1009, 2147483648
    %v1014 = vmul.f32 %v1013, 1.442695
    %v1015 = vpow.pop %v1014
    %v1016 = vadd.f32 %v1015, 1.0
    %v1017 = vrcp.pop %v1016
    %v1018 = vmul.f32 1.0, %v1017
    %v1019 = vxor.u32 %v1010, 2147483648
    %v1020 = vmul.f32 %v1019, 1.442695
    %v1021 = vpow.pop %v1020
    %v1022 = vadd.f32 %v1021, 1.0
    %v1023 = vrcp.pop %v1022
    %v1024 = vmul.f32 1.0, %v1023
    %v1025 = vtanh.pop %v1011
    %v1026 = vxor.u32 %v1012, 2147483648
    %v1027 = vmul.f32 %v1026, 1.442695
    %v1028 = vpow.pop %v1027
    %v1029 = vadd.f32 %v1028, 1.0
    %v1030 = vrcp.pop %v1029
    %v1031 = vmul.f32 1.0, %v1030
    %v1033 = vrot.slane %v859, 6
    %v1035 = vmul.f32 %v1024, %v1033
    %v1036 = vmul.f32 %v1018, %v1025
    %v1037 = vadd.f32 %v1035, %v1036
    %v1038 = vtanh.pop %v1037
    %v1039 = vmul.f32 %v1031, %v1038
    %1040 = vst [vmem:[#allocation2 + $0x3] sm:$0x1] %v1039
    %1041 = vst [vmem:[#allocation2 + $0xa] sm:$0x2] %v1039
    %1042 = vmatprep.subr.mxu0 %v263
    %1043 = vmatpush1.msra.mxu0 %v262
    %1044 = vmatprep.subr.mxu0 %v259
    %1045 = vmatpush1.msra.mxu0 %v258
    %1046 = vmatprep.subr.mxu0 %v255
    %1047 = vmatpush1.msra.mxu0 %v254
    %1048 = vmatprep.subr.mxu0 %v251
    %1049 = vmatpush1.msra.mxu0 %v250
    %1050 = vmatprep.subr.mxu0 %v247
    %1051 = vmatpush1.msra.mxu0 %v246
    %1052 = vmatprep.subr.mxu0 %v243
    %1053 = vmatpush1.msra.mxu0 %v242
    %1054 = vmatprep.subr.mxu0 %v239
    %1055 = vmatpush1.msra.mxu0 %v238
    %1056 = vmatprep.subr.mxu0 %v235
    %1057 = vmatpush1.msra.mxu0 %v234
    %1058 = vmatprep.subr.mxu0 %v231
    %1059 = vmatpush1.msra.mxu0 %v230
    %1060 = vmatprep.subr.mxu0 %v227
    %1061 = vmatpush1.msra.mxu0 %v226
    %1062 = vmatprep.subr.mxu0 %v223
    %1063 = vmatpush1.msra.mxu0 %v222
    %1064 = vmatprep.subr.mxu0 %v219
    %1065 = vmatpush1.msra.mxu0 %v218
    %1066 = vmatprep.subr.mxu0 %v215
    %1067 = vmatpush1.msra.mxu0 %v214
    %1068 = vmatprep.subr.mxu0 %v211
    %1069 = vmatpush1.msra.mxu0 %v210
    %1070 = vmatprep.subr.mxu0 %v207
    %1071 = vmatpush1.msra.mxu0 %v206
    %1072 = vmatprep.subr.mxu0 %v203
    %1073 = vmatpush1.msra.mxu0 %v202
    %1074 = vmatprep.subr.mxu0 0.0
    %1075 = vmatpush2.msra.mxu0 0.0
    %1076 = vmatprep.subr.mxu0 0.0
    %1077 = vmatpush2.msra.mxu0 0.0
    %1078 = vmatprep.subr.mxu0 0.0
    %1079 = vmatpush2.msra.mxu0 0.0
    %1080 = vmatprep.subr.mxu0 0.0
    %1081 = vmatpush2.msra.mxu0 0.0
    %1082 = vmatprep.subr.mxu0 0.0
    %1083 = vmatpush2.msra.mxu0 0.0
    %1084 = vmatprep.subr.mxu0 0.0
    %1085 = vmatpush2.msra.mxu0 0.0
    %1086 = vmatprep.subr.mxu0 0.0
    %1087 = vmatpush2.msra.mxu0 0.0
    %1088 = vmatprep.subr.mxu0 0.0
    %1089 = vmatpush2.msra.mxu0 0.0
    %1090 = vmatprep.subr.mxu0 0.0
    %1091 = vmatpush2.msra.mxu0 0.0
    %1092 = vmatprep.subr.mxu0 0.0
    %1093 = vmatpush2.msra.mxu0 0.0
    %1094 = vmatprep.subr.mxu0 0.0
    %1095 = vmatpush2.msra.mxu0 0.0
    %1096 = vmatprep.subr.mxu0 0.0
    %1097 = vmatpush2.msra.mxu0 0.0
    %1098 = vmatprep.subr.mxu0 0.0
    %1099 = vmatpush2.msra.mxu0 0.0
    %1100 = vmatprep.subr.mxu0 0.0
    %1101 = vmatpush2.msra.mxu0 0.0
    %1102 = vmatprep.subr.mxu0 0.0
    %1103 = vmatpush2.msra.mxu0 0.0
    %1104 = vmatprep.subr.mxu0 0.0
    %1105 = vmatpush2.msra.mxu0 0.0
    %1106 = vmatprep.mubr.f32.mxu0 0.0
    %1107 = vmatmul.mubr.f32.gmra.mxu0 %v1039
    %v1108 = vpop.f32.mrf.mxu0
    %v1109 = vadd.f32 0.0, %v1108
    %v1110 = vpop.f32.mrf.mxu0
    %v1111 = vadd.f32 0.0, %v1110
    %1112 = vdwg.mxu0
    %1113 = vmatprep.subr.mxu0 %v265
    %1114 = vmatpush1.msra.mxu0 %v264
    %1115 = vmatprep.subr.mxu0 %v261
    %1116 = vmatpush1.msra.mxu0 %v260
    %1117 = vmatprep.subr.mxu0 %v257
    %1118 = vmatpush1.msra.mxu0 %v256
    %1119 = vmatprep.subr.mxu0 %v253
    %1120 = vmatpush1.msra.mxu0 %v252
    %1121 = vmatprep.subr.mxu0 %v249
    %1122 = vmatpush1.msra.mxu0 %v248
    %1123 = vmatprep.subr.mxu0 %v245
    %1124 = vmatpush1.msra.mxu0 %v244
    %1125 = vmatprep.subr.mxu0 %v241
    %1126 = vmatpush1.msra.mxu0 %v240
    %1127 = vmatprep.subr.mxu0 %v237
    %1128 = vmatpush1.msra.mxu0 %v236
    %1129 = vmatprep.subr.mxu0 %v233
    %1130 = vmatpush1.msra.mxu0 %v232
    %1131 = vmatprep.subr.mxu0 %v229
    %1132 = vmatpush1.msra.mxu0 %v228
    %1133 = vmatprep.subr.mxu0 %v225
    %1134 = vmatpush1.msra.mxu0 %v224
    %1135 = vmatprep.subr.mxu0 %v221
    %1136 = vmatpush1.msra.mxu0 %v220
    %1137 = vmatprep.subr.mxu0 %v217
    %1138 = vmatpush1.msra.mxu0 %v216
    %1139 = vmatprep.subr.mxu0 %v213
    %1140 = vmatpush1.msra.mxu0 %v212
    %1141 = vmatprep.subr.mxu0 %v209
    %1142 = vmatpush1.msra.mxu0 %v208
    %1143 = vmatprep.subr.mxu0 %v205
    %1144 = vmatpush1.msra.mxu0 %v204
    %1145 = vmatprep.subr.mxu0 0.0
    %1146 = vmatpush2.msra.mxu0 0.0
    %1147 = vmatprep.subr.mxu0 0.0
    %1148 = vmatpush2.msra.mxu0 0.0
    %1149 = vmatprep.subr.mxu0 0.0
    %1150 = vmatpush2.msra.mxu0 0.0
    %1151 = vmatprep.subr.mxu0 0.0
    %1152 = vmatpush2.msra.mxu0 0.0
    %1153 = vmatprep.subr.mxu0 0.0
    %1154 = vmatpush2.msra.mxu0 0.0
    %1155 = vmatprep.subr.mxu0 0.0
    %1156 = vmatpush2.msra.mxu0 0.0
    %1157 = vmatprep.subr.mxu0 0.0
    %1158 = vmatpush2.msra.mxu0 0.0
    %1159 = vmatprep.subr.mxu0 0.0
    %1160 = vmatpush2.msra.mxu0 0.0
    %1161 = vmatprep.subr.mxu0 0.0
    %1162 = vmatpush2.msra.mxu0 0.0
    %1163 = vmatprep.subr.mxu0 0.0
    %1164 = vmatpush2.msra.mxu0 0.0
    %1165 = vmatprep.subr.mxu0 0.0
    %1166 = vmatpush2.msra.mxu0 0.0
    %1167 = vmatprep.subr.mxu0 0.0
    %1168 = vmatpush2.msra.mxu0 0.0
    %1169 = vmatprep.subr.mxu0 0.0
    %1170 = vmatpush2.msra.mxu0 0.0
    %1171 = vmatprep.subr.mxu0 0.0
    %1172 = vmatpush2.msra.mxu0 0.0
    %1173 = vmatprep.subr.mxu0 0.0
    %1174 = vmatpush2.msra.mxu0 0.0
    %1175 = vmatprep.subr.mxu0 0.0
    %1176 = vmatpush2.msra.mxu0 0.0
    %1177 = vmatprep.mubr.f32.mxu0 0.0
    %1178 = vmatmul.mubr.f32.gmra.mxu0 %v1039
    %v1179 = vpop.f32.mrf.mxu0
    %v1180 = vadd.f32 0.0, %v1179
    %v1181 = vpop.f32.mrf.mxu0
    %v1182 = vadd.f32 0.0, %v1181
    %1183 = vdwg.mxu0
    %v1188 = vrot.slane %v1109, 6
    %v1189 = vrot.slane %v1111, 6
    %v1190 = vrot.slane %v1180, 6
    %v1191 = vrot.slane %v1182, 6
    %v1196 = vadd.f32 %v198, %v1188
    %v1197 = vadd.f32 %v199, %v1189
    %v1198 = vadd.f32 %v200, %v1190
    %v1199 = vadd.f32 %v201, %v1191
    %v1200 = vxor.u32 %v1196, 2147483648
    %v1201 = vmul.f32 %v1200, 1.442695
    %v1202 = vpow.pop %v1201
    %v1203 = vadd.f32 %v1202, 1.0
    %v1204 = vrcp.pop %v1203
    %v1205 = vmul.f32 1.0, %v1204
    %v1206 = vxor.u32 %v1197, 2147483648
    %v1207 = vmul.f32 %v1206, 1.442695
    %v1208 = vpow.pop %v1207
    %v1209 = vadd.f32 %v1208, 1.0
    %v1210 = vrcp.pop %v1209
    %v1211 = vmul.f32 1.0, %v1210
    %v1212 = vtanh.pop %v1198
    %v1213 = vxor.u32 %v1199, 2147483648
    %v1214 = vmul.f32 %v1213, 1.442695
    %v1215 = vpow.pop %v1214
    %v1216 = vadd.f32 %v1215, 1.0
    %v1217 = vrcp.pop %v1216
    %v1218 = vmul.f32 1.0, %v1217
    %v1220 = vrot.slane %v1037, 6
    %v1222 = vmul.f32 %v1211, %v1220
    %v1223 = vmul.f32 %v1205, %v1212
    %v1224 = vadd.f32 %v1222, %v1223
    %v1225 = vtanh.pop %v1224
    %v1226 = vmul.f32 %v1218, %v1225
    %1227 = vst [vmem:[#allocation2 + $0x2] sm:$0x4] %v1226
    %1228 = vst [vmem:[#allocation2 + $0x9] sm:$0x8] %v1226
    %v1230 = vrot.slane %v1226, 2
    %1232 = vmatprep.subr.mxu0 %v263
    %1233 = vmatpush1.msra.mxu0 %v262
    %1234 = vmatprep.subr.mxu0 %v259
    %1235 = vmatpush1.msra.mxu0 %v258
    %1236 = vmatprep.subr.mxu0 %v255
    %1237 = vmatpush1.msra.mxu0 %v254
    %1238 = vmatprep.subr.mxu0 %v251
    %1239 = vmatpush1.msra.mxu0 %v250
    %1240 = vmatprep.subr.mxu0 %v247
    %1241 = vmatpush1.msra.mxu0 %v246
    %1242 = vmatprep.subr.mxu0 %v243
    %1243 = vmatpush1.msra.mxu0 %v242
    %1244 = vmatprep.subr.mxu0 %v239
    %1245 = vmatpush1.msra.mxu0 %v238
    %1246 = vmatprep.subr.mxu0 %v235
    %1247 = vmatpush1.msra.mxu0 %v234
    %1248 = vmatprep.subr.mxu0 %v231
    %1249 = vmatpush1.msra.mxu0 %v230
    %1250 = vmatprep.subr.mxu0 %v227
    %1251 = vmatpush1.msra.mxu0 %v226
    %1252 = vmatprep.subr.mxu0 %v223
    %1253 = vmatpush1.msra.mxu0 %v222
    %1254 = vmatprep.subr.mxu0 %v219
    %1255 = vmatpush1.msra.mxu0 %v218
    %1256 = vmatprep.subr.mxu0 %v215
    %1257 = vmatpush1.msra.mxu0 %v214
    %1258 = vmatprep.subr.mxu0 %v211
    %1259 = vmatpush1.msra.mxu0 %v210
    %1260 = vmatprep.subr.mxu0 %v207
    %1261 = vmatpush1.msra.mxu0 %v206
    %1262 = vmatprep.subr.mxu0 %v203
    %1263 = vmatpush1.msra.mxu0 %v202
    %1264 = vmatprep.subr.mxu0 0.0
    %1265 = vmatpush2.msra.mxu0 0.0
    %1266 = vmatprep.subr.mxu0 0.0
    %1267 = vmatpush2.msra.mxu0 0.0
    %1268 = vmatprep.subr.mxu0 0.0
    %1269 = vmatpush2.msra.mxu0 0.0
    %1270 = vmatprep.subr.mxu0 0.0
    %1271 = vmatpush2.msra.mxu0 0.0
    %1272 = vmatprep.subr.mxu0 0.0
    %1273 = vmatpush2.msra.mxu0 0.0
    %1274 = vmatprep.subr.mxu0 0.0
    %1275 = vmatpush2.msra.mxu0 0.0
    %1276 = vmatprep.subr.mxu0 0.0
    %1277 = vmatpush2.msra.mxu0 0.0
    %1278 = vmatprep.subr.mxu0 0.0
    %1279 = vmatpush2.msra.mxu0 0.0
    %1280 = vmatprep.subr.mxu0 0.0
    %1281 = vmatpush2.msra.mxu0 0.0
    %1282 = vmatprep.subr.mxu0 0.0
    %1283 = vmatpush2.msra.mxu0 0.0
    %1284 = vmatprep.subr.mxu0 0.0
    %1285 = vmatpush2.msra.mxu0 0.0
    %1286 = vmatprep.subr.mxu0 0.0
    %1287 = vmatpush2.msra.mxu0 0.0
    %1288 = vmatprep.subr.mxu0 0.0
    %1289 = vmatpush2.msra.mxu0 0.0
    %1290 = vmatprep.subr.mxu0 0.0
    %1291 = vmatpush2.msra.mxu0 0.0
    %1292 = vmatprep.subr.mxu0 0.0
    %1293 = vmatpush2.msra.mxu0 0.0
    %1294 = vmatprep.subr.mxu0 0.0
    %1295 = vmatpush2.msra.mxu0 0.0
    %1296 = vmatprep.mubr.f32.mxu0 0.0
    %1297 = vmatmul.mubr.f32.gmra.mxu0 %v1230
    %v1298 = vpop.f32.mrf.mxu0
    %v1299 = vadd.f32 0.0, %v1298
    %v1300 = vpop.f32.mrf.mxu0
    %v1301 = vadd.f32 0.0, %v1300
    %1302 = vdwg.mxu0
    %1303 = vmatprep.subr.mxu0 %v265
    %1304 = vmatpush1.msra.mxu0 %v264
    %1305 = vmatprep.subr.mxu0 %v261
    %1306 = vmatpush1.msra.mxu0 %v260
    %1307 = vmatprep.subr.mxu0 %v257
    %1308 = vmatpush1.msra.mxu0 %v256
    %1309 = vmatprep.subr.mxu0 %v253
    %1310 = vmatpush1.msra.mxu0 %v252
    %1311 = vmatprep.subr.mxu0 %v249
    %1312 = vmatpush1.msra.mxu0 %v248
    %1313 = vmatprep.subr.mxu0 %v245
    %1314 = vmatpush1.msra.mxu0 %v244
    %1315 = vmatprep.subr.mxu0 %v241
    %1316 = vmatpush1.msra.mxu0 %v240
    %1317 = vmatprep.subr.mxu0 %v237
    %1318 = vmatpush1.msra.mxu0 %v236
    %1319 = vmatprep.subr.mxu0 %v233
    %1320 = vmatpush1.msra.mxu0 %v232
    %1321 = vmatprep.subr.mxu0 %v229
    %1322 = vmatpush1.msra.mxu0 %v228
    %1323 = vmatprep.subr.mxu0 %v225
    %1324 = vmatpush1.msra.mxu0 %v224
    %1325 = vmatprep.subr.mxu0 %v221
    %1326 = vmatpush1.msra.mxu0 %v220
    %1327 = vmatprep.subr.mxu0 %v217
    %1328 = vmatpush1.msra.mxu0 %v216
    %1329 = vmatprep.subr.mxu0 %v213
    %1330 = vmatpush1.msra.mxu0 %v212
    %1331 = vmatprep.subr.mxu0 %v209
    %1332 = vmatpush1.msra.mxu0 %v208
    %1333 = vmatprep.subr.mxu0 %v205
    %1334 = vmatpush1.msra.mxu0 %v204
    %1335 = vmatprep.subr.mxu0 0.0
    %1336 = vmatpush2.msra.mxu0 0.0
    %1337 = vmatprep.subr.mxu0 0.0
    %1338 = vmatpush2.msra.mxu0 0.0
    %1339 = vmatprep.subr.mxu0 0.0
    %1340 = vmatpush2.msra.mxu0 0.0
    %1341 = vmatprep.subr.mxu0 0.0
    %1342 = vmatpush2.msra.mxu0 0.0
    %1343 = vmatprep.subr.mxu0 0.0
    %1344 = vmatpush2.msra.mxu0 0.0
    %1345 = vmatprep.subr.mxu0 0.0
    %1346 = vmatpush2.msra.mxu0 0.0
    %1347 = vmatprep.subr.mxu0 0.0
    %1348 = vmatpush2.msra.mxu0 0.0
    %1349 = vmatprep.subr.mxu0 0.0
    %1350 = vmatpush2.msra.mxu0 0.0
    %1351 = vmatprep.subr.mxu0 0.0
    %1352 = vmatpush2.msra.mxu0 0.0
    %1353 = vmatprep.subr.mxu0 0.0
    %1354 = vmatpush2.msra.mxu0 0.0
    %1355 = vmatprep.subr.mxu0 0.0
    %1356 = vmatpush2.msra.mxu0 0.0
    %1357 = vmatprep.subr.mxu0 0.0
    %1358 = vmatpush2.msra.mxu0 0.0
    %1359 = vmatprep.subr.mxu0 0.0
    %1360 = vmatpush2.msra.mxu0 0.0
    %1361 = vmatprep.subr.mxu0 0.0
    %1362 = vmatpush2.msra.mxu0 0.0
    %1363 = vmatprep.subr.mxu0 0.0
    %1364 = vmatpush2.msra.mxu0 0.0
    %1365 = vmatprep.subr.mxu0 0.0
    %1366 = vmatpush2.msra.mxu0 0.0
    %1367 = vmatprep.mubr.f32.mxu0 0.0
    %1368 = vmatmul.mubr.f32.gmra.mxu0 %v1230
    %v1369 = vpop.f32.mrf.mxu0
    %v1370 = vadd.f32 0.0, %v1369
    %v1371 = vpop.f32.mrf.mxu0
    %v1372 = vadd.f32 0.0, %v1371
    %1373 = vdwg.mxu0
    %v1378 = vrot.slane %v1299, 4
    %v1379 = vrot.slane %v1301, 4
    %v1380 = vrot.slane %v1370, 4
    %v1381 = vrot.slane %v1372, 4
    %v1386 = vadd.f32 %v198, %v1378
    %v1387 = vadd.f32 %v199, %v1379
    %v1388 = vadd.f32 %v200, %v1380
    %v1389 = vadd.f32 %v201, %v1381
    %v1390 = vxor.u32 %v1386, 2147483648
    %v1391 = vmul.f32 %v1390, 1.442695
    %v1392 = vpow.pop %v1391
    %v1393 = vadd.f32 %v1392, 1.0
    %v1394 = vrcp.pop %v1393
    %v1395 = vmul.f32 1.0, %v1394
    %v1396 = vxor.u32 %v1387, 2147483648
    %v1397 = vmul.f32 %v1396, 1.442695
    %v1398 = vpow.pop %v1397
    %v1399 = vadd.f32 %v1398, 1.0
    %v1400 = vrcp.pop %v1399
    %v1401 = vmul.f32 1.0, %v1400
    %v1402 = vtanh.pop %v1388
    %v1403 = vxor.u32 %v1389, 2147483648
    %v1404 = vmul.f32 %v1403, 1.442695
    %v1405 = vpow.pop %v1404
    %v1406 = vadd.f32 %v1405, 1.0
    %v1407 = vrcp.pop %v1406
    %v1408 = vmul.f32 1.0, %v1407
    %v1410 = vrot.slane %v1224, 6
    %v1412 = vmul.f32 %v1401, %v1410
    %v1413 = vmul.f32 %v1395, %v1402
    %v1414 = vadd.f32 %v1412, %v1413
    %v1415 = vtanh.pop %v1414
    %v1416 = vmul.f32 %v1408, %v1415
    %1417 = vst [vmem:[#allocation2 + $0x1] sm:$0x10] %v1416
    %1418 = vst [vmem:[#allocation2 + $0x8] sm:$0x20] %v1416
    %v1420 = vrot.slane %v1416, 4
    %1422 = vmatprep.subr.mxu0 %v263
    %1423 = vmatpush1.msra.mxu0 %v262
    %1424 = vmatprep.subr.mxu0 %v259
    %1425 = vmatpush1.msra.mxu0 %v258
    %1426 = vmatprep.subr.mxu0 %v255
    %1427 = vmatpush1.msra.mxu0 %v254
    %1428 = vmatprep.subr.mxu0 %v251
    %1429 = vmatpush1.msra.mxu0 %v250
    %1430 = vmatprep.subr.mxu0 %v247
    %1431 = vmatpush1.msra.mxu0 %v246
    %1432 = vmatprep.subr.mxu0 %v243
    %1433 = vmatpush1.msra.mxu0 %v242
    %1434 = vmatprep.subr.mxu0 %v239
    %1435 = vmatpush1.msra.mxu0 %v238
    %1436 = vmatprep.subr.mxu0 %v235
    %1437 = vmatpush1.msra.mxu0 %v234
    %1438 = vmatprep.subr.mxu0 %v231
    %1439 = vmatpush1.msra.mxu0 %v230
    %1440 = vmatprep.subr.mxu0 %v227
    %1441 = vmatpush1.msra.mxu0 %v226
    %1442 = vmatprep.subr.mxu0 %v223
    %1443 = vmatpush1.msra.mxu0 %v222
    %1444 = vmatprep.subr.mxu0 %v219
    %1445 = vmatpush1.msra.mxu0 %v218
    %1446 = vmatprep.subr.mxu0 %v215
    %1447 = vmatpush1.msra.mxu0 %v214
    %1448 = vmatprep.subr.mxu0 %v211
    %1449 = vmatpush1.msra.mxu0 %v210
    %1450 = vmatprep.subr.mxu0 %v207
    %1451 = vmatpush1.msra.mxu0 %v206
    %1452 = vmatprep.subr.mxu0 %v203
    %1453 = vmatpush1.msra.mxu0 %v202
    %1454 = vmatprep.subr.mxu0 0.0
    %1455 = vmatpush2.msra.mxu0 0.0
    %1456 = vmatprep.subr.mxu0 0.0
    %1457 = vmatpush2.msra.mxu0 0.0
    %1458 = vmatprep.subr.mxu0 0.0
    %1459 = vmatpush2.msra.mxu0 0.0
    %1460 = vmatprep.subr.mxu0 0.0
    %1461 = vmatpush2.msra.mxu0 0.0
    %1462 = vmatprep.subr.mxu0 0.0
    %1463 = vmatpush2.msra.mxu0 0.0
    %1464 = vmatprep.subr.mxu0 0.0
    %1465 = vmatpush2.msra.mxu0 0.0
    %1466 = vmatprep.subr.mxu0 0.0
    %1467 = vmatpush2.msra.mxu0 0.0
    %1468 = vmatprep.subr.mxu0 0.0
    %1469 = vmatpush2.msra.mxu0 0.0
    %1470 = vmatprep.subr.mxu0 0.0
    %1471 = vmatpush2.msra.mxu0 0.0
    %1472 = vmatprep.subr.mxu0 0.0
    %1473 = vmatpush2.msra.mxu0 0.0
    %1474 = vmatprep.subr.mxu0 0.0
    %1475 = vmatpush2.msra.mxu0 0.0
    %1476 = vmatprep.subr.mxu0 0.0
    %1477 = vmatpush2.msra.mxu0 0.0
    %1478 = vmatprep.subr.mxu0 0.0
    %1479 = vmatpush2.msra.mxu0 0.0
    %1480 = vmatprep.subr.mxu0 0.0
    %1481 = vmatpush2.msra.mxu0 0.0
    %1482 = vmatprep.subr.mxu0 0.0
    %1483 = vmatpush2.msra.mxu0 0.0
    %1484 = vmatprep.subr.mxu0 0.0
    %1485 = vmatpush2.msra.mxu0 0.0
    %1486 = vmatprep.mubr.f32.mxu0 0.0
    %1487 = vmatmul.mubr.f32.gmra.mxu0 %v1420
    %v1488 = vpop.f32.mrf.mxu0
    %v1489 = vadd.f32 0.0, %v1488
    %v1490 = vpop.f32.mrf.mxu0
    %v1491 = vadd.f32 0.0, %v1490
    %1492 = vdwg.mxu0
    %1493 = vmatprep.subr.mxu0 %v265
    %1494 = vmatpush1.msra.mxu0 %v264
    %1495 = vmatprep.subr.mxu0 %v261
    %1496 = vmatpush1.msra.mxu0 %v260
    %1497 = vmatprep.subr.mxu0 %v257
    %1498 = vmatpush1.msra.mxu0 %v256
    %1499 = vmatprep.subr.mxu0 %v253
    %1500 = vmatpush1.msra.mxu0 %v252
    %1501 = vmatprep.subr.mxu0 %v249
    %1502 = vmatpush1.msra.mxu0 %v248
    %1503 = vmatprep.subr.mxu0 %v245
    %1504 = vmatpush1.msra.mxu0 %v244
    %1505 = vmatprep.subr.mxu0 %v241
    %1506 = vmatpush1.msra.mxu0 %v240
    %1507 = vmatprep.subr.mxu0 %v237
    %1508 = vmatpush1.msra.mxu0 %v236
    %1509 = vmatprep.subr.mxu0 %v233
    %1510 = vmatpush1.msra.mxu0 %v232
    %1511 = vmatprep.subr.mxu0 %v229
    %1512 = vmatpush1.msra.mxu0 %v228
    %1513 = vmatprep.subr.mxu0 %v225
    %1514 = vmatpush1.msra.mxu0 %v224
    %1515 = vmatprep.subr.mxu0 %v221
    %1516 = vmatpush1.msra.mxu0 %v220
    %1517 = vmatprep.subr.mxu0 %v217
    %1518 = vmatpush1.msra.mxu0 %v216
    %1519 = vmatprep.subr.mxu0 %v213
    %1520 = vmatpush1.msra.mxu0 %v212
    %1521 = vmatprep.subr.mxu0 %v209
    %1522 = vmatpush1.msra.mxu0 %v208
    %1523 = vmatprep.subr.mxu0 %v205
    %1524 = vmatpush1.msra.mxu0 %v204
    %1525 = vmatprep.subr.mxu0 0.0
    %1526 = vmatpush2.msra.mxu0 0.0
    %1527 = vmatprep.subr.mxu0 0.0
    %1528 = vmatpush2.msra.mxu0 0.0
    %1529 = vmatprep.subr.mxu0 0.0
    %1530 = vmatpush2.msra.mxu0 0.0
    %1531 = vmatprep.subr.mxu0 0.0
    %1532 = vmatpush2.msra.mxu0 0.0
    %1533 = vmatprep.subr.mxu0 0.0
    %1534 = vmatpush2.msra.mxu0 0.0
    %1535 = vmatprep.subr.mxu0 0.0
    %1536 = vmatpush2.msra.mxu0 0.0
    %1537 = vmatprep.subr.mxu0 0.0
    %1538 = vmatpush2.msra.mxu0 0.0
    %1539 = vmatprep.subr.mxu0 0.0
    %1540 = vmatpush2.msra.mxu0 0.0
    %1541 = vmatprep.subr.mxu0 0.0
    %1542 = vmatpush2.msra.mxu0 0.0
    %1543 = vmatprep.subr.mxu0 0.0
    %1544 = vmatpush2.msra.mxu0 0.0
    %1545 = vmatprep.subr.mxu0 0.0
    %1546 = vmatpush2.msra.mxu0 0.0
    %1547 = vmatprep.subr.mxu0 0.0
    %1548 = vmatpush2.msra.mxu0 0.0
    %1549 = vmatprep.subr.mxu0 0.0
    %1550 = vmatpush2.msra.mxu0 0.0
    %1551 = vmatprep.subr.mxu0 0.0
    %1552 = vmatpush2.msra.mxu0 0.0
    %1553 = vmatprep.subr.mxu0 0.0
    %1554 = vmatpush2.msra.mxu0 0.0
    %1555 = vmatprep.subr.mxu0 0.0
    %1556 = vmatpush2.msra.mxu0 0.0
    %1557 = vmatprep.mubr.f32.mxu0 0.0
    %1558 = vmatmul.mubr.f32.gmra.mxu0 %v1420
    %v1559 = vpop.f32.mrf.mxu0
    %v1560 = vadd.f32 0.0, %v1559
    %v1561 = vpop.f32.mrf.mxu0
    %v1562 = vadd.f32 0.0, %v1561
    %1563 = vdwg.mxu0
    %v1568 = vrot.slane %v1489, 2
    %v1569 = vrot.slane %v1491, 2
    %v1570 = vrot.slane %v1560, 2
    %v1571 = vrot.slane %v1562, 2
    %v1576 = vadd.f32 %v198, %v1568
    %v1577 = vadd.f32 %v199, %v1569
    %v1578 = vadd.f32 %v200, %v1570
    %v1579 = vadd.f32 %v201, %v1571
    %v1580 = vxor.u32 %v1576, 2147483648
    %v1581 = vmul.f32 %v1580, 1.442695
    %v1582 = vpow.pop %v1581
    %v1583 = vadd.f32 %v1582, 1.0
    %v1584 = vrcp.pop %v1583
    %v1585 = vmul.f32 1.0, %v1584
    %v1586 = vxor.u32 %v1577, 2147483648
    %v1587 = vmul.f32 %v1586, 1.442695
    %v1588 = vpow.pop %v1587
    %v1589 = vadd.f32 %v1588, 1.0
    %v1590 = vrcp.pop %v1589
    %v1591 = vmul.f32 1.0, %v1590
    %v1592 = vtanh.pop %v1578
    %v1593 = vxor.u32 %v1579, 2147483648
    %v1594 = vmul.f32 %v1593, 1.442695
    %v1595 = vpow.pop %v1594
    %v1596 = vadd.f32 %v1595, 1.0
    %v1597 = vrcp.pop %v1596
    %v1598 = vmul.f32 1.0, %v1597
    %v1600 = vrot.slane %v1414, 6
    %v1602 = vmul.f32 %v1591, %v1600
    %v1603 = vmul.f32 %v1585, %v1592
    %v1604 = vadd.f32 %v1602, %v1603
    %v1605 = vtanh.pop %v1604
    %v1606 = vmul.f32 %v1598, %v1605
    %1607 = vst [vmem:[#allocation2] sm:$0x40] %v1606
    %1608 = vst [vmem:[#allocation2 + $0x7] sm:$0x80] %v1606
    %v1610 = vrot.slane %v1606, 6
    %1612 = vmatprep.subr.mxu0 %v263
    %1613 = vmatpush1.msra.mxu0 %v262
    %1614 = vmatprep.subr.mxu0 %v259
    %1615 = vmatpush1.msra.mxu0 %v258
    %1616 = vmatprep.subr.mxu0 %v255
    %1617 = vmatpush1.msra.mxu0 %v254
    %1618 = vmatprep.subr.mxu0 %v251
    %1619 = vmatpush1.msra.mxu0 %v250
    %1620 = vmatprep.subr.mxu0 %v247
    %1621 = vmatpush1.msra.mxu0 %v246
    %1622 = vmatprep.subr.mxu0 %v243
    %1623 = vmatpush1.msra.mxu0 %v242
    %1624 = vmatprep.subr.mxu0 %v239
    %1625 = vmatpush1.msra.mxu0 %v238
    %1626 = vmatprep.subr.mxu0 %v235
    %1627 = vmatpush1.msra.mxu0 %v234
    %1628 = vmatprep.subr.mxu0 %v231
    %1629 = vmatpush1.msra.mxu0 %v230
    %1630 = vmatprep.subr.mxu0 %v227
    %1631 = vmatpush1.msra.mxu0 %v226
    %1632 = vmatprep.subr.mxu0 %v223
    %1633 = vmatpush1.msra.mxu0 %v222
    %1634 = vmatprep.subr.mxu0 %v219
    %1635 = vmatpush1.msra.mxu0 %v218
    %1636 = vmatprep.subr.mxu0 %v215
    %1637 = vmatpush1.msra.mxu0 %v214
    %1638 = vmatprep.subr.mxu0 %v211
    %1639 = vmatpush1.msra.mxu0 %v210
    %1640 = vmatprep.subr.mxu0 %v207
    %1641 = vmatpush1.msra.mxu0 %v206
    %1642 = vmatprep.subr.mxu0 %v203
    %1643 = vmatpush1.msra.mxu0 %v202
    %1644 = vmatprep.subr.mxu0 0.0
    %1645 = vmatpush2.msra.mxu0 0.0
    %1646 = vmatprep.subr.mxu0 0.0
    %1647 = vmatpush2.msra.mxu0 0.0
    %1648 = vmatprep.subr.mxu0 0.0
    %1649 = vmatpush2.msra.mxu0 0.0
    %1650 = vmatprep.subr.mxu0 0.0
    %1651 = vmatpush2.msra.mxu0 0.0
    %1652 = vmatprep.subr.mxu0 0.0
    %1653 = vmatpush2.msra.mxu0 0.0
    %1654 = vmatprep.subr.mxu0 0.0
    %1655 = vmatpush2.msra.mxu0 0.0
    %1656 = vmatprep.subr.mxu0 0.0
    %1657 = vmatpush2.msra.mxu0 0.0
    %1658 = vmatprep.subr.mxu0 0.0
    %1659 = vmatpush2.msra.mxu0 0.0
    %1660 = vmatprep.subr.mxu0 0.0
    %1661 = vmatpush2.msra.mxu0 0.0
    %1662 = vmatprep.subr.mxu0 0.0
    %1663 = vmatpush2.msra.mxu0 0.0
    %1664 = vmatprep.subr.mxu0 0.0
    %1665 = vmatpush2.msra.mxu0 0.0
    %1666 = vmatprep.subr.mxu0 0.0
    %1667 = vmatpush2.msra.mxu0 0.0
    %1668 = vmatprep.subr.mxu0 0.0
    %1669 = vmatpush2.msra.mxu0 0.0
    %1670 = vmatprep.subr.mxu0 0.0
    %1671 = vmatpush2.msra.mxu0 0.0
    %1672 = vmatprep.subr.mxu0 0.0
    %1673 = vmatpush2.msra.mxu0 0.0
    %1674 = vmatprep.subr.mxu0 0.0
    %1675 = vmatpush2.msra.mxu0 0.0
    %1676 = vmatprep.mubr.f32.mxu0 0.0
    %1677 = vmatmul.mubr.f32.gmra.mxu0 %v1610
    %v1678 = vpop.f32.mrf.mxu0
    %v1679 = vadd.f32 0.0, %v1678
    %v1680 = vpop.f32.mrf.mxu0
    %v1681 = vadd.f32 0.0, %v1680
    %1682 = vdwg.mxu0
    %1683 = vmatprep.subr.mxu0 %v265
    %1684 = vmatpush1.msra.mxu0 %v264
    %1685 = vmatprep.subr.mxu0 %v261
    %1686 = vmatpush1.msra.mxu0 %v260
    %1687 = vmatprep.subr.mxu0 %v257
    %1688 = vmatpush1.msra.mxu0 %v256
    %1689 = vmatprep.subr.mxu0 %v253
    %1690 = vmatpush1.msra.mxu0 %v252
    %1691 = vmatprep.subr.mxu0 %v249
    %1692 = vmatpush1.msra.mxu0 %v248
    %1693 = vmatprep.subr.mxu0 %v245
    %1694 = vmatpush1.msra.mxu0 %v244
    %1695 = vmatprep.subr.mxu0 %v241
    %1696 = vmatpush1.msra.mxu0 %v240
    %1697 = vmatprep.subr.mxu0 %v237
    %1698 = vmatpush1.msra.mxu0 %v236
    %1699 = vmatprep.subr.mxu0 %v233
    %1700 = vmatpush1.msra.mxu0 %v232
    %1701 = vmatprep.subr.mxu0 %v229
    %1702 = vmatpush1.msra.mxu0 %v228
    %1703 = vmatprep.subr.mxu0 %v225
    %1704 = vmatpush1.msra.mxu0 %v224
    %1705 = vmatprep.subr.mxu0 %v221
    %1706 = vmatpush1.msra.mxu0 %v220
    %1707 = vmatprep.subr.mxu0 %v217
    %1708 = vmatpush1.msra.mxu0 %v216
    %1709 = vmatprep.subr.mxu0 %v213
    %1710 = vmatpush1.msra.mxu0 %v212
    %1711 = vmatprep.subr.mxu0 %v209
    %1712 = vmatpush1.msra.mxu0 %v208
    %1713 = vmatprep.subr.mxu0 %v205
    %1714 = vmatpush1.msra.mxu0 %v204
    %1715 = vmatprep.subr.mxu0 0.0
    %1716 = vmatpush2.msra.mxu0 0.0
    %1717 = vmatprep.subr.mxu0 0.0
    %1718 = vmatpush2.msra.mxu0 0.0
    %1719 = vmatprep.subr.mxu0 0.0
    %1720 = vmatpush2.msra.mxu0 0.0
    %1721 = vmatprep.subr.mxu0 0.0
    %1722 = vmatpush2.msra.mxu0 0.0
    %1723 = vmatprep.subr.mxu0 0.0
    %1724 = vmatpush2.msra.mxu0 0.0
    %1725 = vmatprep.subr.mxu0 0.0
    %1726 = vmatpush2.msra.mxu0 0.0
    %1727 = vmatprep.subr.mxu0 0.0
    %1728 = vmatpush2.msra.mxu0 0.0
    %1729 = vmatprep.subr.mxu0 0.0
    %1730 = vmatpush2.msra.mxu0 0.0
    %1731 = vmatprep.subr.mxu0 0.0
    %1732 = vmatpush2.msra.mxu0 0.0
    %1733 = vmatprep.subr.mxu0 0.0
    %1734 = vmatpush2.msra.mxu0 0.0
    %1735 = vmatprep.subr.mxu0 0.0
    %1736 = vmatpush2.msra.mxu0 0.0
    %1737 = vmatprep.subr.mxu0 0.0
    %1738 = vmatpush2.msra.mxu0 0.0
    %1739 = vmatprep.subr.mxu0 0.0
    %1740 = vmatpush2.msra.mxu0 0.0
    %1741 = vmatprep.subr.mxu0 0.0
    %1742 = vmatpush2.msra.mxu0 0.0
    %1743 = vmatprep.subr.mxu0 0.0
    %1744 = vmatpush2.msra.mxu0 0.0
    %1745 = vmatprep.subr.mxu0 0.0
    %1746 = vmatpush2.msra.mxu0 0.0
    %1747 = vmatprep.mubr.f32.mxu0 0.0
    %1748 = vmatmul.mubr.f32.gmra.mxu0 %v1610
    %v1749 = vpop.f32.mrf.mxu0
    %v1750 = vadd.f32 0.0, %v1749
    %v1751 = vpop.f32.mrf.mxu0
    %v1752 = vadd.f32 0.0, %v1751
    %1753 = vdwg.mxu0
    %v1754 = vadd.f32 %v177, %v1679
    %v1755 = vadd.f32 %v181, %v1681
    %v1756 = vadd.f32 %v185, %v1750
    %v1757 = vadd.f32 %v189, %v1752
    %v1758 = vxor.u32 %v1754, 2147483648
    %v1759 = vmul.f32 %v1758, 1.442695
    %v1760 = vpow.pop %v1759
    %v1761 = vadd.f32 %v1760, 1.0
    %v1762 = vrcp.pop %v1761
    %v1763 = vmul.f32 1.0, %v1762
    %v1764 = vxor.u32 %v1755, 2147483648
    %v1765 = vmul.f32 %v1764, 1.442695
    %v1766 = vpow.pop %v1765
    %v1767 = vadd.f32 %v1766, 1.0
    %v1768 = vrcp.pop %v1767
    %v1769 = vmul.f32 1.0, %v1768
    %v1770 = vtanh.pop %v1756
    %v1771 = vxor.u32 %v1757, 2147483648
    %v1772 = vmul.f32 %v1771, 1.442695
    %v1773 = vpow.pop %v1772
    %v1774 = vadd.f32 %v1773, 1.0
    %v1775 = vrcp.pop %v1774
    %v1776 = vmul.f32 1.0, %v1775
    %v1778 = vrot.slane %v1604, 6
    %v1780 = vmul.f32 %v1769, %v1778
    %v1781 = vmul.f32 %v1763, %v1770
    %v1782 = vadd.f32 %v1780, %v1781
    %v1783 = vtanh.pop %v1782
    %v1784 = vmul.f32 %v1776, %v1783
    %1785 = vst [vmem:[#allocation2 + $0x7] sm:$0x1] %v1784
    %1786 = vst [vmem:[#allocation2 + $0xe] sm:$0x2] %v1784
    %v1787 = vld [vmem:[#allocation2] sm:$0xff]
    %v1788 = vld [vmem:[#allocation2 + $0x8] sm:$0xff]
    %v1789 = vld [vmem:[%s6] sm:$0xff]
    %v1790 = vld [vmem:[%s6 + $0x8] sm:$0xff]
    %v1791 = vld [vmem:[%s6 + $0x10] sm:$0xff]
    %v1792 = vld [vmem:[%s6 + $0x18] sm:$0xff]
    %v1793 = vld [vmem:[%s6 + $0x20] sm:$0xff]
    %v1794 = vld [vmem:[%s6 + $0x28] sm:$0xff]
    %v1795 = vld [vmem:[%s6 + $0x30] sm:$0xff]
    %v1796 = vld [vmem:[%s6 + $0x38] sm:$0xff]
    %v1797 = vld [vmem:[%s6 + $0x40] sm:$0xff]
    %v1798 = vld [vmem:[%s6 + $0x48] sm:$0xff]
    %v1799 = vld [vmem:[%s6 + $0x50] sm:$0xff]
    %v1800 = vld [vmem:[%s6 + $0x58] sm:$0xff]
    %v1801 = vld [vmem:[%s6 + $0x60] sm:$0xff]
    %v1802 = vld [vmem:[%s6 + $0x68] sm:$0xff]
    %v1803 = vld [vmem:[%s6 + $0x70] sm:$0xff]
    %v1804 = vld [vmem:[%s6 + $0x78] sm:$0xff]
    %v1805 = vld [vmem:[%s7] sm:$0x1]
    %v1807 = vlaneseq
    %v1808 = vshrl.u32 %v1807, 7
    %v1809 = vsub.s32 0, %v1808
    %v1810 = vrot.slane %v1805, %v1809
    %1812 = vmatprep.subr.mxu0 0.0
    %1813 = vmatpush1.msra.mxu0 %v1804
    %1814 = vmatprep.subr.mxu0 0.0
    %1815 = vmatpush1.msra.mxu0 %v1803
    %1816 = vmatprep.subr.mxu0 0.0
    %1817 = vmatpush1.msra.mxu0 %v1802
    %1818 = vmatprep.subr.mxu0 0.0
    %1819 = vmatpush1.msra.mxu0 %v1801
    %1820 = vmatprep.subr.mxu0 0.0
    %1821 = vmatpush1.msra.mxu0 %v1800
    %1822 = vmatprep.subr.mxu0 0.0
    %1823 = vmatpush1.msra.mxu0 %v1799
    %1824 = vmatprep.subr.mxu0 0.0
    %1825 = vmatpush1.msra.mxu0 %v1798
    %1826 = vmatprep.subr.mxu0 0.0
    %1827 = vmatpush1.msra.mxu0 %v1797
    %1828 = vmatprep.subr.mxu0 0.0
    %1829 = vmatpush1.msra.mxu0 %v1796
    %1830 = vmatprep.subr.mxu0 0.0
    %1831 = vmatpush1.msra.mxu0 %v1795
    %1832 = vmatprep.subr.mxu0 0.0
    %1833 = vmatpush1.msra.mxu0 %v1794
    %1834 = vmatprep.subr.mxu0 0.0
    %1835 = vmatpush1.msra.mxu0 %v1793
    %1836 = vmatprep.subr.mxu0 0.0
    %1837 = vmatpush1.msra.mxu0 %v1792
    %1838 = vmatprep.subr.mxu0 0.0
    %1839 = vmatpush1.msra.mxu0 %v1791
    %1840 = vmatprep.subr.mxu0 0.0
    %1841 = vmatpush1.msra.mxu0 %v1790
    %1842 = vmatprep.subr.mxu0 0.0
    %1843 = vmatpush1.msra.mxu0 %v1789
    %1844 = vmatprep.subr.mxu0 0.0
    %1845 = vmatpush2.msra.mxu0 0.0
    %1846 = vmatprep.subr.mxu0 0.0
    %1847 = vmatpush2.msra.mxu0 0.0
    %1848 = vmatprep.subr.mxu0 0.0
    %1849 = vmatpush2.msra.mxu0 0.0
    %1850 = vmatprep.subr.mxu0 0.0
    %1851 = vmatpush2.msra.mxu0 0.0
    %1852 = vmatprep.subr.mxu0 0.0
    %1853 = vmatpush2.msra.mxu0 0.0
    %1854 = vmatprep.subr.mxu0 0.0
    %1855 = vmatpush2.msra.mxu0 0.0
    %1856 = vmatprep.subr.mxu0 0.0
    %1857 = vmatpush2.msra.mxu0 0.0
    %1858 = vmatprep.subr.mxu0 0.0
    %1859 = vmatpush2.msra.mxu0 0.0
    %1860 = vmatprep.subr.mxu0 0.0
    %1861 = vmatpush2.msra.mxu0 0.0
    %1862 = vmatprep.subr.mxu0 0.0
    %1863 = vmatpush2.msra.mxu0 0.0
    %1864 = vmatprep.subr.mxu0 0.0
    %1865 = vmatpush2.msra.mxu0 0.0
    %1866 = vmatprep.subr.mxu0 0.0
    %1867 = vmatpush2.msra.mxu0 0.0
    %1868 = vmatprep.subr.mxu0 0.0
    %1869 = vmatpush2.msra.mxu0 0.0
    %1870 = vmatprep.subr.mxu0 0.0
    %1871 = vmatpush2.msra.mxu0 0.0
    %1872 = vmatprep.subr.mxu0 0.0
    %1873 = vmatpush2.msra.mxu0 0.0
    %1874 = vmatprep.subr.mxu0 0.0
    %1875 = vmatpush2.msra.mxu0 0.0
    %1876 = vmatprep.mubr.f32.mxu0 0.0
    %1877 = vmatmul.mubr.f32.gmra.mxu0 %v1787
    %v1878 = vpop.f32.mrf.mxu0
    %v1879 = vadd.f32 %v1810, %v1878
    %v1880 = vpop.f32.mrf.mxu0
    %1881 = vmatprep.mubr.f32.mxu0 0.0
    %1882 = vmatmul.mubr.f32.gmra.mxu0 %v1788
    %v1883 = vpop.f32.mrf.mxu0
    %v1884 = vadd.f32 %v1810, %v1883
    %v1885 = vpop.f32.mrf.mxu0
    %1886 = vdwg.mxu0
    %v1887 = vld [vmem:[%s8] sm:$0xff]
    %v1888 = vld [vmem:[%s8 + $0x8] sm:$0xff]
    %v1889 = vld [vmem:[%s8 + $0x10] sm:$0xff]
    %v1890 = vld [vmem:[%s8 + $0x18] sm:$0xff]
    %v1891 = vld [vmem:[%s8 + $0x20] sm:$0xff]
    %v1892 = vld [vmem:[%s8 + $0x28] sm:$0xff]
    %v1893 = vld [vmem:[%s8 + $0x30] sm:$0xff]
    %v1894 = vld [vmem:[%s8 + $0x38] sm:$0xff]
    %v1895 = vld [vmem:[%s8 + $0x40] sm:$0xff]
    %v1896 = vld [vmem:[%s8 + $0x48] sm:$0xff]
    %v1897 = vld [vmem:[%s8 + $0x50] sm:$0xff]
    %v1898 = vld [vmem:[%s8 + $0x58] sm:$0xff]
    %v1899 = vld [vmem:[%s8 + $0x60] sm:$0xff]
    %v1900 = vld [vmem:[%s8 + $0x68] sm:$0xff]
    %v1901 = vld [vmem:[%s8 + $0x70] sm:$0xff]
    %v1902 = vld [vmem:[%s8 + $0x78] sm:$0xff]
    %v1903 = vld [vmem:[%s9] sm:$0x1]
    %v1905 = vlaneseq
    %v1906 = vshrl.u32 %v1905, 7
    %v1907 = vsub.s32 0, %v1906
    %v1908 = vrot.slane %v1903, %v1907
    %1910 = vmatprep.subr.mxu0 0.0
    %1911 = vmatpush1.msra.mxu0 %v1902
    %1912 = vmatprep.subr.mxu0 0.0
    %1913 = vmatpush1.msra.mxu0 %v1901
    %1914 = vmatprep.subr.mxu0 0.0
    %1915 = vmatpush1.msra.mxu0 %v1900
    %1916 = vmatprep.subr.mxu0 0.0
    %1917 = vmatpush1.msra.mxu0 %v1899
    %1918 = vmatprep.subr.mxu0 0.0
    %1919 = vmatpush1.msra.mxu0 %v1898
    %1920 = vmatprep.subr.mxu0 0.0
    %1921 = vmatpush1.msra.mxu0 %v1897
    %1922 = vmatprep.subr.mxu0 0.0
    %1923 = vmatpush1.msra.mxu0 %v1896
    %1924 = vmatprep.subr.mxu0 0.0
    %1925 = vmatpush1.msra.mxu0 %v1895
    %1926 = vmatprep.subr.mxu0 0.0
    %1927 = vmatpush1.msra.mxu0 %v1894
    %1928 = vmatprep.subr.mxu0 0.0
    %1929 = vmatpush1.msra.mxu0 %v1893
    %1930 = vmatprep.subr.mxu0 0.0
    %1931 = vmatpush1.msra.mxu0 %v1892
    %1932 = vmatprep.subr.mxu0 0.0
    %1933 = vmatpush1.msra.mxu0 %v1891
    %1934 = vmatprep.subr.mxu0 0.0
    %1935 = vmatpush1.msra.mxu0 %v1890
    %1936 = vmatprep.subr.mxu0 0.0
    %1937 = vmatpush1.msra.mxu0 %v1889
    %1938 = vmatprep.subr.mxu0 0.0
    %1939 = vmatpush1.msra.mxu0 %v1888
    %1940 = vmatprep.subr.mxu0 0.0
    %1941 = vmatpush1.msra.mxu0 %v1887
    %1942 = vmatprep.subr.mxu0 0.0
    %1943 = vmatpush2.msra.mxu0 0.0
    %1944 = vmatprep.subr.mxu0 0.0
    %1945 = vmatpush2.msra.mxu0 0.0
    %1946 = vmatprep.subr.mxu0 0.0
    %1947 = vmatpush2.msra.mxu0 0.0
    %1948 = vmatprep.subr.mxu0 0.0
    %1949 = vmatpush2.msra.mxu0 0.0
    %1950 = vmatprep.subr.mxu0 0.0
    %1951 = vmatpush2.msra.mxu0 0.0
    %1952 = vmatprep.subr.mxu0 0.0
    %1953 = vmatpush2.msra.mxu0 0.0
    %1954 = vmatprep.subr.mxu0 0.0
    %1955 = vmatpush2.msra.mxu0 0.0
    %1956 = vmatprep.subr.mxu0 0.0
    %1957 = vmatpush2.msra.mxu0 0.0
    %1958 = vmatprep.subr.mxu0 0.0
    %1959 = vmatpush2.msra.mxu0 0.0
    %1960 = vmatprep.subr.mxu0 0.0
    %1961 = vmatpush2.msra.mxu0 0.0
    %1962 = vmatprep.subr.mxu0 0.0
    %1963 = vmatpush2.msra.mxu0 0.0
    %1964 = vmatprep.subr.mxu0 0.0
    %1965 = vmatpush2.msra.mxu0 0.0
    %1966 = vmatprep.subr.mxu0 0.0
    %1967 = vmatpush2.msra.mxu0 0.0
    %1968 = vmatprep.subr.mxu0 0.0
    %1969 = vmatpush2.msra.mxu0 0.0
    %1970 = vmatprep.subr.mxu0 0.0
    %1971 = vmatpush2.msra.mxu0 0.0
    %1972 = vmatprep.subr.mxu0 0.0
    %1973 = vmatpush2.msra.mxu0 0.0
    %1974 = vmatprep.mubr.f32.mxu0 0.0
    %1975 = vmatmul.mubr.f32.gmra.mxu0 %v1787
    %v1976 = vpop.f32.mrf.mxu0
    %v1977 = vadd.f32 %v1908, %v1976
    %v1978 = vpop.f32.mrf.mxu0
    %1979 = vmatprep.mubr.f32.mxu0 0.0
    %1980 = vmatmul.mubr.f32.gmra.mxu0 %v1788
    %v1981 = vpop.f32.mrf.mxu0
    %v1982 = vadd.f32 %v1908, %v1981
    %v1983 = vpop.f32.mrf.mxu0
    %1984 = vdwg.mxu0
    %v1985 = vld [vmem:[%s4] sm:$0xff]
    %v1986 = vld [vmem:[%s4 + $0x8] sm:$0xff]
    %v1987 = vld [vmem:[%s4 + $0x10] sm:$0xff]
    %v1988 = vld [vmem:[%s4 + $0x18] sm:$0xff]
    %v1989 = vld [vmem:[%s4 + $0x20] sm:$0xff]
    %v1990 = vld [vmem:[%s4 + $0x28] sm:$0xff]
    %v1991 = vld [vmem:[%s4 + $0x30] sm:$0xff]
    %v1992 = vld [vmem:[%s4 + $0x38] sm:$0xff]
    %v1993 = vld [vmem:[%s4 + $0x40] sm:$0xff]
    %v1994 = vld [vmem:[%s4 + $0x48] sm:$0xff]
    %v1995 = vld [vmem:[%s4 + $0x50] sm:$0xff]
    %v1996 = vld [vmem:[%s4 + $0x58] sm:$0xff]
    %v1997 = vld [vmem:[%s4 + $0x60] sm:$0xff]
    %v1998 = vld [vmem:[%s4 + $0x68] sm:$0xff]
    %v1999 = vld [vmem:[%s4 + $0x70] sm:$0xff]
    %v2000 = vld [vmem:[%s4 + $0x78] sm:$0xff]
    %v2001 = vld [vmem:[%s5] sm:$0x1]
    %v2003 = vlaneseq
    %v2004 = vshrl.u32 %v2003, 7
    %v2005 = vsub.s32 0, %v2004
    %v2006 = vrot.slane %v2001, %v2005
    %2008 = vmatprep.subr.mxu0 0.0
    %2009 = vmatpush1.msra.mxu0 %v2000
    %2010 = vmatprep.subr.mxu0 0.0
    %2011 = vmatpush1.msra.mxu0 %v1999
    %2012 = vmatprep.subr.mxu0 0.0
    %2013 = vmatpush1.msra.mxu0 %v1998
    %2014 = vmatprep.subr.mxu0 0.0
    %2015 = vmatpush1.msra.mxu0 %v1997
    %2016 = vmatprep.subr.mxu0 0.0
    %2017 = vmatpush1.msra.mxu0 %v1996
    %2018 = vmatprep.subr.mxu0 0.0
    %2019 = vmatpush1.msra.mxu0 %v1995
    %2020 = vmatprep.subr.mxu0 0.0
    %2021 = vmatpush1.msra.mxu0 %v1994
    %2022 = vmatprep.subr.mxu0 0.0
    %2023 = vmatpush1.msra.mxu0 %v1993
    %2024 = vmatprep.subr.mxu0 0.0
    %2025 = vmatpush1.msra.mxu0 %v1992
    %2026 = vmatprep.subr.mxu0 0.0
    %2027 = vmatpush1.msra.mxu0 %v1991
    %2028 = vmatprep.subr.mxu0 0.0
    %2029 = vmatpush1.msra.mxu0 %v1990
    %2030 = vmatprep.subr.mxu0 0.0
    %2031 = vmatpush1.msra.mxu0 %v1989
    %2032 = vmatprep.subr.mxu0 0.0
    %2033 = vmatpush1.msra.mxu0 %v1988
    %2034 = vmatprep.subr.mxu0 0.0
    %2035 = vmatpush1.msra.mxu0 %v1987
    %2036 = vmatprep.subr.mxu0 0.0
    %2037 = vmatpush1.msra.mxu0 %v1986
    %2038 = vmatprep.subr.mxu0 0.0
    %2039 = vmatpush1.msra.mxu0 %v1985
    %2040 = vmatprep.subr.mxu0 0.0
    %2041 = vmatpush2.msra.mxu0 0.0
    %2042 = vmatprep.subr.mxu0 0.0
    %2043 = vmatpush2.msra.mxu0 0.0
    %2044 = vmatprep.subr.mxu0 0.0
    %2045 = vmatpush2.msra.mxu0 0.0
    %2046 = vmatprep.subr.mxu0 0.0
    %2047 = vmatpush2.msra.mxu0 0.0
    %2048 = vmatprep.subr.mxu0 0.0
    %2049 = vmatpush2.msra.mxu0 0.0
    %2050 = vmatprep.subr.mxu0 0.0
    %2051 = vmatpush2.msra.mxu0 0.0
    %2052 = vmatprep.subr.mxu0 0.0
    %2053 = vmatpush2.msra.mxu0 0.0
    %2054 = vmatprep.subr.mxu0 0.0
    %2055 = vmatpush2.msra.mxu0 0.0
    %2056 = vmatprep.subr.mxu0 0.0
    %2057 = vmatpush2.msra.mxu0 0.0
    %2058 = vmatprep.subr.mxu0 0.0
    %2059 = vmatpush2.msra.mxu0 0.0
    %2060 = vmatprep.subr.mxu0 0.0
    %2061 = vmatpush2.msra.mxu0 0.0
    %2062 = vmatprep.subr.mxu0 0.0
    %2063 = vmatpush2.msra.mxu0 0.0
    %2064 = vmatprep.subr.mxu0 0.0
    %2065 = vmatpush2.msra.mxu0 0.0
    %2066 = vmatprep.subr.mxu0 0.0
    %2067 = vmatpush2.msra.mxu0 0.0
    %2068 = vmatprep.subr.mxu0 0.0
    %2069 = vmatpush2.msra.mxu0 0.0
    %2070 = vmatprep.subr.mxu0 0.0
    %2071 = vmatpush2.msra.mxu0 0.0
    %2072 = vmatprep.mubr.f32.mxu0 0.0
    %2073 = vmatmul.mubr.f32.gmra.mxu0 %v1784
    %v2074 = vpop.f32.mrf.mxu0
    %v2075 = vadd.f32 %v2006, %v2074
    %v2076 = vpop.f32.mrf.mxu0
    %2077 = vdwg.mxu0
    %v2078 = vld [vmem:[%s13] sm:$0xff]
    %v2079 = vld [vmem:[%s13 + $0x8] sm:$0xff]
    %v2080 = vld [vmem:[%s13 + $0x10] sm:$0xff]
    %v2081 = vld [vmem:[%s13 + $0x18] sm:$0xff]
    %v2082 = vld [vmem:[%s13 + $0x20] sm:$0xff]
    %v2083 = vld [vmem:[%s13 + $0x28] sm:$0xff]
    %v2084 = vld [vmem:[%s13 + $0x30] sm:$0xff]
    %v2085 = vld [vmem:[%s13 + $0x38] sm:$0xff]
    %v2086 = vld [vmem:[#allocation8] sm:$0xf]
    %v2087 = vld [vmem:[%s12] sm:$0xff]
    %v2088 = vlaneseq
    %v2089 = vshrl.u32 %v2088, 7
    %v2090 = vsub.s32 0, %v2089
    %v2091 = vrot.slane %v2075, %v2090
    %v2092 = vmul.f32 %v1879, %v2091
    %vm2093 = vcmask 523264
    %v2095 = vsel %vm2093, %v2092, 0
    %2097 = vmatprep.subr.mxu0 0.0
    %2098 = vmatpush1.msra.mxu0 0.0
    %2099 = vmatprep.subr.mxu0 0.0
    %2100 = vmatpush1.msra.mxu0 0.0
    %2101 = vmatprep.subr.mxu0 0.0
    %2102 = vmatpush1.msra.mxu0 0.0
    %2103 = vmatprep.subr.mxu0 0.0
    %2104 = vmatpush1.msra.mxu0 0.0
    %2105 = vmatprep.subr.mxu0 0.0
    %2106 = vmatpush1.msra.mxu0 0.0
    %2107 = vmatprep.subr.mxu0 0.0
    %2108 = vmatpush1.msra.mxu0 0.0
    %2109 = vmatprep.subr.mxu0 0.0
    %2110 = vmatpush1.msra.mxu0 0.0
    %2111 = vmatprep.subr.mxu0 0.0
    %2112 = vmatpush1.msra.mxu0 0.0
    %2113 = vmatprep.subr.mxu0 0.0
    %2114 = vmatpush1.msra.mxu0 %v2085
    %2115 = vmatprep.subr.mxu0 0.0
    %2116 = vmatpush1.msra.mxu0 %v2084
    %2117 = vmatprep.subr.mxu0 0.0
    %2118 = vmatpush1.msra.mxu0 %v2083
    %2119 = vmatprep.subr.mxu0 0.0
    %2120 = vmatpush1.msra.mxu0 %v2082
    %2121 = vmatprep.subr.mxu0 0.0
    %2122 = vmatpush1.msra.mxu0 %v2081
    %2123 = vmatprep.subr.mxu0 0.0
    %2124 = vmatpush1.msra.mxu0 %v2080
    %2125 = vmatprep.subr.mxu0 0.0
    %2126 = vmatpush1.msra.mxu0 %v2079
    %2127 = vmatprep.subr.mxu0 0.0
    %2128 = vmatpush1.msra.mxu0 %v2078
    %2129 = vmatprep.subr.mxu0 0.0
    %2130 = vmatpush2.msra.mxu0 0.0
    %2131 = vmatprep.subr.mxu0 0.0
    %2132 = vmatpush2.msra.mxu0 0.0
    %2133 = vmatprep.subr.mxu0 0.0
    %2134 = vmatpush2.msra.mxu0 0.0
    %2135 = vmatprep.subr.mxu0 0.0
    %2136 = vmatpush2.msra.mxu0 0.0
    %2137 = vmatprep.subr.mxu0 0.0
    %2138 = vmatpush2.msra.mxu0 0.0
    %2139 = vmatprep.subr.mxu0 0.0
    %2140 = vmatpush2.msra.mxu0 0.0
    %2141 = vmatprep.subr.mxu0 0.0
    %2142 = vmatpush2.msra.mxu0 0.0
    %2143 = vmatprep.subr.mxu0 0.0
    %2144 = vmatpush2.msra.mxu0 0.0
    %2145 = vmatprep.subr.mxu0 0.0
    %2146 = vmatpush2.msra.mxu0 0.0
    %2147 = vmatprep.subr.mxu0 0.0
    %2148 = vmatpush2.msra.mxu0 0.0
    %2149 = vmatprep.subr.mxu0 0.0
    %2150 = vmatpush2.msra.mxu0 0.0
    %2151 = vmatprep.subr.mxu0 0.0
    %2152 = vmatpush2.msra.mxu0 0.0
    %2153 = vmatprep.subr.mxu0 0.0
    %2154 = vmatpush2.msra.mxu0 0.0
    %2155 = vmatprep.subr.mxu0 0.0
    %2156 = vmatpush2.msra.mxu0 0.0
    %2157 = vmatprep.subr.mxu0 0.0
    %2158 = vmatpush2.msra.mxu0 0.0
    %2159 = vmatprep.subr.mxu0 0.0
    %2160 = vmatpush2.msra.mxu0 0.0
    %2161 = vmatprep.mubr.f32.mxu0 0.0
    %2162 = vmatmul.mubr.f32.gmra.mxu0 %v2095
    %v2163 = vpop.f32.mrf.mxu0
    %v2164 = vadd.f32 0.0, %v2163
    %v2165 = vpop.f32.mrf.mxu0
    %2166 = vdwg.mxu0
    %v2167 = vmul.f32 %v2164, 0.25
    %v2168 = vmul.f32 %v2167, %v2087
    %vm2169 = vcmask 31744
    %v2170 = vsel %vm2169, %v2168, -inf
    %v2171 = vrot.slane %v2170, 4
    %v2172 = vmax.f32 %v2170, %v2171
    %v2173 = vrot.slane %v2172, 2
    %v2174 = vmax.f32 %v2172, %v2173
    %v2175 = vrot.slane %v2174, 1
    %v2176 = vmax.f32 %v2174, %v2175
    %v2177 = vsub.f32 %v2168, %v2176
    %v2178 = vmul.f32 %v2177, 1.442695
    %v2179 = vpow.pop %v2178
    %v2180 = vsel %vm2169, %v2179, 0.0
    %v2181 = vrot.slane %v2180, 4
    %v2182 = vadd.f32 %v2180, %v2181
    %v2183 = vrot.slane %v2182, 2
    %v2184 = vadd.f32 %v2182, %v2183
    %v2185 = vrot.slane %v2184, 1
    %v2186 = vadd.f32 %v2184, %v2185
    %v2187 = vrcp.pop %v2186
    %v2188 = vmul.f32 %v2179, %v2187
    %v2190 = vsel %vm2169, %v2188, 0
    %vm2192 = vcmask 1043456
    %v2194 = vsel %vm2192, %v2086, 0
    %2196 = vmatprep.subr.mxu0 0.0
    %2197 = vmatpush1.msra.mxu0 0.0
    %2198 = vmatprep.subr.mxu0 0.0
    %2199 = vmatpush1.msra.mxu0 0.0
    %2200 = vmatprep.subr.mxu0 0.0
    %2201 = vmatpush1.msra.mxu0 0.0
    %2202 = vmatprep.subr.mxu0 0.0
    %2203 = vmatpush1.msra.mxu0 0.0
    %2204 = vmatprep.subr.mxu0 0.0
    %2205 = vmatpush1.msra.mxu0 0.0
    %2206 = vmatprep.subr.mxu0 0.0
    %2207 = vmatpush1.msra.mxu0 0.0
    %2208 = vmatprep.subr.mxu0 0.0
    %2209 = vmatpush1.msra.mxu0 0.0
    %2210 = vmatprep.subr.mxu0 0.0
    %2211 = vmatpush1.msra.mxu0 0.0
    %2212 = vmatprep.subr.mxu0 0.0
    %2213 = vmatpush1.msra.mxu0 0.0
    %2214 = vmatprep.subr.mxu0 0.0
    %2215 = vmatpush1.msra.mxu0 0.0
    %2216 = vmatprep.subr.mxu0 0.0
    %2217 = vmatpush1.msra.mxu0 0.0
    %2218 = vmatprep.subr.mxu0 0.0
    %2219 = vmatpush1.msra.mxu0 0.0
    %2220 = vmatprep.subr.mxu0 0.0
    %2221 = vmatpush1.msra.mxu0 0.0
    %2222 = vmatprep.subr.mxu0 0.0
    %2223 = vmatpush1.msra.mxu0 0.0
    %2224 = vmatprep.subr.mxu0 0.0
    %2225 = vmatpush1.msra.mxu0 0.0
    %2226 = vmatprep.subr.mxu0 0.0
    %2227 = vmatpush1.msra.mxu0 %v2194
    %2228 = vmatprep.subr.mxu0 0.0
    %2229 = vmatpush2.msra.mxu0 0.0
    %2230 = vmatprep.subr.mxu0 0.0
    %2231 = vmatpush2.msra.mxu0 0.0
    %2232 = vmatprep.subr.mxu0 0.0
    %2233 = vmatpush2.msra.mxu0 0.0
    %2234 = vmatprep.subr.mxu0 0.0
    %2235 = vmatpush2.msra.mxu0 0.0
    %2236 = vmatprep.subr.mxu0 0.0
    %2237 = vmatpush2.msra.mxu0 0.0
    %2238 = vmatprep.subr.mxu0 0.0
    %2239 = vmatpush2.msra.mxu0 0.0
    %2240 = vmatprep.subr.mxu0 0.0
    %2241 = vmatpush2.msra.mxu0 0.0
    %2242 = vmatprep.subr.mxu0 0.0
    %2243 = vmatpush2.msra.mxu0 0.0
    %2244 = vmatprep.subr.mxu0 0.0
    %2245 = vmatpush2.msra.mxu0 0.0
    %2246 = vmatprep.subr.mxu0 0.0
    %2247 = vmatpush2.msra.mxu0 0.0
    %2248 = vmatprep.subr.mxu0 0.0
    %2249 = vmatpush2.msra.mxu0 0.0
    %2250 = vmatprep.subr.mxu0 0.0
    %2251 = vmatpush2.msra.mxu0 0.0
    %2252 = vmatprep.subr.mxu0 0.0
    %2253 = vmatpush2.msra.mxu0 0.0
    %2254 = vmatprep.subr.mxu0 0.0
    %2255 = vmatpush2.msra.mxu0 0.0
    %2256 = vmatprep.subr.mxu0 0.0
    %2257 = vmatpush2.msra.mxu0 0.0
    %2258 = vmatprep.subr.mxu0 0.0
    %2259 = vmatpush2.msra.mxu0 0.0
    %2260 = vmatprep.mubr.f32.mxu0 0.0
    %2261 = vmatmul.mubr.f32.gmra.mxu0 %v2190
    %v2262 = vpop.f32.mrf.mxu0
    %v2263 = vadd.f32 0.0, %v2262
    %v2264 = vpop.f32.mrf.mxu0
    %2265 = vdwg.mxu0
    %v2266 = vmul.f32 %v2263, %v1977
    %vm2267 = vcmask 64512
    %v2269 = vsel %vm2267, 1.0, 0
    %2271 = vmatprep.subr.mxu0 0.0
    %2272 = vmatpush1.msra.mxu0 0.0
    %2273 = vmatprep.subr.mxu0 0.0
    %2274 = vmatpush1.msra.mxu0 0.0
    %2275 = vmatprep.subr.mxu0 0.0
    %2276 = vmatpush1.msra.mxu0 0.0
    %2277 = vmatprep.subr.mxu0 0.0
    %2278 = vmatpush1.msra.mxu0 0.0
    %2279 = vmatprep.subr.mxu0 0.0
    %2280 = vmatpush1.msra.mxu0 0.0
    %2281 = vmatprep.subr.mxu0 0.0
    %2282 = vmatpush1.msra.mxu0 0.0
    %2283 = vmatprep.subr.mxu0 0.0
    %2284 = vmatpush1.msra.mxu0 0.0
    %2285 = vmatprep.subr.mxu0 0.0
    %2286 = vmatpush1.msra.mxu0 0.0
    %2287 = vmatprep.subr.mxu0 0.0
    %2288 = vmatpush1.msra.mxu0 0.0
    %2289 = vmatprep.subr.mxu0 0.0
    %2290 = vmatpush1.msra.mxu0 0.0
    %2291 = vmatprep.subr.mxu0 0.0
    %2292 = vmatpush1.msra.mxu0 0.0
    %2293 = vmatprep.subr.mxu0 0.0
    %2294 = vmatpush1.msra.mxu0 0.0
    %2295 = vmatprep.subr.mxu0 0.0
    %2296 = vmatpush1.msra.mxu0 0.0
    %2297 = vmatprep.subr.mxu0 0.0
    %2298 = vmatpush1.msra.mxu0 0.0
    %2299 = vmatprep.subr.mxu0 0.0
    %2300 = vmatpush1.msra.mxu0 0.0
    %2301 = vmatprep.subr.mxu0 0.0
    %2302 = vmatpush1.msra.mxu0 %v2266
    %2303 = vmatprep.subr.mxu0 0.0
    %2304 = vmatpush2.msra.mxu0 0.0
    %2305 = vmatprep.subr.mxu0 0.0
    %2306 = vmatpush2.msra.mxu0 0.0
    %2307 = vmatprep.subr.mxu0 0.0
    %2308 = vmatpush2.msra.mxu0 0.0
    %2309 = vmatprep.subr.mxu0 0.0
    %2310 = vmatpush2.msra.mxu0 0.0
    %2311 = vmatprep.subr.mxu0 0.0
    %2312 = vmatpush2.msra.mxu0 0.0
    %2313 = vmatprep.subr.mxu0 0.0
    %2314 = vmatpush2.msra.mxu0 0.0
    %2315 = vmatprep.subr.mxu0 0.0
    %2316 = vmatpush2.msra.mxu0 0.0
    %2317 = vmatprep.subr.mxu0 0.0
    %2318 = vmatpush2.msra.mxu0 0.0
    %2319 = vmatprep.subr.mxu0 0.0
    %2320 = vmatpush2.msra.mxu0 0.0
    %2321 = vmatprep.subr.mxu0 0.0
    %2322 = vmatpush2.msra.mxu0 0.0
    %2323 = vmatprep.subr.mxu0 0.0
    %2324 = vmatpush2.msra.mxu0 0.0
    %2325 = vmatprep.subr.mxu0 0.0
    %2326 = vmatpush2.msra.mxu0 0.0
    %2327 = vmatprep.subr.mxu0 0.0
    %2328 = vmatpush2.msra.mxu0 0.0
    %2329 = vmatprep.subr.mxu0 0.0
    %2330 = vmatpush2.msra.mxu0 0.0
    %2331 = vmatprep.subr.mxu0 0.0
    %2332 = vmatpush2.msra.mxu0 0.0
    %2333 = vmatprep.subr.mxu0 0.0
    %2334 = vmatpush2.msra.mxu0 0.0
    %2335 = vmatprep.mubr.f32.mxu0 0.0
    %2336 = vmatmul.mubr.f32.gmra.mxu0 %v2269
    %v2337 = vpop.f32.mrf.mxu0
    %v2338 = vadd.f32 0.0, %v2337
    %v2339 = vpop.f32.mrf.mxu0
    %2340 = vdwg.mxu0
    %v2341 = vlaneseq
    %v2342 = vshrl.u32 %v2341, 7
    %v2343 = vsub.s32 1, %v2342
    %v2344 = vrot.slane %v2075, %v2343
    %v2345 = vmul.f32 %v1884, %v2344
    %v2347 = vsel %vm2093, %v2345, 0
    %2349 = vmatprep.subr.mxu0 0.0
    %2350 = vmatpush1.msra.mxu0 0.0
    %2351 = vmatprep.subr.mxu0 0.0
    %2352 = vmatpush1.msra.mxu0 0.0
    %2353 = vmatprep.subr.mxu0 0.0
    %2354 = vmatpush1.msra.mxu0 0.0
    %2355 = vmatprep.subr.mxu0 0.0
    %2356 = vmatpush1.msra.mxu0 0.0
    %2357 = vmatprep.subr.mxu0 0.0
    %2358 = vmatpush1.msra.mxu0 0.0
    %2359 = vmatprep.subr.mxu0 0.0
    %2360 = vmatpush1.msra.mxu0 0.0
    %2361 = vmatprep.subr.mxu0 0.0
    %2362 = vmatpush1.msra.mxu0 0.0
    %2363 = vmatprep.subr.mxu0 0.0
    %2364 = vmatpush1.msra.mxu0 0.0
    %2365 = vmatprep.subr.mxu0 0.0
    %2366 = vmatpush1.msra.mxu0 %v2085
    %2367 = vmatprep.subr.mxu0 0.0
    %2368 = vmatpush1.msra.mxu0 %v2084
    %2369 = vmatprep.subr.mxu0 0.0
    %2370 = vmatpush1.msra.mxu0 %v2083
    %2371 = vmatprep.subr.mxu0 0.0
    %2372 = vmatpush1.msra.mxu0 %v2082
    %2373 = vmatprep.subr.mxu0 0.0
    %2374 = vmatpush1.msra.mxu0 %v2081
    %2375 = vmatprep.subr.mxu0 0.0
    %2376 = vmatpush1.msra.mxu0 %v2080
    %2377 = vmatprep.subr.mxu0 0.0
    %2378 = vmatpush1.msra.mxu0 %v2079
    %2379 = vmatprep.subr.mxu0 0.0
    %2380 = vmatpush1.msra.mxu0 %v2078
    %2381 = vmatprep.subr.mxu0 0.0
    %2382 = vmatpush2.msra.mxu0 0.0
    %2383 = vmatprep.subr.mxu0 0.0
    %2384 = vmatpush2.msra.mxu0 0.0
    %2385 = vmatprep.subr.mxu0 0.0
    %2386 = vmatpush2.msra.mxu0 0.0
    %2387 = vmatprep.subr.mxu0 0.0
    %2388 = vmatpush2.msra.mxu0 0.0
    %2389 = vmatprep.subr.mxu0 0.0
    %2390 = vmatpush2.msra.mxu0 0.0
    %2391 = vmatprep.subr.mxu0 0.0
    %2392 = vmatpush2.msra.mxu0 0.0
    %2393 = vmatprep.subr.mxu0 0.0
    %2394 = vmatpush2.msra.mxu0 0.0
    %2395 = vmatprep.subr.mxu0 0.0
    %2396 = vmatpush2.msra.mxu0 0.0
    %2397 = vmatprep.subr.mxu0 0.0
    %2398 = vmatpush2.msra.mxu0 0.0
    %2399 = vmatprep.subr.mxu0 0.0
    %2400 = vmatpush2.msra.mxu0 0.0
    %2401 = vmatprep.subr.mxu0 0.0
    %2402 = vmatpush2.msra.mxu0 0.0
    %2403 = vmatprep.subr.mxu0 0.0
    %2404 = vmatpush2.msra.mxu0 0.0
    %2405 = vmatprep.subr.mxu0 0.0
    %2406 = vmatpush2.msra.mxu0 0.0
    %2407 = vmatprep.subr.mxu0 0.0
    %2408 = vmatpush2.msra.mxu0 0.0
    %2409 = vmatprep.subr.mxu0 0.0
    %2410 = vmatpush2.msra.mxu0 0.0
    %2411 = vmatprep.subr.mxu0 0.0
    %2412 = vmatpush2.msra.mxu0 0.0
    %2413 = vmatprep.mubr.f32.mxu0 0.0
    %2414 = vmatmul.mubr.f32.gmra.mxu0 %v2347
    %v2415 = vpop.f32.mrf.mxu0
    %v2416 = vadd.f32 0.0, %v2415
    %v2417 = vpop.f32.mrf.mxu0
    %2418 = vdwg.mxu0
    %v2419 = vmul.f32 %v2416, 0.25
    %v2420 = vmul.f32 %v2419, %v2087
    %v2421 = vsel %vm2169, %v2420, -inf
    %v2422 = vrot.slane %v2421, 4
    %v2423 = vmax.f32 %v2421, %v2422
    %v2424 = vrot.slane %v2423, 2
    %v2425 = vmax.f32 %v2423, %v2424
    %v2426 = vrot.slane %v2425, 1
    %v2427 = vmax.f32 %v2425, %v2426
    %v2428 = vsub.f32 %v2420, %v2427
    %v2429 = vmul.f32 %v2428, 1.442695
    %v2430 = vpow.pop %v2429
    %v2431 = vsel %vm2169, %v2430, 0.0
    %v2432 = vrot.slane %v2431, 4
    %v2433 = vadd.f32 %v2431, %v2432
    %v2434 = vrot.slane %v2433, 2
    %v2435 = vadd.f32 %v2433, %v2434
    %v2436 = vrot.slane %v2435, 1
    %v2437 = vadd.f32 %v2435, %v2436
    %v2438 = vrcp.pop %v2437
    %v2439 = vmul.f32 %v2430, %v2438
    %v2441 = vsel %vm2169, %v2439, 0
    %2443 = vmatprep.subr.mxu0 0.0
    %2444 = vmatpush1.msra.mxu0 0.0
    %2445 = vmatprep.subr.mxu0 0.0
    %2446 = vmatpush1.msra.mxu0 0.0
    %2447 = vmatprep.subr.mxu0 0.0
    %2448 = vmatpush1.msra.mxu0 0.0
    %2449 = vmatprep.subr.mxu0 0.0
    %2450 = vmatpush1.msra.mxu0 0.0
    %2451 = vmatprep.subr.mxu0 0.0
    %2452 = vmatpush1.msra.mxu0 0.0
    %2453 = vmatprep.subr.mxu0 0.0
    %2454 = vmatpush1.msra.mxu0 0.0
    %2455 = vmatprep.subr.mxu0 0.0
    %2456 = vmatpush1.msra.mxu0 0.0
    %2457 = vmatprep.subr.mxu0 0.0
    %2458 = vmatpush1.msra.mxu0 0.0
    %2459 = vmatprep.subr.mxu0 0.0
    %2460 = vmatpush1.msra.mxu0 0.0
    %2461 = vmatprep.subr.mxu0 0.0
    %2462 = vmatpush1.msra.mxu0 0.0
    %2463 = vmatprep.subr.mxu0 0.0
    %2464 = vmatpush1.msra.mxu0 0.0
    %2465 = vmatprep.subr.mxu0 0.0
    %2466 = vmatpush1.msra.mxu0 0.0
    %2467 = vmatprep.subr.mxu0 0.0
    %2468 = vmatpush1.msra.mxu0 0.0
    %2469 = vmatprep.subr.mxu0 0.0
    %2470 = vmatpush1.msra.mxu0 0.0
    %2471 = vmatprep.subr.mxu0 0.0
    %2472 = vmatpush1.msra.mxu0 0.0
    %2473 = vmatprep.subr.mxu0 0.0
    %2474 = vmatpush1.msra.mxu0 %v2194
    %2475 = vmatprep.subr.mxu0 0.0
    %2476 = vmatpush2.msra.mxu0 0.0
    %2477 = vmatprep.subr.mxu0 0.0
    %2478 = vmatpush2.msra.mxu0 0.0
    %2479 = vmatprep.subr.mxu0 0.0
    %2480 = vmatpush2.msra.mxu0 0.0
    %2481 = vmatprep.subr.mxu0 0.0
    %2482 = vmatpush2.msra.mxu0 0.0
    %2483 = vmatprep.subr.mxu0 0.0
    %2484 = vmatpush2.msra.mxu0 0.0
    %2485 = vmatprep.subr.mxu0 0.0
    %2486 = vmatpush2.msra.mxu0 0.0
    %2487 = vmatprep.subr.mxu0 0.0
    %2488 = vmatpush2.msra.mxu0 0.0
    %2489 = vmatprep.subr.mxu0 0.0
    %2490 = vmatpush2.msra.mxu0 0.0
    %2491 = vmatprep.subr.mxu0 0.0
    %2492 = vmatpush2.msra.mxu0 0.0
    %2493 = vmatprep.subr.mxu0 0.0
    %2494 = vmatpush2.msra.mxu0 0.0
    %2495 = vmatprep.subr.mxu0 0.0
    %2496 = vmatpush2.msra.mxu0 0.0
    %2497 = vmatprep.subr.mxu0 0.0
    %2498 = vmatpush2.msra.mxu0 0.0
    %2499 = vmatprep.subr.mxu0 0.0
    %2500 = vmatpush2.msra.mxu0 0.0
    %2501 = vmatprep.subr.mxu0 0.0
    %2502 = vmatpush2.msra.mxu0 0.0
    %2503 = vmatprep.subr.mxu0 0.0
    %2504 = vmatpush2.msra.mxu0 0.0
    %2505 = vmatprep.subr.mxu0 0.0
    %2506 = vmatpush2.msra.mxu0 0.0
    %2507 = vmatprep.mubr.f32.mxu0 0.0
    %2508 = vmatmul.mubr.f32.gmra.mxu0 %v2441
    %v2509 = vpop.f32.mrf.mxu0
    %v2510 = vadd.f32 0.0, %v2509
    %v2511 = vpop.f32.mrf.mxu0
    %2512 = vdwg.mxu0
    %v2513 = vmul.f32 %v2510, %v1982
    %2514 = vmatprep.subr.mxu0 0.0
    %2515 = vmatpush1.msra.mxu0 0.0
    %2516 = vmatprep.subr.mxu0 0.0
    %2517 = vmatpush1.msra.mxu0 0.0
    %2518 = vmatprep.subr.mxu0 0.0
    %2519 = vmatpush1.msra.mxu0 0.0
    %2520 = vmatprep.subr.mxu0 0.0
    %2521 = vmatpush1.msra.mxu0 0.0
    %2522 = vmatprep.subr.mxu0 0.0
    %2523 = vmatpush1.msra.mxu0 0.0
    %2524 = vmatprep.subr.mxu0 0.0
    %2525 = vmatpush1.msra.mxu0 0.0
    %2526 = vmatprep.subr.mxu0 0.0
    %2527 = vmatpush1.msra.mxu0 0.0
    %2528 = vmatprep.subr.mxu0 0.0
    %2529 = vmatpush1.msra.mxu0 0.0
    %2530 = vmatprep.subr.mxu0 0.0
    %2531 = vmatpush1.msra.mxu0 0.0
    %2532 = vmatprep.subr.mxu0 0.0
    %2533 = vmatpush1.msra.mxu0 0.0
    %2534 = vmatprep.subr.mxu0 0.0
    %2535 = vmatpush1.msra.mxu0 0.0
    %2536 = vmatprep.subr.mxu0 0.0
    %2537 = vmatpush1.msra.mxu0 0.0
    %2538 = vmatprep.subr.mxu0 0.0
    %2539 = vmatpush1.msra.mxu0 0.0
    %2540 = vmatprep.subr.mxu0 0.0
    %2541 = vmatpush1.msra.mxu0 0.0
    %2542 = vmatprep.subr.mxu0 0.0
    %2543 = vmatpush1.msra.mxu0 0.0
    %2544 = vmatprep.subr.mxu0 0.0
    %2545 = vmatpush1.msra.mxu0 %v2513
    %2546 = vmatprep.subr.mxu0 0.0
    %2547 = vmatpush2.msra.mxu0 0.0
    %2548 = vmatprep.subr.mxu0 0.0
    %2549 = vmatpush2.msra.mxu0 0.0
    %2550 = vmatprep.subr.mxu0 0.0
    %2551 = vmatpush2.msra.mxu0 0.0
    %2552 = vmatprep.subr.mxu0 0.0
    %2553 = vmatpush2.msra.mxu0 0.0
    %2554 = vmatprep.subr.mxu0 0.0
    %2555 = vmatpush2.msra.mxu0 0.0
    %2556 = vmatprep.subr.mxu0 0.0
    %2557 = vmatpush2.msra.mxu0 0.0
    %2558 = vmatprep.subr.mxu0 0.0
    %2559 = vmatpush2.msra.mxu0 0.0
    %2560 = vmatprep.subr.mxu0 0.0
    %2561 = vmatpush2.msra.mxu0 0.0
    %2562 = vmatprep.subr.mxu0 0.0
    %2563 = vmatpush2.msra.mxu0 0.0
    %2564 = vmatprep.subr.mxu0 0.0
    %2565 = vmatpush2.msra.mxu0 0.0
    %2566 = vmatprep.subr.mxu0 0.0
    %2567 = vmatpush2.msra.mxu0 0.0
    %2568 = vmatprep.subr.mxu0 0.0
    %2569 = vmatpush2.msra.mxu0 0.0
    %2570 = vmatprep.subr.mxu0 0.0
    %2571 = vmatpush2.msra.mxu0 0.0
    %2572 = vmatprep.subr.mxu0 0.0
    %2573 = vmatpush2.msra.mxu0 0.0
    %2574 = vmatprep.subr.mxu0 0.0
    %2575 = vmatpush2.msra.mxu0 0.0
    %2576 = vmatprep.subr.mxu0 0.0
    %2577 = vmatpush2.msra.mxu0 0.0
    %2578 = vmatprep.mubr.f32.mxu0 0.0
    %2579 = vmatmul.mubr.f32.gmra.mxu0 %v2269
    %v2580 = vpop.f32.mrf.mxu0
    %v2581 = vadd.f32 0.0, %v2580
    %v2582 = vpop.f32.mrf.mxu0
    %2583 = vdwg.mxu0
    %v2585 = vrot.slane %v2581, 7
    %vm2587 = vcmask 1040384
    %v2588 = vsel %vm2587, %v2338, %v2585
    %v2589 = vld [vmem:[#allocation5] sm:$0xff]
    %v2590 = vld [vmem:[#allocation5 + $0x8] sm:$0xff]
    %v2591 = vld [vmem:[#allocation5 + $0x10] sm:$0xff]
    %v2592 = vld [vmem:[#allocation5 + $0x18] sm:$0xff]
    %v2593 = vld [vmem:[#allocation5 + $0x20] sm:$0xff]
    %v2594 = vld [vmem:[#allocation5 + $0x28] sm:$0xff]
    %v2595 = vld [vmem:[#allocation5 + $0x30] sm:$0xff]
    %v2596 = vld [vmem:[#allocation5 + $0x38] sm:$0xff]
    %v2597 = vld [vmem:[#allocation7] sm:$0x1]
    %v2599 = vlaneseq
    %v2600 = vshrl.u32 %v2599, 7
    %v2601 = vsub.s32 0, %v2600
    %v2602 = vrot.slane %v2597, %v2601
    %v2605 = vsel %vm2093, %v2588, 0
    %2607 = vmatprep.subr.mxu0 0.0
    %2608 = vmatpush1.msra.mxu0 0.0
    %2609 = vmatprep.subr.mxu0 0.0
    %2610 = vmatpush1.msra.mxu0 0.0
    %2611 = vmatprep.subr.mxu0 0.0
    %2612 = vmatpush1.msra.mxu0 0.0
    %2613 = vmatprep.subr.mxu0 0.0
    %2614 = vmatpush1.msra.mxu0 0.0
    %2615 = vmatprep.subr.mxu0 0.0
    %2616 = vmatpush1.msra.mxu0 0.0
    %2617 = vmatprep.subr.mxu0 0.0
    %2618 = vmatpush1.msra.mxu0 0.0
    %2619 = vmatprep.subr.mxu0 0.0
    %2620 = vmatpush1.msra.mxu0 0.0
    %2621 = vmatprep.subr.mxu0 0.0
    %2622 = vmatpush1.msra.mxu0 0.0
    %2623 = vmatprep.subr.mxu0 0.0
    %2624 = vmatpush1.msra.mxu0 %v2596
    %2625 = vmatprep.subr.mxu0 0.0
    %2626 = vmatpush1.msra.mxu0 %v2595
    %2627 = vmatprep.subr.mxu0 0.0
    %2628 = vmatpush1.msra.mxu0 %v2594
    %2629 = vmatprep.subr.mxu0 0.0
    %2630 = vmatpush1.msra.mxu0 %v2593
    %2631 = vmatprep.subr.mxu0 0.0
    %2632 = vmatpush1.msra.mxu0 %v2592
    %2633 = vmatprep.subr.mxu0 0.0
    %2634 = vmatpush1.msra.mxu0 %v2591
    %2635 = vmatprep.subr.mxu0 0.0
    %2636 = vmatpush1.msra.mxu0 %v2590
    %2637 = vmatprep.subr.mxu0 0.0
    %2638 = vmatpush1.msra.mxu0 %v2589
    %2639 = vmatprep.subr.mxu0 0.0
    %2640 = vmatpush2.msra.mxu0 0.0
    %2641 = vmatprep.subr.mxu0 0.0
    %2642 = vmatpush2.msra.mxu0 0.0
    %2643 = vmatprep.subr.mxu0 0.0
    %2644 = vmatpush2.msra.mxu0 0.0
    %2645 = vmatprep.subr.mxu0 0.0
    %2646 = vmatpush2.msra.mxu0 0.0
    %2647 = vmatprep.subr.mxu0 0.0
    %2648 = vmatpush2.msra.mxu0 0.0
    %2649 = vmatprep.subr.mxu0 0.0
    %2650 = vmatpush2.msra.mxu0 0.0
    %2651 = vmatprep.subr.mxu0 0.0
    %2652 = vmatpush2.msra.mxu0 0.0
    %2653 = vmatprep.subr.mxu0 0.0
    %2654 = vmatpush2.msra.mxu0 0.0
    %2655 = vmatprep.subr.mxu0 0.0
    %2656 = vmatpush2.msra.mxu0 0.0
    %2657 = vmatprep.subr.mxu0 0.0
    %2658 = vmatpush2.msra.mxu0 0.0
    %2659 = vmatprep.subr.mxu0 0.0
    %2660 = vmatpush2.msra.mxu0 0.0
    %2661 = vmatprep.subr.mxu0 0.0
    %2662 = vmatpush2.msra.mxu0 0.0
    %2663 = vmatprep.subr.mxu0 0.0
    %2664 = vmatpush2.msra.mxu0 0.0
    %2665 = vmatprep.subr.mxu0 0.0
    %2666 = vmatpush2.msra.mxu0 0.0
    %2667 = vmatprep.subr.mxu0 0.0
    %2668 = vmatpush2.msra.mxu0 0.0
    %2669 = vmatprep.subr.mxu0 0.0
    %2670 = vmatpush2.msra.mxu0 0.0
    %2671 = vmatprep.mubr.f32.mxu0 0.0
    %2672 = vmatmul.mubr.f32.gmra.mxu0 %v2605
    %v2673 = vpop.f32.mrf.mxu0
    %v2674 = vadd.f32 %v2602, %v2673
    %v2675 = vpop.f32.mrf.mxu0
    %2676 = vdwg.mxu0
    %v2677 = vld [vmem:[#allocation10] sm:$0xff]
    %v2678 = vld [vmem:[#allocation10 + $0x8] sm:$0xff]
    %v2679 = vld [vmem:[#allocation10 + $0x10] sm:$0xff]
    %v2680 = vld [vmem:[#allocation10 + $0x18] sm:$0xff]
    %v2681 = vld [vmem:[#allocation10 + $0x20] sm:$0xff]
    %v2682 = vld [vmem:[#allocation10 + $0x28] sm:$0xff]
    %v2683 = vld [vmem:[#allocation10 + $0x30] sm:$0xff]
    %v2684 = vld [vmem:[#allocation10 + $0x38] sm:$0xff]
    %v2685 = vld [vmem:[#allocation11] sm:$0x1]
    %v2687 = vlaneseq
    %v2688 = vshrl.u32 %v2687, 7
    %v2689 = vsub.s32 0, %v2688
    %v2690 = vrot.slane %v2685, %v2689
    %v2693 = vsel %vm2093, %v2674, 0
    %2695 = vmatprep.subr.mxu0 0.0
    %2696 = vmatpush1.msra.mxu0 0.0
    %2697 = vmatprep.subr.mxu0 0.0
    %2698 = vmatpush1.msra.mxu0 0.0
    %2699 = vmatprep.subr.mxu0 0.0
    %2700 = vmatpush1.msra.mxu0 0.0
    %2701 = vmatprep.subr.mxu0 0.0
    %2702 = vmatpush1.msra.mxu0 0.0
    %2703 = vmatprep.subr.mxu0 0.0
    %2704 = vmatpush1.msra.mxu0 0.0
    %2705 = vmatprep.subr.mxu0 0.0
    %2706 = vmatpush1.msra.mxu0 0.0
    %2707 = vmatprep.subr.mxu0 0.0
    %2708 = vmatpush1.msra.mxu0 0.0
    %2709 = vmatprep.subr.mxu0 0.0
    %2710 = vmatpush1.msra.mxu0 0.0
    %2711 = vmatprep.subr.mxu0 0.0
    %2712 = vmatpush1.msra.mxu0 %v2684
    %2713 = vmatprep.subr.mxu0 0.0
    %2714 = vmatpush1.msra.mxu0 %v2683
    %2715 = vmatprep.subr.mxu0 0.0
    %2716 = vmatpush1.msra.mxu0 %v2682
    %2717 = vmatprep.subr.mxu0 0.0
    %2718 = vmatpush1.msra.mxu0 %v2681
    %2719 = vmatprep.subr.mxu0 0.0
    %2720 = vmatpush1.msra.mxu0 %v2680
    %2721 = vmatprep.subr.mxu0 0.0
    %2722 = vmatpush1.msra.mxu0 %v2679
    %2723 = vmatprep.subr.mxu0 0.0
    %2724 = vmatpush1.msra.mxu0 %v2678
    %2725 = vmatprep.subr.mxu0 0.0
    %2726 = vmatpush1.msra.mxu0 %v2677
    %2727 = vmatprep.subr.mxu0 0.0
    %2728 = vmatpush2.msra.mxu0 0.0
    %2729 = vmatprep.subr.mxu0 0.0
    %2730 = vmatpush2.msra.mxu0 0.0
    %2731 = vmatprep.subr.mxu0 0.0
    %2732 = vmatpush2.msra.mxu0 0.0
    %2733 = vmatprep.subr.mxu0 0.0
    %2734 = vmatpush2.msra.mxu0 0.0
    %2735 = vmatprep.subr.mxu0 0.0
    %2736 = vmatpush2.msra.mxu0 0.0
    %2737 = vmatprep.subr.mxu0 0.0
    %2738 = vmatpush2.msra.mxu0 0.0
    %2739 = vmatprep.subr.mxu0 0.0
    %2740 = vmatpush2.msra.mxu0 0.0
    %2741 = vmatprep.subr.mxu0 0.0
    %2742 = vmatpush2.msra.mxu0 0.0
    %2743 = vmatprep.subr.mxu0 0.0
    %2744 = vmatpush2.msra.mxu0 0.0
    %2745 = vmatprep.subr.mxu0 0.0
    %2746 = vmatpush2.msra.mxu0 0.0
    %2747 = vmatprep.subr.mxu0 0.0
    %2748 = vmatpush2.msra.mxu0 0.0
    %2749 = vmatprep.subr.mxu0 0.0
    %2750 = vmatpush2.msra.mxu0 0.0
    %2751 = vmatprep.subr.mxu0 0.0
    %2752 = vmatpush2.msra.mxu0 0.0
    %2753 = vmatprep.subr.mxu0 0.0
    %2754 = vmatpush2.msra.mxu0 0.0
    %2755 = vmatprep.subr.mxu0 0.0
    %2756 = vmatpush2.msra.mxu0 0.0
    %2757 = vmatprep.subr.mxu0 0.0
    %2758 = vmatpush2.msra.mxu0 0.0
    %2759 = vmatprep.mubr.f32.mxu0 0.0
    %2760 = vmatmul.mubr.f32.gmra.mxu0 %v2693
    %v2761 = vpop.f32.mrf.mxu0
    %v2762 = vadd.f32 %v2690, %v2761
    %v2763 = vpop.f32.mrf.mxu0
    %2764 = vdwg.mxu0
    %2765 = vst [vmem:[%s17] sm:$0x3] %v2762
    // Predicated region
    $region94: #{libra_forward.1} parent=1 // pred_check
      _
    $region95: #{libra_forward.1} parent=1 // pred_check_branch
      %2767 = sbr.rel (0) target = $region97
    $region96: #{libra_forward.1} parent=1 // pred_region
      _
    $region97: #{libra_forward.1} parent=1 // pred_fallthru
      _
    // Predicated region
    $region98: #{libra_forward.1} parent=1 // pred_check
      _
    $region99: #{libra_forward.1} parent=1 // pred_check_branch
      %2769 = sbr.rel (0) target = $region101
    $region100: #{libra_forward.1} parent=1 // pred_region
      _
    $region101: #{libra_forward.1} parent=1 // pred_fallthru
      _
    %2770 = vsyncpa [#allocation4], 1
    %2771 = vsyncpa [#allocation6], 1
    %2772 = vsyncpa [#allocation9], 1
    %2773 = vsyncpa [#allocation12], 1

</llo_original>
